<compile_context>
chip_gen: v7x
topology: tpu7x:2x2x1
jax: 0.10.0
libtpu: 0.0.40
codegen_flags: <defaults>
</compile_context>

<pallas_src>
import functools

import jax
import jax.numpy as jnp
from jax.experimental import pallas as pl
from jax.experimental.pallas import tpu as pltpu

_NEG_BIG = -1e30


def _round_up(x, m):
    return ((x + m - 1) // m) * m


def _pick_chunk(total, target):
    c = min(total, target)
    while total % c:
        c -= 1
    return c


# ----------------------------------------------------------------------------
# encoder kernel: BOTH directions of one bidirectional LSTM layer, fused.
# grid = (direction, time-chunk).  direction is "parallel", time "arbitrary".
# ----------------------------------------------------------------------------
def _bilstm_layer_kernel(nhid, t_chunk,
                         x_ref, wih_ref, whh_ref, b_ref,
                         y_ref, hN_ref, cN_ref,
                         gx_sc, h_sc, c_sc):
    d = pl.program_id(0)            # 0 = forward scan, 1 = backward scan
    tc = pl.program_id(1)           # time-chunk index within this direction
    n_slabs, _, bsz, feat = x_ref.shape

    @pl.when(tc == 0)
    def _():
        h_sc[...] = jnp.zeros_like(h_sc)
        c_sc[...] = jnp.zeros_like(c_sc)

    # hoisted input projection for the whole chunk: one big-M matmul per slab
    gx = jnp.dot(x_ref[0].reshape(t_chunk * bsz, feat), wih_ref[0, 0],
                 preferred_element_type=jnp.float32)
    for s in range(1, n_slabs):
        gx = gx + jnp.dot(x_ref[s].reshape(t_chunk * bsz, feat), wih_ref[0, s],
                          preferred_element_type=jnp.float32)
    gx_sc[...] = gx.reshape(t_chunk, bsz, 4 * nhid) + b_ref[0]

    whh = whh_ref[0]

    def step(t_local):
        gates = gx_sc[t_local] + jnp.dot(h_sc[...], whh,
                                         preferred_element_type=jnp.float32)
        i = jax.nn.sigmoid(gates[:, 0 * nhid:1 * nhid])
        f = jax.nn.sigmoid(gates[:, 1 * nhid:2 * nhid])
        g = jnp.tanh(gates[:, 2 * nhid:3 * nhid])
        o = jax.nn.sigmoid(gates[:, 3 * nhid:4 * nhid])
        c_new = f * c_sc[...] + i * g
        h_new = o * jnp.tanh(c_new)
        h_sc[...] = h_new
        c_sc[...] = c_new
        y_ref[0, t_local] = h_new

    @pl.when(d == 0)
    def _():                         # forward: local time 0 .. t_chunk-1
        for j in range(t_chunk):
            step(j)

    @pl.when(d == 1)
    def _():                         # backward: local time reversed
        for j in range(t_chunk - 1, -1, -1):
            step(j)

    @pl.when(tc == pl.num_programs(1) - 1)
    def _():                         # final hidden/cell state, written once
        hN_ref[0] = h_sc[...]
        cN_ref[0] = c_sc[...]


def bilstm_layer(x_slabs, wih_s, whh_s, b_s, nhid, *, t_chunk=8):
    """x_slabs: (n_slabs, T, B, feat).
    Returns y (2, T, B, nhid) [fwd, bwd], hN (2, B, nhid), cN (2, B, nhid)."""
    n_slabs, T, B, feat = x_slabs.shape
    tc = _pick_chunk(T, t_chunk)
    nT = T // tc

    def t_idx(d, t):                 # chunk-level time reversal for bwd scan
        return t + d * (nT - 1 - 2 * t)

    kernel = functools.partial(_bilstm_layer_kernel, nhid, tc)
    return pl.pallas_call(
        kernel,
        out_shape=(jax.ShapeDtypeStruct((2, T, B, nhid), jnp.float32),
                   jax.ShapeDtypeStruct((2, B, nhid), jnp.float32),
                   jax.ShapeDtypeStruct((2, B, nhid), jnp.float32)),
        grid_spec=pltpu.PrefetchScalarGridSpec(
            num_scalar_prefetch=0,
            grid=(2, nT),
            in_specs=[
                pl.BlockSpec((n_slabs, tc, B, feat),
                             lambda d, t: (0, t_idx(d, t), 0, 0)),
                pl.BlockSpec((1, n_slabs, feat, 4 * nhid),
                             lambda d, t: (d, 0, 0, 0)),
                pl.BlockSpec((1, nhid, 4 * nhid), lambda d, t: (d, 0, 0)),
                pl.BlockSpec((1, 1, 4 * nhid), lambda d, t: (d, 0, 0)),
            ],
            out_specs=[
                pl.BlockSpec((1, tc, B, nhid),
                             lambda d, t: (d, t_idx(d, t), 0, 0)),
                pl.BlockSpec((1, B, nhid), lambda d, t: (d, 0, 0)),
                pl.BlockSpec((1, B, nhid), lambda d, t: (d, 0, 0)),
            ],
            scratch_shapes=[pltpu.VMEM((tc, B, 4 * nhid), jnp.float32),
                            pltpu.VMEM((B, nhid), jnp.float32),
                            pltpu.VMEM((B, nhid), jnp.float32)]),
        compiler_params=pltpu.CompilerParams(
            dimension_semantics=("parallel", "arbitrary")),
    )(x_slabs, wih_s, whh_s, b_s)


# ----------------------------------------------------------------------------
# decoder kernel: greedy decode, chunked over output timesteps
# ----------------------------------------------------------------------------
def _decoder_kernel(nlayers, nhid, ntoken_p, stoken, d_chunk, *refs):
    emb_ref = refs[0]
    layer_refs = [(refs[1 + 3 * l], refs[2 + 3 * l], refs[3 + 3 * l])
                  for l in range(nlayers)]
    idx = 1 + 3 * nlayers
    wout_ref, bout_ref, h0_ref, c0_ref = refs[idx:idx + 4]
    out_ref = refs[idx + 4]
    h_sc, c_sc, tok_sc = refs[idx + 5:idx + 8]

    bsz = h_sc.shape[1]

    @pl.when(pl.program_id(0) == 0)
    def _():
        h_sc[...] = h0_ref[...]
        c_sc[...] = c0_ref[...]
        tok_sc[...] = jnp.full(tok_sc.shape, stoken, tok_sc.dtype)

    emb = emb_ref[...]
    wout = wout_ref[...]
    bout = bout_ref[...]
    ids = jax.lax.broadcasted_iota(jnp.int32, (bsz, ntoken_p), 1)  # hoisted

    for j in range(d_chunk):
        # embedding lookup of the fed-back token via a one-hot matmul.
        # TODO(synk): for realistic vocab sizes replace with an HBM DMA row
        #             gather keyed off an SMEM-resident token vector.
        onehot = (ids == tok_sc[...]).astype(jnp.float32)
        x = jnp.dot(onehot, emb, preferred_element_type=jnp.float32)

        # stacked decoder LSTM layers (state carried in VMEM scratch)
        for l, (wih_ref, whh_ref, b_ref) in enumerate(layer_refs):
            gates = (jnp.dot(x, wih_ref[...], preferred_element_type=jnp.float32)
                     + jnp.dot(h_sc[l], whh_ref[...],
                               preferred_element_type=jnp.float32)
                     + b_ref[...])
            i = jax.nn.sigmoid(gates[:, 0 * nhid:1 * nhid])
            f = jax.nn.sigmoid(gates[:, 1 * nhid:2 * nhid])
            g = jnp.tanh(gates[:, 2 * nhid:3 * nhid])
            o = jax.nn.sigmoid(gates[:, 3 * nhid:4 * nhid])
            c_new = f * c_sc[l] + i * g
            h_new = o * jnp.tanh(c_new)
            h_sc[l] = h_new
            c_sc[l] = c_new
            x = h_new

        # decoderOut linear -> log-softmax computed directly (== log(softmax))
        logits = jnp.dot(x, wout, preferred_element_type=jnp.float32) + bout
        m = jnp.max(logits, axis=1, keepdims=True)
        logp = (logits - m) - jnp.log(
            jnp.sum(jnp.exp(logits - m), axis=1, keepdims=True))
        out_ref[j] = logp

        # greedy_select: first maximal index, computed on the logits
        cand = jnp.where(logits == m, ids, ntoken_p)
        tok_sc[...] = jnp.min(cand, axis=1, keepdims=True).astype(jnp.int32)


def decode_greedy(emb_p, dec_layers, wout_p, bout_p, h0, c0,
                  *, outwlen, stoken, d_chunk=8):
    nlayers, bsz, nhid = h0.shape
    ntoken_p = emb_p.shape[0]
    dc = _pick_chunk(outwlen, d_chunk)
    n_chunks = outwlen // dc

    in_specs = [pl.BlockSpec(emb_p.shape, lambda t: (0, 0))]
    inputs = [emb_p]
    for (wih, whh, b) in dec_layers:
        in_specs += [pl.BlockSpec(wih.shape, lambda t: (0, 0)),
                     pl.BlockSpec(whh.shape, lambda t: (0, 0)),
                     pl.BlockSpec(b.shape, lambda t: (0, 0))]
        inputs += [wih, whh, b]
    in_specs += [pl.BlockSpec(wout_p.shape, lambda t: (0, 0)),
                 pl.BlockSpec(bout_p.shape, lambda t: (0, 0)),
                 pl.BlockSpec(h0.shape, lambda t: (0, 0, 0)),
                 pl.BlockSpec(c0.shape, lambda t: (0, 0, 0))]
    inputs += [wout_p, bout_p, h0, c0]

    kernel = functools.partial(_decoder_kernel, nlayers, nhid, ntoken_p,
                               stoken, dc)
    return pl.pallas_call(
        kernel,
        out_shape=jax.ShapeDtypeStruct((outwlen, bsz, ntoken_p), jnp.float32),
        grid_spec=pltpu.PrefetchScalarGridSpec(
            num_scalar_prefetch=0,
            grid=(n_chunks,),
            in_specs=in_specs,
            out_specs=pl.BlockSpec((dc, bsz, ntoken_p), lambda t: (t, 0, 0)),
            scratch_shapes=[pltpu.VMEM((nlayers, bsz, nhid), jnp.float32),
                            pltpu.VMEM((nlayers, bsz, nhid), jnp.float32),
                            pltpu.VMEM((bsz, 1), jnp.int32)]),
        compiler_params=pltpu.CompilerParams(
            dimension_semantics=("arbitrary",)),
    )(*inputs)


# ----------------------------------------------------------------------------
# full BotRNN forward (train mode: fixed outwlen decode steps)
# ----------------------------------------------------------------------------
def bot_rnn_forward(params, inp, linp, *, nhid, nlayers, outwlen, stoken,
                    t_chunk=8):
    nwords, bsz = inp.shape
    assert all(int(l) == nwords for l in linp), "all lengths assumed == nwords"

    ntoken, ninp = params["embed"].shape
    ntoken_p = _round_up(ntoken, 128)         # lane-dense decoder output
    B = _round_up(max(bsz, 8), 8)             # sublane-aligned batch

    inp_p = jnp.pad(inp, ((0, 0), (0, B - bsz)))          # pad batch (token 0)
    emb_enc = jnp.take(params["embed"], inp_p, axis=0)    # (T, B, ninp)

    # bidirectional multi-layer encoder: one fused pallas_call per layer
    x = emb_enc[None]                                     # (1, T, B, ninp)
    finals_h, finals_c = [], []
    for l in range(nlayers):
        wih_f, whh_f, b_f = params["enc"][l]["fwd"]
        wih_b, whh_b, b_b = params["enc"][l]["bwd"]
        n_slabs, slab_feat = x.shape[0], x.shape[-1]
        wih_s = jnp.stack([wih_f.reshape(n_slabs, slab_feat, 4 * nhid),
                           wih_b.reshape(n_slabs, slab_feat, 4 * nhid)])
        whh_s = jnp.stack([whh_f, whh_b])
        b_s = jnp.stack([b_f, b_b])
        y, hN, cN = bilstm_layer(x, wih_s, whh_s, b_s, nhid, t_chunk=t_chunk)
        finals_h += [hN[0], hN[1]]            # (fwd, bwd) order == PyTorch h_n
        finals_c += [cN[0], cN[1]]
        x = y                                 # (2, T, B, nhid) -> next layer

    eh = jnp.stack(finals_h, axis=0)          # (2*nlayers, B, nhid)
    ec = jnp.stack(finals_c, axis=0)
    dhid_h = eh[:nlayers] + eh[nlayers:]      # as in the PyTorch code
    dhid_c = ec[:nlayers] + ec[nlayers:]

    # pad vocab to a 128-lane multiple; padded logits get a huge negative bias
    pad_v = ntoken_p - ntoken
    emb_p = jnp.pad(params["embed"], ((0, pad_v), (0, 0)))
    wout_p = jnp.pad(params["wout"], ((0, 0), (0, pad_v)))
    bout_p = jnp.pad(params["bout"], ((0, 0), (0, pad_v)),
                     constant_values=_NEG_BIG)

    out_p = decode_greedy(emb_p, params["dec"], wout_p, bout_p,
                          dhid_h, dhid_c, outwlen=outwlen, stoken=stoken)
    return out_p[:, :bsz, :ntoken]            # (outwlen, bsz, ntoken) log-probs


# ----------------------------------------------------------------------------
# deterministic parameter construction
# ----------------------------------------------------------------------------
def make_params(key, *, ntoken, ninp, nhid, nlayers):
    def u(k, shape):
        return jax.random.uniform(k, shape, jnp.float32, -0.1, 0.1)

    keys = iter(jax.random.split(key, 256))
    params = {"embed": u(next(keys), (ntoken, ninp))}

    enc = []
    for l in range(nlayers):
        insize = ninp if l == 0 else 2 * nhid
        layer = {}
        for d in ("fwd", "bwd"):
            layer[d] = (u(next(keys), (insize, 4 * nhid)),
                        u(next(keys), (nhid, 4 * nhid)),
                        u(next(keys), (1, 4 * nhid)))
        enc.append(layer)
    params["enc"] = enc

    dec = []
    for l in range(nlayers):
        insize = ninp if l == 0 else nhid
        dec.append((u(next(keys), (insize, 4 * nhid)),
                    u(next(keys), (nhid, 4 * nhid)),
                    u(next(keys), (1, 4 * nhid))))
    params["dec"] = dec

    params["wout"] = u(next(keys), (nhid, ntoken))
    params["bout"] = u(next(keys), (1, ntoken))
    return params


if __name__ == "__main__":
    ntoken, ninp, nhid, nlayers = 50, 16, 32, 2
    nwords, bsz = 8, 2
    outwlen, stoken, etoken = 5, 1, 2

    key = jax.random.PRNGKey(0)
    kp, ki = jax.random.split(key)
    params = make_params(kp, ntoken=ntoken, ninp=ninp, nhid=nhid,
                         nlayers=nlayers)

    inp = jax.random.randint(ki, (nwords, bsz), 0, ntoken, dtype=jnp.int32)
    linp = [nwords] * bsz

    out = bot_rnn_forward(params, inp, linp, nhid=nhid, nlayers=nlayers,
                          outwlen=outwlen, stoken=stoken)
    out = jax.block_until_ready(out)

    assert out.shape == (outwlen, bsz, ntoken)
    assert bool(jnp.all(jnp.isfinite(out)))
    # each row is a log-softmax: exp() sums to 1
    assert bool(jnp.allclose(jnp.exp(out).sum(-1), 1.0, atol=1e-4))
    print("KERNEL_OK")
</pallas_src>

<mosaic_0001>
module attributes {stable_mosaic.version = 11 : i64} {
  func.func @_bilstm_layer_kernel(%arg0: i32, %arg1: i32, %arg2: memref<1x8x8x16xf32, #tpu.memory_space<vmem>>, %arg3: memref<1x1x16x128xf32, #tpu.memory_space<vmem>>, %arg4: memref<1x32x128xf32, #tpu.memory_space<vmem>>, %arg5: memref<1x1x128xf32, #tpu.memory_space<vmem>>, %arg6: memref<1x8x8x32xf32, #tpu.memory_space<vmem>>, %arg7: memref<1x8x32xf32, #tpu.memory_space<vmem>>, %arg8: memref<1x8x32xf32, #tpu.memory_space<vmem>>, %arg9: memref<8x8x128xf32, #tpu.memory_space<vmem>>, %arg10: memref<8x32xf32, #tpu.memory_space<vmem>>, %arg11: memref<8x32xf32, #tpu.memory_space<vmem>>) attributes {dimension_semantics = [#tpu.dimension_semantics<parallel>, #tpu.dimension_semantics<arbitrary>], iteration_bounds = array<i64: 2, 1>, scalar_prefetch = 0 : i64, scratch_operands = 3 : i64, tpu.core_type = #tpu.core_type<tc>, window_params = [{transform_indices = @transform_0, window_bounds = array<i64: 1, 8, 8, 16>}, {transform_indices = @transform_1, window_bounds = array<i64: 1, 1, 16, 128>}, {transform_indices = @transform_2, window_bounds = array<i64: 1, 32, 128>}, {transform_indices = @transform_3, window_bounds = array<i64: 1, 1, 128>}, {transform_indices = @transform_4, window_bounds = array<i64: 1, 8, 8, 32>}, {transform_indices = @transform_5, window_bounds = array<i64: 1, 8, 32>}, {transform_indices = @transform_6, window_bounds = array<i64: 1, 8, 32>}]} {
    %c0_i32 = arith.constant 0 : i32
    %0 = arith.cmpi eq, %arg1, %c0_i32 : i32
    %1 = arith.extui %0 : i1 to i32
    %c0_i32_0 = arith.constant 0 : i32
    %2 = arith.cmpi ne, %1, %c0_i32_0 : i32
    scf.if %2 {
      %cst_22 = arith.constant 0.000000e+00 : f32
      %27 = vector.broadcast %cst_22 : f32 to vector<8x32xf32>
      %c0_23 = arith.constant 0 : index
      %c0_24 = arith.constant 0 : index
      %28 = vector.load %arg10[%c0_23, %c0_24] : memref<8x32xf32, #tpu.memory_space<vmem>>, vector<8x32xf32>
      tpu.vector_store %arg10[%c0_23, %c0_24], %27 {strides = array<i32>} : memref<8x32xf32, #tpu.memory_space<vmem>>, vector<8x32xf32>,
      %cst_25 = arith.constant 0.000000e+00 : f32
      %29 = vector.broadcast %cst_25 : f32 to vector<8x32xf32>
      %c0_26 = arith.constant 0 : index
      %c0_27 = arith.constant 0 : index
      %30 = vector.load %arg11[%c0_26, %c0_27] : memref<8x32xf32, #tpu.memory_space<vmem>>, vector<8x32xf32>
      tpu.vector_store %arg11[%c0_26, %c0_27], %29 {strides = array<i32>} : memref<8x32xf32, #tpu.memory_space<vmem>>, vector<8x32xf32>,
    } else {
    }
    %c0 = arith.constant 0 : index
    %c0_1 = arith.constant 0 : index
    %c0_2 = arith.constant 0 : index
    %c0_3 = arith.constant 0 : index
    %3 = vector.load %arg2[%c0, %c0_1, %c0_2, %c0_3] : memref<1x8x8x16xf32, #tpu.memory_space<vmem>>, vector<1x8x8x16xf32>
    %4 = vector.shape_cast %3 : vector<1x8x8x16xf32> to vector<8x8x16xf32>
    %5 = vector.shape_cast %4 : vector<8x8x16xf32> to vector<64x16xf32>
    %c0_4 = arith.constant 0 : index
    %c0_5 = arith.constant 0 : index
    %c0_6 = arith.constant 0 : index
    %c0_7 = arith.constant 0 : index
    %6 = vector.load %arg3[%c0_4, %c0_5, %c0_6, %c0_7] : memref<1x1x16x128xf32, #tpu.memory_space<vmem>>, vector<1x1x16x128xf32>
    %7 = vector.shape_cast %6 : vector<1x1x16x128xf32> to vector<16x128xf32>
    %cst = arith.constant dense<0.000000e+00> : vector<64x128xf32>
    %8 = tpu.matmul %5, %7, %cst {dimension_numbers = #tpu.dot_dimension_numbers<[1], [0], [0], [1], [0, 0, 1, 1], [], []>} : vector<64x16xf32>, vector<16x128xf32>, vector<64x128xf32> -> vector<64x128xf32>
    %9 = vector.shape_cast %8 : vector<64x128xf32> to vector<8x8x128xf32>
    %c0_8 = arith.constant 0 : index
    %c0_9 = arith.constant 0 : index
    %c0_10 = arith.constant 0 : index
    %10 = vector.load %arg5[%c0_8, %c0_9, %c0_10] : memref<1x1x128xf32, #tpu.memory_space<vmem>>, vector<1x1x128xf32>
    %11 = vector.shape_cast %10 : vector<1x1x128xf32> to vector<1x128xf32>
    %12 = vector.shape_cast %11 : vector<1x128xf32> to vector<1x1x128xf32>
    %13 = vector.broadcast %12 : vector<1x1x128xf32> to vector<8x8x128xf32>
    %14 = arith.addf %9, %13 : vector<8x8x128xf32>
    %c0_11 = arith.constant 0 : index
    %c0_12 = arith.constant 0 : index
    %c0_13 = arith.constant 0 : index
    %15 = vector.load %arg9[%c0_11, %c0_12, %c0_13] : memref<8x8x128xf32, #tpu.memory_space<vmem>>, vector<8x8x128xf32>
    tpu.vector_store %arg9[%c0_11, %c0_12, %c0_13], %14 {strides = array<i32>} : memref<8x8x128xf32, #tpu.memory_space<vmem>>, vector<8x8x128xf32>,
    %c0_14 = arith.constant 0 : index
    %c0_15 = arith.constant 0 : index
    %c0_16 = arith.constant 0 : index
    %16 = vector.load %arg4[%c0_14, %c0_15, %c0_16] : memref<1x32x128xf32, #tpu.memory_space<vmem>>, vector<1x32x128xf32>
    %17 = vector.shape_cast %16 : vector<1x32x128xf32> to vector<32x128xf32>
    %c0_i32_17 = arith.constant 0 : i32
    %18 = arith.cmpi eq, %arg0, %c0_i32_17 : i32
    %19 = arith.extui %18 : i1 to i32
    %c0_i32_18 = arith.constant 0 : i32
    %20 = arith.cmpi ne, %19, %c0_i32_18 : i32
    scf.if %20 {
      %c0_22 = arith.constant 0 : index
      %c0_23 = arith.constant 0 : index
      %c0_24 = arith.constant 0 : index
      %27 = vector.load %arg9[%c0_22, %c0_23, %c0_24] : memref<8x8x128xf32, #tpu.memory_space<vmem>>, vector<1x8x128xf32>
      %28 = vector.shape_cast %27 : vector<1x8x128xf32> to vector<8x128xf32>
      %c0_25 = arith.constant 0 : index
      %c0_26 = arith.constant 0 : index
      %29 = vector.load %arg10[%c0_25, %c0_26] : memref<8x32xf32, #tpu.memory_space<vmem>>, vector<8x32xf32>
      %cst_27 = arith.constant dense<0.000000e+00> : vector<8x128xf32>
      %30 = tpu.matmul %29, %17, %cst_27 {dimension_numbers = #tpu.dot_dimension_numbers<[1], [0], [0], [1], [0, 0, 1, 1], [], []>} : vector<8x32xf32>, vector<32x128xf32>, vector<8x128xf32> -> vector<8x128xf32>
      %31 = arith.addf %28, %30 : vector<8x128xf32>
      %32 = vector.extract_strided_slice %31 {offsets = [0, 0], sizes = [8, 32], strides = [1, 1]} : vector<8x128xf32> to vector<8x32xf32>
      %33 = arith.negf %32 : vector<8x32xf32>
      %34 = math.exp %33 : vector<8x32xf32>
      %cst_28 = arith.constant 1.000000e+00 : f32
      %35 = vector.broadcast %cst_28 : f32 to vector<8x32xf32>
      %36 = arith.addf %35, %34 : vector<8x32xf32>
      %37 = arith.divf %35, %36 : vector<8x32xf32>
      %38 = vector.extract_strided_slice %31 {offsets = [0, 32], sizes = [8, 32], strides = [1, 1]} : vector<8x128xf32> to vector<8x32xf32>
      %39 = arith.negf %38 : vector<8x32xf32>
      %40 = math.exp %39 : vector<8x32xf32>
      %cst_29 = arith.constant 1.000000e+00 : f32
      %41 = vector.broadcast %cst_29 : f32 to vector<8x32xf32>
      %42 = arith.addf %41, %40 : vector<8x32xf32>
      %43 = arith.divf %41, %42 : vector<8x32xf32>
      %44 = vector.extract_strided_slice %31 {offsets = [0, 64], sizes = [8, 32], strides = [1, 1]} : vector<8x128xf32> to vector<8x32xf32>
      %45 = math.tanh %44 : vector<8x32xf32>
      %46 = vector.extract_strided_slice %31 {offsets = [0, 96], sizes = [8, 32], strides = [1, 1]} : vector<8x128xf32> to vector<8x32xf32>
      %47 = arith.negf %46 : vector<8x32xf32>
      %48 = math.exp %47 : vector<8x32xf32>
      %cst_30 = arith.constant 1.000000e+00 : f32
      %49 = vector.broadcast %cst_30 : f32 to vector<8x32xf32>
      %50 = arith.addf %49, %48 : vector<8x32xf32>
      %51 = arith.divf %49, %50 : vector<8x32xf32>
      %c0_31 = arith.constant 0 : index
      %c0_32 = arith.constant 0 : index
      %52 = vector.load %arg11[%c0_31, %c0_32] : memref<8x32xf32, #tpu.memory_space<vmem>>, vector<8x32xf32>
      %53 = arith.mulf %43, %52 : vector<8x32xf32>
      %54 = arith.mulf %37, %45 : vector<8x32xf32>
      %55 = arith.addf %53, %54 : vector<8x32xf32>
      %56 = math.tanh %55 : vector<8x32xf32>
      %57 = arith.mulf %51, %56 : vector<8x32xf32>
      %c0_33 = arith.constant 0 : index
      %c0_34 = arith.constant 0 : index
      %58 = vector.load %arg10[%c0_33, %c0_34] : memref<8x32xf32, #tpu.memory_space<vmem>>, vector<8x32xf32>
      tpu.vector_store %arg10[%c0_33, %c0_34], %57 {strides = array<i32>} : memref<8x32xf32, #tpu.memory_space<vmem>>, vector<8x32xf32>,
      %c0_35 = arith.constant 0 : index
      %c0_36 = arith.constant 0 : index
      %59 = vector.load %arg11[%c0_35, %c0_36] : memref<8x32xf32, #tpu.memory_space<vmem>>, vector<8x32xf32>
      tpu.vector_store %arg11[%c0_35, %c0_36], %55 {strides = array<i32>} : memref<8x32xf32, #tpu.memory_space<vmem>>, vector<8x32xf32>,
      %c0_37 = arith.constant 0 : index
      %c0_38 = arith.constant 0 : index
      %c0_39 = arith.constant 0 : index
      %c0_40 = arith.constant 0 : index
      %60 = vector.load %arg6[%c0_37, %c0_38, %c0_39, %c0_40] : memref<1x8x8x32xf32, #tpu.memory_space<vmem>>, vector<1x1x8x32xf32>
      %61 = vector.shape_cast %60 : vector<1x1x8x32xf32> to vector<8x32xf32>
      %62 = vector.shape_cast %57 : vector<8x32xf32> to vector<1x1x8x32xf32>
      tpu.vector_store %arg6[%c0_37, %c0_38, %c0_39, %c0_40], %62 {strides = array<i32>} : memref<1x8x8x32xf32, #tpu.memory_space<vmem>>, vector<1x1x8x32xf32>,
      %c1 = arith.constant 1 : index
      %c0_41 = arith.constant 0 : index
      %c0_42 = arith.constant 0 : index
      %63 = vector.load %arg9[%c1, %c0_41, %c0_42] : memref<8x8x128xf32, #tpu.memory_space<vmem>>, vector<1x8x128xf32>
      %64 = vector.shape_cast %63 : vector<1x8x128xf32> to vector<8x128xf32>
      %c0_43 = arith.constant 0 : index
      %c0_44 = arith.constant 0 : index
      %65 = vector.load %arg10[%c0_43, %c0_44] : memref<8x32xf32, #tpu.memory_space<vmem>>, vector<8x32xf32>
      %cst_45 = arith.constant dense<0.000000e+00> : vector<8x128xf32>
      %66 = tpu.matmul %65, %17, %cst_45 {dimension_numbers = #tpu.dot_dimension_numbers<[1], [0], [0], [1], [0, 0, 1, 1], [], []>} : vector<8x32xf32>, vector<32x128xf32>, vector<8x128xf32> -> vector<8x128xf32>
      %67 = arith.addf %64, %66 : vector<8x128xf32>
      %68 = vector.extract_strided_slice %67 {offsets = [0, 0], sizes = [8, 32], strides = [1, 1]} : vector<8x128xf32> to vector<8x32xf32>
      %69 = arith.negf %68 : vector<8x32xf32>
      %70 = math.exp %69 : vector<8x32xf32>
      %cst_46 = arith.constant 1.000000e+00 : f32
      %71 = vector.broadcast %cst_46 : f32 to vector<8x32xf32>
      %72 = arith.addf %71, %70 : vector<8x32xf32>
      %73 = arith.divf %71, %72 : vector<8x32xf32>
      %74 = vector.extract_strided_slice %67 {offsets = [0, 32], sizes = [8, 32], strides = [1, 1]} : vector<8x128xf32> to vector<8x32xf32>
      %75 = arith.negf %74 : vector<8x32xf32>
      %76 = math.exp %75 : vector<8x32xf32>
      %cst_47 = arith.constant 1.000000e+00 : f32
      %77 = vector.broadcast %cst_47 : f32 to vector<8x32xf32>
      %78 = arith.addf %77, %76 : vector<8x32xf32>
      %79 = arith.divf %77, %78 : vector<8x32xf32>
      %80 = vector.extract_strided_slice %67 {offsets = [0, 64], sizes = [8, 32], strides = [1, 1]} : vector<8x128xf32> to vector<8x32xf32>
      %81 = math.tanh %80 : vector<8x32xf32>
      %82 = vector.extract_strided_slice %67 {offsets = [0, 96], sizes = [8, 32], strides = [1, 1]} : vector<8x128xf32> to vector<8x32xf32>
      %83 = arith.negf %82 : vector<8x32xf32>
      %84 = math.exp %83 : vector<8x32xf32>
      %cst_48 = arith.constant 1.000000e+00 : f32
      %85 = vector.broadcast %cst_48 : f32 to vector<8x32xf32>
      %86 = arith.addf %85, %84 : vector<8x32xf32>
      %87 = arith.divf %85, %86 : vector<8x32xf32>
      %c0_49 = arith.constant 0 : index
      %c0_50 = arith.constant 0 : index
      %88 = vector.load %arg11[%c0_49, %c0_50] : memref<8x32xf32, #tpu.memory_space<vmem>>, vector<8x32xf32>
      %89 = arith.mulf %79, %88 : vector<8x32xf32>
      %90 = arith.mulf %73, %81 : vector<8x32xf32>
      %91 = arith.addf %89, %90 : vector<8x32xf32>
      %92 = math.tanh %91 : vector<8x32xf32>
      %93 = arith.mulf %87, %92 : vector<8x32xf32>
      %c0_51 = arith.constant 0 : index
      %c0_52 = arith.constant 0 : index
      %94 = vector.load %arg10[%c0_51, %c0_52] : memref<8x32xf32, #tpu.memory_space<vmem>>, vector<8x32xf32>
      tpu.vector_store %arg10[%c0_51, %c0_52], %93 {strides = array<i32>} : memref<8x32xf32, #tpu.memory_space<vmem>>, vector<8x32xf32>,
      %c0_53 = arith.constant 0 : index
      %c0_54 = arith.constant 0 : index
      %95 = vector.load %arg11[%c0_53, %c0_54] : memref<8x32xf32, #tpu.memory_space<vmem>>, vector<8x32xf32>
      tpu.vector_store %arg11[%c0_53, %c0_54], %91 {strides = array<i32>} : memref<8x32xf32, #tpu.memory_space<vmem>>, vector<8x32xf32>,
      %c0_55 = arith.constant 0 : index
      %c1_56 = arith.constant 1 : index
      %c0_57 = arith.constant 0 : index
      %c0_58 = arith.constant 0 : index
      %96 = vector.load %arg6[%c0_55, %c1_56, %c0_57, %c0_58] : memref<1x8x8x32xf32, #tpu.memory_space<vmem>>, vector<1x1x8x32xf32>
      %97 = vector.shape_cast %96 : vector<1x1x8x32xf32> to vector<8x32xf32>
      %98 = vector.shape_cast %93 : vector<8x32xf32> to vector<1x1x8x32xf32>
      tpu.vector_store %arg6[%c0_55, %c1_56, %c0_57, %c0_58], %98 {strides = array<i32>} : memref<1x8x8x32xf32, #tpu.memory_space<vmem>>, vector<1x1x8x32xf32>,
      %c2 = arith.constant 2 : index
      %c0_59 = arith.constant 0 : index
      %c0_60 = arith.constant 0 : index
      %99 = vector.load %arg9[%c2, %c0_59, %c0_60] : memref<8x8x128xf32, #tpu.memory_space<vmem>>, vector<1x8x128xf32>
      %100 = vector.shape_cast %99 : vector<1x8x128xf32> to vector<8x128xf32>
      %c0_61 = arith.constant 0 : index
      %c0_62 = arith.constant 0 : index
      %101 = vector.load %arg10[%c0_61, %c0_62] : memref<8x32xf32, #tpu.memory_space<vmem>>, vector<8x32xf32>
      %cst_63 = arith.constant dense<0.000000e+00> : vector<8x128xf32>
      %102 = tpu.matmul %101, %17, %cst_63 {dimension_numbers = #tpu.dot_dimension_numbers<[1], [0], [0], [1], [0, 0, 1, 1], [], []>} : vector<8x32xf32>, vector<32x128xf32>, vector<8x128xf32> -> vector<8x128xf32>
      %103 = arith.addf %100, %102 : vector<8x128xf32>
      %104 = vector.extract_strided_slice %103 {offsets = [0, 0], sizes = [8, 32], strides = [1, 1]} : vector<8x128xf32> to vector<8x32xf32>
      %105 = arith.negf %104 : vector<8x32xf32>
      %106 = math.exp %105 : vector<8x32xf32>
      %cst_64 = arith.constant 1.000000e+00 : f32
      %107 = vector.broadcast %cst_64 : f32 to vector<8x32xf32>
      %108 = arith.addf %107, %106 : vector<8x32xf32>
      %109 = arith.divf %107, %108 : vector<8x32xf32>
      %110 = vector.extract_strided_slice %103 {offsets = [0, 32], sizes = [8, 32], strides = [1, 1]} : vector<8x128xf32> to vector<8x32xf32>
      %111 = arith.negf %110 : vector<8x32xf32>
      %112 = math.exp %111 : vector<8x32xf32>
      %cst_65 = arith.constant 1.000000e+00 : f32
      %113 = vector.broadcast %cst_65 : f32 to vector<8x32xf32>
      %114 = arith.addf %113, %112 : vector<8x32xf32>
      %115 = arith.divf %113, %114 : vector<8x32xf32>
      %116 = vector.extract_strided_slice %103 {offsets = [0, 64], sizes = [8, 32], strides = [1, 1]} : vector<8x128xf32> to vector<8x32xf32>
      %117 = math.tanh %116 : vector<8x32xf32>
      %118 = vector.extract_strided_slice %103 {offsets = [0, 96], sizes = [8, 32], strides = [1, 1]} : vector<8x128xf32> to vector<8x32xf32>
      %119 = arith.negf %118 : vector<8x32xf32>
      %120 = math.exp %119 : vector<8x32xf32>
      %cst_66 = arith.constant 1.000000e+00 : f32
      %121 = vector.broadcast %cst_66 : f32 to vector<8x32xf32>
      %122 = arith.addf %121, %120 : vector<8x32xf32>
      %123 = arith.divf %121, %122 : vector<8x32xf32>
      %c0_67 = arith.constant 0 : index
      %c0_68 = arith.constant 0 : index
      %124 = vector.load %arg11[%c0_67, %c0_68] : memref<8x32xf32, #tpu.memory_space<vmem>>, vector<8x32xf32>
      %125 = arith.mulf %115, %124 : vector<8x32xf32>
      %126 = arith.mulf %109, %117 : vector<8x32xf32>
      %127 = arith.addf %125, %126 : vector<8x32xf32>
      %128 = math.tanh %127 : vector<8x32xf32>
      %129 = arith.mulf %123, %128 : vector<8x32xf32>
      %c0_69 = arith.constant 0 : index
      %c0_70 = arith.constant 0 : index
      %130 = vector.load %arg10[%c0_69, %c0_70] : memref<8x32xf32, #tpu.memory_space<vmem>>, vector<8x32xf32>
      tpu.vector_store %arg10[%c0_69, %c0_70], %129 {strides = array<i32>} : memref<8x32xf32, #tpu.memory_space<vmem>>, vector<8x32xf32>,
      %c0_71 = arith.constant 0 : index
      %c0_72 = arith.constant 0 : index
      %131 = vector.load %arg11[%c0_71, %c0_72] : memref<8x32xf32, #tpu.memory_space<vmem>>, vector<8x32xf32>
      tpu.vector_store %arg11[%c0_71, %c0_72], %127 {strides = array<i32>} : memref<8x32xf32, #tpu.memory_space<vmem>>, vector<8x32xf32>,
      %c0_73 = arith.constant 0 : index
      %c2_74 = arith.constant 2 : index
      %c0_75 = arith.constant 0 : index
      %c0_76 = arith.constant 0 : index
      %132 = vector.load %arg6[%c0_73, %c2_74, %c0_75, %c0_76] : memref<1x8x8x32xf32, #tpu.memory_space<vmem>>, vector<1x1x8x32xf32>
      %133 = vector.shape_cast %132 : vector<1x1x8x32xf32> to vector<8x32xf32>
      %134 = vector.shape_cast %129 : vector<8x32xf32> to vector<1x1x8x32xf32>
      tpu.vector_store %arg6[%c0_73, %c2_74, %c0_75, %c0_76], %134 {strides = array<i32>} : memref<1x8x8x32xf32, #tpu.memory_space<vmem>>, vector<1x1x8x32xf32>,
      %c3 = arith.constant 3 : index
      %c0_77 = arith.constant 0 : index
      %c0_78 = arith.constant 0 : index
      %135 = vector.load %arg9[%c3, %c0_77, %c0_78] : memref<8x8x128xf32, #tpu.memory_space<vmem>>, vector<1x8x128xf32>
      %136 = vector.shape_cast %135 : vector<1x8x128xf32> to vector<8x128xf32>
      %c0_79 = arith.constant 0 : index
      %c0_80 = arith.constant 0 : index
      %137 = vector.load %arg10[%c0_79, %c0_80] : memref<8x32xf32, #tpu.memory_space<vmem>>, vector<8x32xf32>
      %cst_81 = arith.constant dense<0.000000e+00> : vector<8x128xf32>
      %138 = tpu.matmul %137, %17, %cst_81 {dimension_numbers = #tpu.dot_dimension_numbers<[1], [0], [0], [1], [0, 0, 1, 1], [], []>} : vector<8x32xf32>, vector<32x128xf32>, vector<8x128xf32> -> vector<8x128xf32>
      %139 = arith.addf %136, %138 : vector<8x128xf32>
      %140 = vector.extract_strided_slice %139 {offsets = [0, 0], sizes = [8, 32], strides = [1, 1]} : vector<8x128xf32> to vector<8x32xf32>
      %141 = arith.negf %140 : vector<8x32xf32>
      %142 = math.exp %141 : vector<8x32xf32>
      %cst_82 = arith.constant 1.000000e+00 : f32
      %143 = vector.broadcast %cst_82 : f32 to vector<8x32xf32>
      %144 = arith.addf %143, %142 : vector<8x32xf32>
      %145 = arith.divf %143, %144 : vector<8x32xf32>
      %146 = vector.extract_strided_slice %139 {offsets = [0, 32], sizes = [8, 32], strides = [1, 1]} : vector<8x128xf32> to vector<8x32xf32>
      %147 = arith.negf %146 : vector<8x32xf32>
      %148 = math.exp %147 : vector<8x32xf32>
      %cst_83 = arith.constant 1.000000e+00 : f32
      %149 = vector.broadcast %cst_83 : f32 to vector<8x32xf32>
      %150 = arith.addf %149, %148 : vector<8x32xf32>
      %151 = arith.divf %149, %150 : vector<8x32xf32>
      %152 = vector.extract_strided_slice %139 {offsets = [0, 64], sizes = [8, 32], strides = [1, 1]} : vector<8x128xf32> to vector<8x32xf32>
      %153 = math.tanh %152 : vector<8x32xf32>
      %154 = vector.extract_strided_slice %139 {offsets = [0, 96], sizes = [8, 32], strides = [1, 1]} : vector<8x128xf32> to vector<8x32xf32>
      %155 = arith.negf %154 : vector<8x32xf32>
      %156 = math.exp %155 : vector<8x32xf32>
      %cst_84 = arith.constant 1.000000e+00 : f32
      %157 = vector.broadcast %cst_84 : f32 to vector<8x32xf32>
      %158 = arith.addf %157, %156 : vector<8x32xf32>
      %159 = arith.divf %157, %158 : vector<8x32xf32>
      %c0_85 = arith.constant 0 : index
      %c0_86 = arith.constant 0 : index
      %160 = vector.load %arg11[%c0_85, %c0_86] : memref<8x32xf32, #tpu.memory_space<vmem>>, vector<8x32xf32>
      %161 = arith.mulf %151, %160 : vector<8x32xf32>
      %162 = arith.mulf %145, %153 : vector<8x32xf32>
      %163 = arith.addf %161, %162 : vector<8x32xf32>
      %164 = math.tanh %163 : vector<8x32xf32>
      %165 = arith.mulf %159, %164 : vector<8x32xf32>
      %c0_87 = arith.constant 0 : index
      %c0_88 = arith.constant 0 : index
      %166 = vector.load %arg10[%c0_87, %c0_88] : memref<8x32xf32, #tpu.memory_space<vmem>>, vector<8x32xf32>
      tpu.vector_store %arg10[%c0_87, %c0_88], %165 {strides = array<i32>} : memref<8x32xf32, #tpu.memory_space<vmem>>, vector<8x32xf32>,
      %c0_89 = arith.constant 0 : index
      %c0_90 = arith.constant 0 : index
      %167 = vector.load %arg11[%c0_89, %c0_90] : memref<8x32xf32, #tpu.memory_space<vmem>>, vector<8x32xf32>
      tpu.vector_store %arg11[%c0_89, %c0_90], %163 {strides = array<i32>} : memref<8x32xf32, #tpu.memory_space<vmem>>, vector<8x32xf32>,
      %c0_91 = arith.constant 0 : index
      %c3_92 = arith.constant 3 : index
      %c0_93 = arith.constant 0 : index
      %c0_94 = arith.constant 0 : index
      %168 = vector.load %arg6[%c0_91, %c3_92, %c0_93, %c0_94] : memref<1x8x8x32xf32, #tpu.memory_space<vmem>>, vector<1x1x8x32xf32>
      %169 = vector.shape_cast %168 : vector<1x1x8x32xf32> to vector<8x32xf32>
      %170 = vector.shape_cast %165 : vector<8x32xf32> to vector<1x1x8x32xf32>
      tpu.vector_store %arg6[%c0_91, %c3_92, %c0_93, %c0_94], %170 {strides = array<i32>} : memref<1x8x8x32xf32, #tpu.memory_space<vmem>>, vector<1x1x8x32xf32>,
      %c4 = arith.constant 4 : index
      %c0_95 = arith.constant 0 : index
      %c0_96 = arith.constant 0 : index
      %171 = vector.load %arg9[%c4, %c0_95, %c0_96] : memref<8x8x128xf32, #tpu.memory_space<vmem>>, vector<1x8x128xf32>
      %172 = vector.shape_cast %171 : vector<1x8x128xf32> to vector<8x128xf32>
      %c0_97 = arith.constant 0 : index
      %c0_98 = arith.constant 0 : index
      %173 = vector.load %arg10[%c0_97, %c0_98] : memref<8x32xf32, #tpu.memory_space<vmem>>, vector<8x32xf32>
      %cst_99 = arith.constant dense<0.000000e+00> : vector<8x128xf32>
      %174 = tpu.matmul %173, %17, %cst_99 {dimension_numbers = #tpu.dot_dimension_numbers<[1], [0], [0], [1], [0, 0, 1, 1], [], []>} : vector<8x32xf32>, vector<32x128xf32>, vector<8x128xf32> -> vector<8x128xf32>
      %175 = arith.addf %172, %174 : vector<8x128xf32>
      %176 = vector.extract_strided_slice %175 {offsets = [0, 0], sizes = [8, 32], strides = [1, 1]} : vector<8x128xf32> to vector<8x32xf32>
      %177 = arith.negf %176 : vector<8x32xf32>
      %178 = math.exp %177 : vector<8x32xf32>
      %cst_100 = arith.constant 1.000000e+00 : f32
      %179 = vector.broadcast %cst_100 : f32 to vector<8x32xf32>
      %180 = arith.addf %179, %178 : vector<8x32xf32>
      %181 = arith.divf %179, %180 : vector<8x32xf32>
      %182 = vector.extract_strided_slice %175 {offsets = [0, 32], sizes = [8, 32], strides = [1, 1]} : vector<8x128xf32> to vector<8x32xf32>
      %183 = arith.negf %182 : vector<8x32xf32>
      %184 = math.exp %183 : vector<8x32xf32>
      %cst_101 = arith.constant 1.000000e+00 : f32
      %185 = vector.broadcast %cst_101 : f32 to vector<8x32xf32>
      %186 = arith.addf %185, %184 : vector<8x32xf32>
      %187 = arith.divf %185, %186 : vector<8x32xf32>
      %188 = vector.extract_strided_slice %175 {offsets = [0, 64], sizes = [8, 32], strides = [1, 1]} : vector<8x128xf32> to vector<8x32xf32>
      %189 = math.tanh %188 : vector<8x32xf32>
      %190 = vector.extract_strided_slice %175 {offsets = [0, 96], sizes = [8, 32], strides = [1, 1]} : vector<8x128xf32> to vector<8x32xf32>
      %191 = arith.negf %190 : vector<8x32xf32>
      %192 = math.exp %191 : vector<8x32xf32>
      %cst_102 = arith.constant 1.000000e+00 : f32
      %193 = vector.broadcast %cst_102 : f32 to vector<8x32xf32>
      %194 = arith.addf %193, %192 : vector<8x32xf32>
      %195 = arith.divf %193, %194 : vector<8x32xf32>
      %c0_103 = arith.constant 0 : index
      %c0_104 = arith.constant 0 : index
      %196 = vector.load %arg11[%c0_103, %c0_104] : memref<8x32xf32, #tpu.memory_space<vmem>>, vector<8x32xf32>
      %197 = arith.mulf %187, %196 : vector<8x32xf32>
      %198 = arith.mulf %181, %189 : vector<8x32xf32>
      %199 = arith.addf %197, %198 : vector<8x32xf32>
      %200 = math.tanh %199 : vector<8x32xf32>
      %201 = arith.mulf %195, %200 : vector<8x32xf32>
      %c0_105 = arith.constant 0 : index
      %c0_106 = arith.constant 0 : index
      %202 = vector.load %arg10[%c0_105, %c0_106] : memref<8x32xf32, #tpu.memory_space<vmem>>, vector<8x32xf32>
      tpu.vector_store %arg10[%c0_105, %c0_106], %201 {strides = array<i32>} : memref<8x32xf32, #tpu.memory_space<vmem>>, vector<8x32xf32>,
      %c0_107 = arith.constant 0 : index
      %c0_108 = arith.constant 0 : index
      %203 = vector.load %arg11[%c0_107, %c0_108] : memref<8x32xf32, #tpu.memory_space<vmem>>, vector<8x32xf32>
      tpu.vector_store %arg11[%c0_107, %c0_108], %199 {strides = array<i32>} : memref<8x32xf32, #tpu.memory_space<vmem>>, vector<8x32xf32>,
      %c0_109 = arith.constant 0 : index
      %c4_110 = arith.constant 4 : index
      %c0_111 = arith.constant 0 : index
      %c0_112 = arith.constant 0 : index
      %204 = vector.load %arg6[%c0_109, %c4_110, %c0_111, %c0_112] : memref<1x8x8x32xf32, #tpu.memory_space<vmem>>, vector<1x1x8x32xf32>
      %205 = vector.shape_cast %204 : vector<1x1x8x32xf32> to vector<8x32xf32>
      %206 = vector.shape_cast %201 : vector<8x32xf32> to vector<1x1x8x32xf32>
      tpu.vector_store %arg6[%c0_109, %c4_110, %c0_111, %c0_112], %206 {strides = array<i32>} : memref<1x8x8x32xf32, #tpu.memory_space<vmem>>, vector<1x1x8x32xf32>,
      %c5 = arith.constant 5 : index
      %c0_113 = arith.constant 0 : index
      %c0_114 = arith.constant 0 : index
      %207 = vector.load %arg9[%c5, %c0_113, %c0_114] : memref<8x8x128xf32, #tpu.memory_space<vmem>>, vector<1x8x128xf32>
      %208 = vector.shape_cast %207 : vector<1x8x128xf32> to vector<8x128xf32>
      %c0_115 = arith.constant 0 : index
      %c0_116 = arith.constant 0 : index
      %209 = vector.load %arg10[%c0_115, %c0_116] : memref<8x32xf32, #tpu.memory_space<vmem>>, vector<8x32xf32>
      %cst_117 = arith.constant dense<0.000000e+00> : vector<8x128xf32>
      %210 = tpu.matmul %209, %17, %cst_117 {dimension_numbers = #tpu.dot_dimension_numbers<[1], [0], [0], [1], [0, 0, 1, 1], [], []>} : vector<8x32xf32>, vector<32x128xf32>, vector<8x128xf32> -> vector<8x128xf32>
      %211 = arith.addf %208, %210 : vector<8x128xf32>
      %212 = vector.extract_strided_slice %211 {offsets = [0, 0], sizes = [8, 32], strides = [1, 1]} : vector<8x128xf32> to vector<8x32xf32>
      %213 = arith.negf %212 : vector<8x32xf32>
      %214 = math.exp %213 : vector<8x32xf32>
      %cst_118 = arith.constant 1.000000e+00 : f32
      %215 = vector.broadcast %cst_118 : f32 to vector<8x32xf32>
      %216 = arith.addf %215, %214 : vector<8x32xf32>
      %217 = arith.divf %215, %216 : vector<8x32xf32>
      %218 = vector.extract_strided_slice %211 {offsets = [0, 32], sizes = [8, 32], strides = [1, 1]} : vector<8x128xf32> to vector<8x32xf32>
      %219 = arith.negf %218 : vector<8x32xf32>
      %220 = math.exp %219 : vector<8x32xf32>
      %cst_119 = arith.constant 1.000000e+00 : f32
      %221 = vector.broadcast %cst_119 : f32 to vector<8x32xf32>
      %222 = arith.addf %221, %220 : vector<8x32xf32>
      %223 = arith.divf %221, %222 : vector<8x32xf32>
      %224 = vector.extract_strided_slice %211 {offsets = [0, 64], sizes = [8, 32], strides = [1, 1]} : vector<8x128xf32> to vector<8x32xf32>
      %225 = math.tanh %224 : vector<8x32xf32>
      %226 = vector.extract_strided_slice %211 {offsets = [0, 96], sizes = [8, 32], strides = [1, 1]} : vector<8x128xf32> to vector<8x32xf32>
      %227 = arith.negf %226 : vector<8x32xf32>
      %228 = math.exp %227 : vector<8x32xf32>
      %cst_120 = arith.constant 1.000000e+00 : f32
      %229 = vector.broadcast %cst_120 : f32 to vector<8x32xf32>
      %230 = arith.addf %229, %228 : vector<8x32xf32>
      %231 = arith.divf %229, %230 : vector<8x32xf32>
      %c0_121 = arith.constant 0 : index
      %c0_122 = arith.constant 0 : index
      %232 = vector.load %arg11[%c0_121, %c0_122] : memref<8x32xf32, #tpu.memory_space<vmem>>, vector<8x32xf32>
      %233 = arith.mulf %223, %232 : vector<8x32xf32>
      %234 = arith.mulf %217, %225 : vector<8x32xf32>
      %235 = arith.addf %233, %234 : vector<8x32xf32>
      %236 = math.tanh %235 : vector<8x32xf32>
      %237 = arith.mulf %231, %236 : vector<8x32xf32>
      %c0_123 = arith.constant 0 : index
      %c0_124 = arith.constant 0 : index
      %238 = vector.load %arg10[%c0_123, %c0_124] : memref<8x32xf32, #tpu.memory_space<vmem>>, vector<8x32xf32>
      tpu.vector_store %arg10[%c0_123, %c0_124], %237 {strides = array<i32>} : memref<8x32xf32, #tpu.memory_space<vmem>>, vector<8x32xf32>,
      %c0_125 = arith.constant 0 : index
      %c0_126 = arith.constant 0 : index
      %239 = vector.load %arg11[%c0_125, %c0_126] : memref<8x32xf32, #tpu.memory_space<vmem>>, vector<8x32xf32>
      tpu.vector_store %arg11[%c0_125, %c0_126], %235 {strides = array<i32>} : memref<8x32xf32, #tpu.memory_space<vmem>>, vector<8x32xf32>,
      %c0_127 = arith.constant 0 : index
      %c5_128 = arith.constant 5 : index
      %c0_129 = arith.constant 0 : index
      %c0_130 = arith.constant 0 : index
      %240 = vector.load %arg6[%c0_127, %c5_128, %c0_129, %c0_130] : memref<1x8x8x32xf32, #tpu.memory_space<vmem>>, vector<1x1x8x32xf32>
      %241 = vector.shape_cast %240 : vector<1x1x8x32xf32> to vector<8x32xf32>
      %242 = vector.shape_cast %237 : vector<8x32xf32> to vector<1x1x8x32xf32>
      tpu.vector_store %arg6[%c0_127, %c5_128, %c0_129, %c0_130], %242 {strides = array<i32>} : memref<1x8x8x32xf32, #tpu.memory_space<vmem>>, vector<1x1x8x32xf32>,
      %c6 = arith.constant 6 : index
      %c0_131 = arith.constant 0 : index
      %c0_132 = arith.constant 0 : index
      %243 = vector.load %arg9[%c6, %c0_131, %c0_132] : memref<8x8x128xf32, #tpu.memory_space<vmem>>, vector<1x8x128xf32>
      %244 = vector.shape_cast %243 : vector<1x8x128xf32> to vector<8x128xf32>
      %c0_133 = arith.constant 0 : index
      %c0_134 = arith.constant 0 : index
      %245 = vector.load %arg10[%c0_133, %c0_134] : memref<8x32xf32, #tpu.memory_space<vmem>>, vector<8x32xf32>
      %cst_135 = arith.constant dense<0.000000e+00> : vector<8x128xf32>
      %246 = tpu.matmul %245, %17, %cst_135 {dimension_numbers = #tpu.dot_dimension_numbers<[1], [0], [0], [1], [0, 0, 1, 1], [], []>} : vector<8x32xf32>, vector<32x128xf32>, vector<8x128xf32> -> vector<8x128xf32>
      %247 = arith.addf %244, %246 : vector<8x128xf32>
      %248 = vector.extract_strided_slice %247 {offsets = [0, 0], sizes = [8, 32], strides = [1, 1]} : vector<8x128xf32> to vector<8x32xf32>
      %249 = arith.negf %248 : vector<8x32xf32>
      %250 = math.exp %249 : vector<8x32xf32>
      %cst_136 = arith.constant 1.000000e+00 : f32
      %251 = vector.broadcast %cst_136 : f32 to vector<8x32xf32>
      %252 = arith.addf %251, %250 : vector<8x32xf32>
      %253 = arith.divf %251, %252 : vector<8x32xf32>
      %254 = vector.extract_strided_slice %247 {offsets = [0, 32], sizes = [8, 32], strides = [1, 1]} : vector<8x128xf32> to vector<8x32xf32>
      %255 = arith.negf %254 : vector<8x32xf32>
      %256 = math.exp %255 : vector<8x32xf32>
      %cst_137 = arith.constant 1.000000e+00 : f32
      %257 = vector.broadcast %cst_137 : f32 to vector<8x32xf32>
      %258 = arith.addf %257, %256 : vector<8x32xf32>
      %259 = arith.divf %257, %258 : vector<8x32xf32>
      %260 = vector.extract_strided_slice %247 {offsets = [0, 64], sizes = [8, 32], strides = [1, 1]} : vector<8x128xf32> to vector<8x32xf32>
      %261 = math.tanh %260 : vector<8x32xf32>
      %262 = vector.extract_strided_slice %247 {offsets = [0, 96], sizes = [8, 32], strides = [1, 1]} : vector<8x128xf32> to vector<8x32xf32>
      %263 = arith.negf %262 : vector<8x32xf32>
      %264 = math.exp %263 : vector<8x32xf32>
      %cst_138 = arith.constant 1.000000e+00 : f32
      %265 = vector.broadcast %cst_138 : f32 to vector<8x32xf32>
      %266 = arith.addf %265, %264 : vector<8x32xf32>
      %267 = arith.divf %265, %266 : vector<8x32xf32>
      %c0_139 = arith.constant 0 : index
      %c0_140 = arith.constant 0 : index
      %268 = vector.load %arg11[%c0_139, %c0_140] : memref<8x32xf32, #tpu.memory_space<vmem>>, vector<8x32xf32>
      %269 = arith.mulf %259, %268 : vector<8x32xf32>
      %270 = arith.mulf %253, %261 : vector<8x32xf32>
      %271 = arith.addf %269, %270 : vector<8x32xf32>
      %272 = math.tanh %271 : vector<8x32xf32>
      %273 = arith.mulf %267, %272 : vector<8x32xf32>
      %c0_141 = arith.constant 0 : index
      %c0_142 = arith.constant 0 : index
      %274 = vector.load %arg10[%c0_141, %c0_142] : memref<8x32xf32, #tpu.memory_space<vmem>>, vector<8x32xf32>
      tpu.vector_store %arg10[%c0_141, %c0_142], %273 {strides = array<i32>} : memref<8x32xf32, #tpu.memory_space<vmem>>, vector<8x32xf32>,
      %c0_143 = arith.constant 0 : index
      %c0_144 = arith.constant 0 : index
      %275 = vector.load %arg11[%c0_143, %c0_144] : memref<8x32xf32, #tpu.memory_space<vmem>>, vector<8x32xf32>
      tpu.vector_store %arg11[%c0_143, %c0_144], %271 {strides = array<i32>} : memref<8x32xf32, #tpu.memory_space<vmem>>, vector<8x32xf32>,
      %c0_145 = arith.constant 0 : index
      %c6_146 = arith.constant 6 : index
      %c0_147 = arith.constant 0 : index
      %c0_148 = arith.constant 0 : index
      %276 = vector.load %arg6[%c0_145, %c6_146, %c0_147, %c0_148] : memref<1x8x8x32xf32, #tpu.memory_space<vmem>>, vector<1x1x8x32xf32>
      %277 = vector.shape_cast %276 : vector<1x1x8x32xf32> to vector<8x32xf32>
      %278 = vector.shape_cast %273 : vector<8x32xf32> to vector<1x1x8x32xf32>
      tpu.vector_store %arg6[%c0_145, %c6_146, %c0_147, %c0_148], %278 {strides = array<i32>} : memref<1x8x8x32xf32, #tpu.memory_space<vmem>>, vector<1x1x8x32xf32>,
      %c7 = arith.constant 7 : index
      %c0_149 = arith.constant 0 : index
      %c0_150 = arith.constant 0 : index
      %279 = vector.load %arg9[%c7, %c0_149, %c0_150] : memref<8x8x128xf32, #tpu.memory_space<vmem>>, vector<1x8x128xf32>
      %280 = vector.shape_cast %279 : vector<1x8x128xf32> to vector<8x128xf32>
      %c0_151 = arith.constant 0 : index
      %c0_152 = arith.constant 0 : index
      %281 = vector.load %arg10[%c0_151, %c0_152] : memref<8x32xf32, #tpu.memory_space<vmem>>, vector<8x32xf32>
      %cst_153 = arith.constant dense<0.000000e+00> : vector<8x128xf32>
      %282 = tpu.matmul %281, %17, %cst_153 {dimension_numbers = #tpu.dot_dimension_numbers<[1], [0], [0], [1], [0, 0, 1, 1], [], []>} : vector<8x32xf32>, vector<32x128xf32>, vector<8x128xf32> -> vector<8x128xf32>
      %283 = arith.addf %280, %282 : vector<8x128xf32>
      %284 = vector.extract_strided_slice %283 {offsets = [0, 0], sizes = [8, 32], strides = [1, 1]} : vector<8x128xf32> to vector<8x32xf32>
      %285 = arith.negf %284 : vector<8x32xf32>
      %286 = math.exp %285 : vector<8x32xf32>
      %cst_154 = arith.constant 1.000000e+00 : f32
      %287 = vector.broadcast %cst_154 : f32 to vector<8x32xf32>
      %288 = arith.addf %287, %286 : vector<8x32xf32>
      %289 = arith.divf %287, %288 : vector<8x32xf32>
      %290 = vector.extract_strided_slice %283 {offsets = [0, 32], sizes = [8, 32], strides = [1, 1]} : vector<8x128xf32> to vector<8x32xf32>
      %291 = arith.negf %290 : vector<8x32xf32>
      %292 = math.exp %291 : vector<8x32xf32>
      %cst_155 = arith.constant 1.000000e+00 : f32
      %293 = vector.broadcast %cst_155 : f32 to vector<8x32xf32>
      %294 = arith.addf %293, %292 : vector<8x32xf32>
      %295 = arith.divf %293, %294 : vector<8x32xf32>
      %296 = vector.extract_strided_slice %283 {offsets = [0, 64], sizes = [8, 32], strides = [1, 1]} : vector<8x128xf32> to vector<8x32xf32>
      %297 = math.tanh %296 : vector<8x32xf32>
      %298 = vector.extract_strided_slice %283 {offsets = [0, 96], sizes = [8, 32], strides = [1, 1]} : vector<8x128xf32> to vector<8x32xf32>
      %299 = arith.negf %298 : vector<8x32xf32>
      %300 = math.exp %299 : vector<8x32xf32>
      %cst_156 = arith.constant 1.000000e+00 : f32
      %301 = vector.broadcast %cst_156 : f32 to vector<8x32xf32>
      %302 = arith.addf %301, %300 : vector<8x32xf32>
      %303 = arith.divf %301, %302 : vector<8x32xf32>
      %c0_157 = arith.constant 0 : index
      %c0_158 = arith.constant 0 : index
      %304 = vector.load %arg11[%c0_157, %c0_158] : memref<8x32xf32, #tpu.memory_space<vmem>>, vector<8x32xf32>
      %305 = arith.mulf %295, %304 : vector<8x32xf32>
      %306 = arith.mulf %289, %297 : vector<8x32xf32>
      %307 = arith.addf %305, %306 : vector<8x32xf32>
      %308 = math.tanh %307 : vector<8x32xf32>
      %309 = arith.mulf %303, %308 : vector<8x32xf32>
      %c0_159 = arith.constant 0 : index
      %c0_160 = arith.constant 0 : index
      %310 = vector.load %arg10[%c0_159, %c0_160] : memref<8x32xf32, #tpu.memory_space<vmem>>, vector<8x32xf32>
      tpu.vector_store %arg10[%c0_159, %c0_160], %309 {strides = array<i32>} : memref<8x32xf32, #tpu.memory_space<vmem>>, vector<8x32xf32>,
      %c0_161 = arith.constant 0 : index
      %c0_162 = arith.constant 0 : index
      %311 = vector.load %arg11[%c0_161, %c0_162] : memref<8x32xf32, #tpu.memory_space<vmem>>, vector<8x32xf32>
      tpu.vector_store %arg11[%c0_161, %c0_162], %307 {strides = array<i32>} : memref<8x32xf32, #tpu.memory_space<vmem>>, vector<8x32xf32>,
      %c0_163 = arith.constant 0 : index
      %c7_164 = arith.constant 7 : index
      %c0_165 = arith.constant 0 : index
      %c0_166 = arith.constant 0 : index
      %312 = vector.load %arg6[%c0_163, %c7_164, %c0_165, %c0_166] : memref<1x8x8x32xf32, #tpu.memory_space<vmem>>, vector<1x1x8x32xf32>
      %313 = vector.shape_cast %312 : vector<1x1x8x32xf32> to vector<8x32xf32>
      %314 = vector.shape_cast %309 : vector<8x32xf32> to vector<1x1x8x32xf32>
      tpu.vector_store %arg6[%c0_163, %c7_164, %c0_165, %c0_166], %314 {strides = array<i32>} : memref<1x8x8x32xf32, #tpu.memory_space<vmem>>, vector<1x1x8x32xf32>,
    } else {
    }
    %c1_i32 = arith.constant 1 : i32
    %21 = arith.cmpi eq, %arg0, %c1_i32 : i32
    %22 = arith.extui %21 : i1 to i32
    %c0_i32_19 = arith.constant 0 : i32
    %23 = arith.cmpi ne, %22, %c0_i32_19 : i32
    scf.if %23 {
      %c7 = arith.constant 7 : index
      %c0_22 = arith.constant 0 : index
      %c0_23 = arith.constant 0 : index
      %27 = vector.load %arg9[%c7, %c0_22, %c0_23] : memref<8x8x128xf32, #tpu.memory_space<vmem>>, vector<1x8x128xf32>
      %28 = vector.shape_cast %27 : vector<1x8x128xf32> to vector<8x128xf32>
      %c0_24 = arith.constant 0 : index
      %c0_25 = arith.constant 0 : index
      %29 = vector.load %arg10[%c0_24, %c0_25] : memref<8x32xf32, #tpu.memory_space<vmem>>, vector<8x32xf32>
      %cst_26 = arith.constant dense<0.000000e+00> : vector<8x128xf32>
      %30 = tpu.matmul %29, %17, %cst_26 {dimension_numbers = #tpu.dot_dimension_numbers<[1], [0], [0], [1], [0, 0, 1, 1], [], []>} : vector<8x32xf32>, vector<32x128xf32>, vector<8x128xf32> -> vector<8x128xf32>
      %31 = arith.addf %28, %30 : vector<8x128xf32>
      %32 = vector.extract_strided_slice %31 {offsets = [0, 0], sizes = [8, 32], strides = [1, 1]} : vector<8x128xf32> to vector<8x32xf32>
      %33 = arith.negf %32 : vector<8x32xf32>
      %34 = math.exp %33 : vector<8x32xf32>
      %cst_27 = arith.constant 1.000000e+00 : f32
      %35 = vector.broadcast %cst_27 : f32 to vector<8x32xf32>
      %36 = arith.addf %35, %34 : vector<8x32xf32>
      %37 = arith.divf %35, %36 : vector<8x32xf32>
      %38 = vector.extract_strided_slice %31 {offsets = [0, 32], sizes = [8, 32], strides = [1, 1]} : vector<8x128xf32> to vector<8x32xf32>
      %39 = arith.negf %38 : vector<8x32xf32>
      %40 = math.exp %39 : vector<8x32xf32>
      %cst_28 = arith.constant 1.000000e+00 : f32
      %41 = vector.broadcast %cst_28 : f32 to vector<8x32xf32>
      %42 = arith.addf %41, %40 : vector<8x32xf32>
      %43 = arith.divf %41, %42 : vector<8x32xf32>
      %44 = vector.extract_strided_slice %31 {offsets = [0, 64], sizes = [8, 32], strides = [1, 1]} : vector<8x128xf32> to vector<8x32xf32>
      %45 = math.tanh %44 : vector<8x32xf32>
      %46 = vector.extract_strided_slice %31 {offsets = [0, 96], sizes = [8, 32], strides = [1, 1]} : vector<8x128xf32> to vector<8x32xf32>
      %47 = arith.negf %46 : vector<8x32xf32>
      %48 = math.exp %47 : vector<8x32xf32>
      %cst_29 = arith.constant 1.000000e+00 : f32
      %49 = vector.broadcast %cst_29 : f32 to vector<8x32xf32>
      %50 = arith.addf %49, %48 : vector<8x32xf32>
      %51 = arith.divf %49, %50 : vector<8x32xf32>
      %c0_30 = arith.constant 0 : index
      %c0_31 = arith.constant 0 : index
      %52 = vector.load %arg11[%c0_30, %c0_31] : memref<8x32xf32, #tpu.memory_space<vmem>>, vector<8x32xf32>
      %53 = arith.mulf %43, %52 : vector<8x32xf32>
      %54 = arith.mulf %37, %45 : vector<8x32xf32>
      %55 = arith.addf %53, %54 : vector<8x32xf32>
      %56 = math.tanh %55 : vector<8x32xf32>
      %57 = arith.mulf %51, %56 : vector<8x32xf32>
      %c0_32 = arith.constant 0 : index
      %c0_33 = arith.constant 0 : index
      %58 = vector.load %arg10[%c0_32, %c0_33] : memref<8x32xf32, #tpu.memory_space<vmem>>, vector<8x32xf32>
      tpu.vector_store %arg10[%c0_32, %c0_33], %57 {strides = array<i32>} : memref<8x32xf32, #tpu.memory_space<vmem>>, vector<8x32xf32>,
      %c0_34 = arith.constant 0 : index
      %c0_35 = arith.constant 0 : index
      %59 = vector.load %arg11[%c0_34, %c0_35] : memref<8x32xf32, #tpu.memory_space<vmem>>, vector<8x32xf32>
      tpu.vector_store %arg11[%c0_34, %c0_35], %55 {strides = array<i32>} : memref<8x32xf32, #tpu.memory_space<vmem>>, vector<8x32xf32>,
      %c0_36 = arith.constant 0 : index
      %c7_37 = arith.constant 7 : index
      %c0_38 = arith.constant 0 : index
      %c0_39 = arith.constant 0 : index
      %60 = vector.load %arg6[%c0_36, %c7_37, %c0_38, %c0_39] : memref<1x8x8x32xf32, #tpu.memory_space<vmem>>, vector<1x1x8x32xf32>
      %61 = vector.shape_cast %60 : vector<1x1x8x32xf32> to vector<8x32xf32>
      %62 = vector.shape_cast %57 : vector<8x32xf32> to vector<1x1x8x32xf32>
      tpu.vector_store %arg6[%c0_36, %c7_37, %c0_38, %c0_39], %62 {strides = array<i32>} : memref<1x8x8x32xf32, #tpu.memory_space<vmem>>, vector<1x1x8x32xf32>,
      %c6 = arith.constant 6 : index
      %c0_40 = arith.constant 0 : index
      %c0_41 = arith.constant 0 : index
      %63 = vector.load %arg9[%c6, %c0_40, %c0_41] : memref<8x8x128xf32, #tpu.memory_space<vmem>>, vector<1x8x128xf32>
      %64 = vector.shape_cast %63 : vector<1x8x128xf32> to vector<8x128xf32>
      %c0_42 = arith.constant 0 : index
      %c0_43 = arith.constant 0 : index
      %65 = vector.load %arg10[%c0_42, %c0_43] : memref<8x32xf32, #tpu.memory_space<vmem>>, vector<8x32xf32>
      %cst_44 = arith.constant dense<0.000000e+00> : vector<8x128xf32>
      %66 = tpu.matmul %65, %17, %cst_44 {dimension_numbers = #tpu.dot_dimension_numbers<[1], [0], [0], [1], [0, 0, 1, 1], [], []>} : vector<8x32xf32>, vector<32x128xf32>, vector<8x128xf32> -> vector<8x128xf32>
      %67 = arith.addf %64, %66 : vector<8x128xf32>
      %68 = vector.extract_strided_slice %67 {offsets = [0, 0], sizes = [8, 32], strides = [1, 1]} : vector<8x128xf32> to vector<8x32xf32>
      %69 = arith.negf %68 : vector<8x32xf32>
      %70 = math.exp %69 : vector<8x32xf32>
      %cst_45 = arith.constant 1.000000e+00 : f32
      %71 = vector.broadcast %cst_45 : f32 to vector<8x32xf32>
      %72 = arith.addf %71, %70 : vector<8x32xf32>
      %73 = arith.divf %71, %72 : vector<8x32xf32>
      %74 = vector.extract_strided_slice %67 {offsets = [0, 32], sizes = [8, 32], strides = [1, 1]} : vector<8x128xf32> to vector<8x32xf32>
      %75 = arith.negf %74 : vector<8x32xf32>
      %76 = math.exp %75 : vector<8x32xf32>
      %cst_46 = arith.constant 1.000000e+00 : f32
      %77 = vector.broadcast %cst_46 : f32 to vector<8x32xf32>
      %78 = arith.addf %77, %76 : vector<8x32xf32>
      %79 = arith.divf %77, %78 : vector<8x32xf32>
      %80 = vector.extract_strided_slice %67 {offsets = [0, 64], sizes = [8, 32], strides = [1, 1]} : vector<8x128xf32> to vector<8x32xf32>
      %81 = math.tanh %80 : vector<8x32xf32>
      %82 = vector.extract_strided_slice %67 {offsets = [0, 96], sizes = [8, 32], strides = [1, 1]} : vector<8x128xf32> to vector<8x32xf32>
      %83 = arith.negf %82 : vector<8x32xf32>
      %84 = math.exp %83 : vector<8x32xf32>
      %cst_47 = arith.constant 1.000000e+00 : f32
      %85 = vector.broadcast %cst_47 : f32 to vector<8x32xf32>
      %86 = arith.addf %85, %84 : vector<8x32xf32>
      %87 = arith.divf %85, %86 : vector<8x32xf32>
      %c0_48 = arith.constant 0 : index
      %c0_49 = arith.constant 0 : index
      %88 = vector.load %arg11[%c0_48, %c0_49] : memref<8x32xf32, #tpu.memory_space<vmem>>, vector<8x32xf32>
      %89 = arith.mulf %79, %88 : vector<8x32xf32>
      %90 = arith.mulf %73, %81 : vector<8x32xf32>
      %91 = arith.addf %89, %90 : vector<8x32xf32>
      %92 = math.tanh %91 : vector<8x32xf32>
      %93 = arith.mulf %87, %92 : vector<8x32xf32>
      %c0_50 = arith.constant 0 : index
      %c0_51 = arith.constant 0 : index
      %94 = vector.load %arg10[%c0_50, %c0_51] : memref<8x32xf32, #tpu.memory_space<vmem>>, vector<8x32xf32>
      tpu.vector_store %arg10[%c0_50, %c0_51], %93 {strides = array<i32>} : memref<8x32xf32, #tpu.memory_space<vmem>>, vector<8x32xf32>,
      %c0_52 = arith.constant 0 : index
      %c0_53 = arith.constant 0 : index
      %95 = vector.load %arg11[%c0_52, %c0_53] : memref<8x32xf32, #tpu.memory_space<vmem>>, vector<8x32xf32>
      tpu.vector_store %arg11[%c0_52, %c0_53], %91 {strides = array<i32>} : memref<8x32xf32, #tpu.memory_space<vmem>>, vector<8x32xf32>,
      %c0_54 = arith.constant 0 : index
      %c6_55 = arith.constant 6 : index
      %c0_56 = arith.constant 0 : index
      %c0_57 = arith.constant 0 : index
      %96 = vector.load %arg6[%c0_54, %c6_55, %c0_56, %c0_57] : memref<1x8x8x32xf32, #tpu.memory_space<vmem>>, vector<1x1x8x32xf32>
      %97 = vector.shape_cast %96 : vector<1x1x8x32xf32> to vector<8x32xf32>
      %98 = vector.shape_cast %93 : vector<8x32xf32> to vector<1x1x8x32xf32>
      tpu.vector_store %arg6[%c0_54, %c6_55, %c0_56, %c0_57], %98 {strides = array<i32>} : memref<1x8x8x32xf32, #tpu.memory_space<vmem>>, vector<1x1x8x32xf32>,
      %c5 = arith.constant 5 : index
      %c0_58 = arith.constant 0 : index
      %c0_59 = arith.constant 0 : index
      %99 = vector.load %arg9[%c5, %c0_58, %c0_59] : memref<8x8x128xf32, #tpu.memory_space<vmem>>, vector<1x8x128xf32>
      %100 = vector.shape_cast %99 : vector<1x8x128xf32> to vector<8x128xf32>
      %c0_60 = arith.constant 0 : index
      %c0_61 = arith.constant 0 : index
      %101 = vector.load %arg10[%c0_60, %c0_61] : memref<8x32xf32, #tpu.memory_space<vmem>>, vector<8x32xf32>
      %cst_62 = arith.constant dense<0.000000e+00> : vector<8x128xf32>
      %102 = tpu.matmul %101, %17, %cst_62 {dimension_numbers = #tpu.dot_dimension_numbers<[1], [0], [0], [1], [0, 0, 1, 1], [], []>} : vector<8x32xf32>, vector<32x128xf32>, vector<8x128xf32> -> vector<8x128xf32>
      %103 = arith.addf %100, %102 : vector<8x128xf32>
      %104 = vector.extract_strided_slice %103 {offsets = [0, 0], sizes = [8, 32], strides = [1, 1]} : vector<8x128xf32> to vector<8x32xf32>
      %105 = arith.negf %104 : vector<8x32xf32>
      %106 = math.exp %105 : vector<8x32xf32>
      %cst_63 = arith.constant 1.000000e+00 : f32
      %107 = vector.broadcast %cst_63 : f32 to vector<8x32xf32>
      %108 = arith.addf %107, %106 : vector<8x32xf32>
      %109 = arith.divf %107, %108 : vector<8x32xf32>
      %110 = vector.extract_strided_slice %103 {offsets = [0, 32], sizes = [8, 32], strides = [1, 1]} : vector<8x128xf32> to vector<8x32xf32>
      %111 = arith.negf %110 : vector<8x32xf32>
      %112 = math.exp %111 : vector<8x32xf32>
      %cst_64 = arith.constant 1.000000e+00 : f32
      %113 = vector.broadcast %cst_64 : f32 to vector<8x32xf32>
      %114 = arith.addf %113, %112 : vector<8x32xf32>
      %115 = arith.divf %113, %114 : vector<8x32xf32>
      %116 = vector.extract_strided_slice %103 {offsets = [0, 64], sizes = [8, 32], strides = [1, 1]} : vector<8x128xf32> to vector<8x32xf32>
      %117 = math.tanh %116 : vector<8x32xf32>
      %118 = vector.extract_strided_slice %103 {offsets = [0, 96], sizes = [8, 32], strides = [1, 1]} : vector<8x128xf32> to vector<8x32xf32>
      %119 = arith.negf %118 : vector<8x32xf32>
      %120 = math.exp %119 : vector<8x32xf32>
      %cst_65 = arith.constant 1.000000e+00 : f32
      %121 = vector.broadcast %cst_65 : f32 to vector<8x32xf32>
      %122 = arith.addf %121, %120 : vector<8x32xf32>
      %123 = arith.divf %121, %122 : vector<8x32xf32>
      %c0_66 = arith.constant 0 : index
      %c0_67 = arith.constant 0 : index
      %124 = vector.load %arg11[%c0_66, %c0_67] : memref<8x32xf32, #tpu.memory_space<vmem>>, vector<8x32xf32>
      %125 = arith.mulf %115, %124 : vector<8x32xf32>
      %126 = arith.mulf %109, %117 : vector<8x32xf32>
      %127 = arith.addf %125, %126 : vector<8x32xf32>
      %128 = math.tanh %127 : vector<8x32xf32>
      %129 = arith.mulf %123, %128 : vector<8x32xf32>
      %c0_68 = arith.constant 0 : index
      %c0_69 = arith.constant 0 : index
      %130 = vector.load %arg10[%c0_68, %c0_69] : memref<8x32xf32, #tpu.memory_space<vmem>>, vector<8x32xf32>
      tpu.vector_store %arg10[%c0_68, %c0_69], %129 {strides = array<i32>} : memref<8x32xf32, #tpu.memory_space<vmem>>, vector<8x32xf32>,
      %c0_70 = arith.constant 0 : index
      %c0_71 = arith.constant 0 : index
      %131 = vector.load %arg11[%c0_70, %c0_71] : memref<8x32xf32, #tpu.memory_space<vmem>>, vector<8x32xf32>
      tpu.vector_store %arg11[%c0_70, %c0_71], %127 {strides = array<i32>} : memref<8x32xf32, #tpu.memory_space<vmem>>, vector<8x32xf32>,
      %c0_72 = arith.constant 0 : index
      %c5_73 = arith.constant 5 : index
      %c0_74 = arith.constant 0 : index
      %c0_75 = arith.constant 0 : index
      %132 = vector.load %arg6[%c0_72, %c5_73, %c0_74, %c0_75] : memref<1x8x8x32xf32, #tpu.memory_space<vmem>>, vector<1x1x8x32xf32>
      %133 = vector.shape_cast %132 : vector<1x1x8x32xf32> to vector<8x32xf32>
      %134 = vector.shape_cast %129 : vector<8x32xf32> to vector<1x1x8x32xf32>
      tpu.vector_store %arg6[%c0_72, %c5_73, %c0_74, %c0_75], %134 {strides = array<i32>} : memref<1x8x8x32xf32, #tpu.memory_space<vmem>>, vector<1x1x8x32xf32>,
      %c4 = arith.constant 4 : index
      %c0_76 = arith.constant 0 : index
      %c0_77 = arith.constant 0 : index
      %135 = vector.load %arg9[%c4, %c0_76, %c0_77] : memref<8x8x128xf32, #tpu.memory_space<vmem>>, vector<1x8x128xf32>
      %136 = vector.shape_cast %135 : vector<1x8x128xf32> to vector<8x128xf32>
      %c0_78 = arith.constant 0 : index
      %c0_79 = arith.constant 0 : index
      %137 = vector.load %arg10[%c0_78, %c0_79] : memref<8x32xf32, #tpu.memory_space<vmem>>, vector<8x32xf32>
      %cst_80 = arith.constant dense<0.000000e+00> : vector<8x128xf32>
      %138 = tpu.matmul %137, %17, %cst_80 {dimension_numbers = #tpu.dot_dimension_numbers<[1], [0], [0], [1], [0, 0, 1, 1], [], []>} : vector<8x32xf32>, vector<32x128xf32>, vector<8x128xf32> -> vector<8x128xf32>
      %139 = arith.addf %136, %138 : vector<8x128xf32>
      %140 = vector.extract_strided_slice %139 {offsets = [0, 0], sizes = [8, 32], strides = [1, 1]} : vector<8x128xf32> to vector<8x32xf32>
      %141 = arith.negf %140 : vector<8x32xf32>
      %142 = math.exp %141 : vector<8x32xf32>
      %cst_81 = arith.constant 1.000000e+00 : f32
      %143 = vector.broadcast %cst_81 : f32 to vector<8x32xf32>
      %144 = arith.addf %143, %142 : vector<8x32xf32>
      %145 = arith.divf %143, %144 : vector<8x32xf32>
      %146 = vector.extract_strided_slice %139 {offsets = [0, 32], sizes = [8, 32], strides = [1, 1]} : vector<8x128xf32> to vector<8x32xf32>
      %147 = arith.negf %146 : vector<8x32xf32>
      %148 = math.exp %147 : vector<8x32xf32>
      %cst_82 = arith.constant 1.000000e+00 : f32
      %149 = vector.broadcast %cst_82 : f32 to vector<8x32xf32>
      %150 = arith.addf %149, %148 : vector<8x32xf32>
      %151 = arith.divf %149, %150 : vector<8x32xf32>
      %152 = vector.extract_strided_slice %139 {offsets = [0, 64], sizes = [8, 32], strides = [1, 1]} : vector<8x128xf32> to vector<8x32xf32>
      %153 = math.tanh %152 : vector<8x32xf32>
      %154 = vector.extract_strided_slice %139 {offsets = [0, 96], sizes = [8, 32], strides = [1, 1]} : vector<8x128xf32> to vector<8x32xf32>
      %155 = arith.negf %154 : vector<8x32xf32>
      %156 = math.exp %155 : vector<8x32xf32>
      %cst_83 = arith.constant 1.000000e+00 : f32
      %157 = vector.broadcast %cst_83 : f32 to vector<8x32xf32>
      %158 = arith.addf %157, %156 : vector<8x32xf32>
      %159 = arith.divf %157, %158 : vector<8x32xf32>
      %c0_84 = arith.constant 0 : index
      %c0_85 = arith.constant 0 : index
      %160 = vector.load %arg11[%c0_84, %c0_85] : memref<8x32xf32, #tpu.memory_space<vmem>>, vector<8x32xf32>
      %161 = arith.mulf %151, %160 : vector<8x32xf32>
      %162 = arith.mulf %145, %153 : vector<8x32xf32>
      %163 = arith.addf %161, %162 : vector<8x32xf32>
      %164 = math.tanh %163 : vector<8x32xf32>
      %165 = arith.mulf %159, %164 : vector<8x32xf32>
      %c0_86 = arith.constant 0 : index
      %c0_87 = arith.constant 0 : index
      %166 = vector.load %arg10[%c0_86, %c0_87] : memref<8x32xf32, #tpu.memory_space<vmem>>, vector<8x32xf32>
      tpu.vector_store %arg10[%c0_86, %c0_87], %165 {strides = array<i32>} : memref<8x32xf32, #tpu.memory_space<vmem>>, vector<8x32xf32>,
      %c0_88 = arith.constant 0 : index
      %c0_89 = arith.constant 0 : index
      %167 = vector.load %arg11[%c0_88, %c0_89] : memref<8x32xf32, #tpu.memory_space<vmem>>, vector<8x32xf32>
      tpu.vector_store %arg11[%c0_88, %c0_89], %163 {strides = array<i32>} : memref<8x32xf32, #tpu.memory_space<vmem>>, vector<8x32xf32>,
      %c0_90 = arith.constant 0 : index
      %c4_91 = arith.constant 4 : index
      %c0_92 = arith.constant 0 : index
      %c0_93 = arith.constant 0 : index
      %168 = vector.load %arg6[%c0_90, %c4_91, %c0_92, %c0_93] : memref<1x8x8x32xf32, #tpu.memory_space<vmem>>, vector<1x1x8x32xf32>
      %169 = vector.shape_cast %168 : vector<1x1x8x32xf32> to vector<8x32xf32>
      %170 = vector.shape_cast %165 : vector<8x32xf32> to vector<1x1x8x32xf32>
      tpu.vector_store %arg6[%c0_90, %c4_91, %c0_92, %c0_93], %170 {strides = array<i32>} : memref<1x8x8x32xf32, #tpu.memory_space<vmem>>, vector<1x1x8x32xf32>,
      %c3 = arith.constant 3 : index
      %c0_94 = arith.constant 0 : index
      %c0_95 = arith.constant 0 : index
      %171 = vector.load %arg9[%c3, %c0_94, %c0_95] : memref<8x8x128xf32, #tpu.memory_space<vmem>>, vector<1x8x128xf32>
      %172 = vector.shape_cast %171 : vector<1x8x128xf32> to vector<8x128xf32>
      %c0_96 = arith.constant 0 : index
      %c0_97 = arith.constant 0 : index
      %173 = vector.load %arg10[%c0_96, %c0_97] : memref<8x32xf32, #tpu.memory_space<vmem>>, vector<8x32xf32>
      %cst_98 = arith.constant dense<0.000000e+00> : vector<8x128xf32>
      %174 = tpu.matmul %173, %17, %cst_98 {dimension_numbers = #tpu.dot_dimension_numbers<[1], [0], [0], [1], [0, 0, 1, 1], [], []>} : vector<8x32xf32>, vector<32x128xf32>, vector<8x128xf32> -> vector<8x128xf32>
      %175 = arith.addf %172, %174 : vector<8x128xf32>
      %176 = vector.extract_strided_slice %175 {offsets = [0, 0], sizes = [8, 32], strides = [1, 1]} : vector<8x128xf32> to vector<8x32xf32>
      %177 = arith.negf %176 : vector<8x32xf32>
      %178 = math.exp %177 : vector<8x32xf32>
      %cst_99 = arith.constant 1.000000e+00 : f32
      %179 = vector.broadcast %cst_99 : f32 to vector<8x32xf32>
      %180 = arith.addf %179, %178 : vector<8x32xf32>
      %181 = arith.divf %179, %180 : vector<8x32xf32>
      %182 = vector.extract_strided_slice %175 {offsets = [0, 32], sizes = [8, 32], strides = [1, 1]} : vector<8x128xf32> to vector<8x32xf32>
      %183 = arith.negf %182 : vector<8x32xf32>
      %184 = math.exp %183 : vector<8x32xf32>
      %cst_100 = arith.constant 1.000000e+00 : f32
      %185 = vector.broadcast %cst_100 : f32 to vector<8x32xf32>
      %186 = arith.addf %185, %184 : vector<8x32xf32>
      %187 = arith.divf %185, %186 : vector<8x32xf32>
      %188 = vector.extract_strided_slice %175 {offsets = [0, 64], sizes = [8, 32], strides = [1, 1]} : vector<8x128xf32> to vector<8x32xf32>
      %189 = math.tanh %188 : vector<8x32xf32>
      %190 = vector.extract_strided_slice %175 {offsets = [0, 96], sizes = [8, 32], strides = [1, 1]} : vector<8x128xf32> to vector<8x32xf32>
      %191 = arith.negf %190 : vector<8x32xf32>
      %192 = math.exp %191 : vector<8x32xf32>
      %cst_101 = arith.constant 1.000000e+00 : f32
      %193 = vector.broadcast %cst_101 : f32 to vector<8x32xf32>
      %194 = arith.addf %193, %192 : vector<8x32xf32>
      %195 = arith.divf %193, %194 : vector<8x32xf32>
      %c0_102 = arith.constant 0 : index
      %c0_103 = arith.constant 0 : index
      %196 = vector.load %arg11[%c0_102, %c0_103] : memref<8x32xf32, #tpu.memory_space<vmem>>, vector<8x32xf32>
      %197 = arith.mulf %187, %196 : vector<8x32xf32>
      %198 = arith.mulf %181, %189 : vector<8x32xf32>
      %199 = arith.addf %197, %198 : vector<8x32xf32>
      %200 = math.tanh %199 : vector<8x32xf32>
      %201 = arith.mulf %195, %200 : vector<8x32xf32>
      %c0_104 = arith.constant 0 : index
      %c0_105 = arith.constant 0 : index
      %202 = vector.load %arg10[%c0_104, %c0_105] : memref<8x32xf32, #tpu.memory_space<vmem>>, vector<8x32xf32>
      tpu.vector_store %arg10[%c0_104, %c0_105], %201 {strides = array<i32>} : memref<8x32xf32, #tpu.memory_space<vmem>>, vector<8x32xf32>,
      %c0_106 = arith.constant 0 : index
      %c0_107 = arith.constant 0 : index
      %203 = vector.load %arg11[%c0_106, %c0_107] : memref<8x32xf32, #tpu.memory_space<vmem>>, vector<8x32xf32>
      tpu.vector_store %arg11[%c0_106, %c0_107], %199 {strides = array<i32>} : memref<8x32xf32, #tpu.memory_space<vmem>>, vector<8x32xf32>,
      %c0_108 = arith.constant 0 : index
      %c3_109 = arith.constant 3 : index
      %c0_110 = arith.constant 0 : index
      %c0_111 = arith.constant 0 : index
      %204 = vector.load %arg6[%c0_108, %c3_109, %c0_110, %c0_111] : memref<1x8x8x32xf32, #tpu.memory_space<vmem>>, vector<1x1x8x32xf32>
      %205 = vector.shape_cast %204 : vector<1x1x8x32xf32> to vector<8x32xf32>
      %206 = vector.shape_cast %201 : vector<8x32xf32> to vector<1x1x8x32xf32>
      tpu.vector_store %arg6[%c0_108, %c3_109, %c0_110, %c0_111], %206 {strides = array<i32>} : memref<1x8x8x32xf32, #tpu.memory_space<vmem>>, vector<1x1x8x32xf32>,
      %c2 = arith.constant 2 : index
      %c0_112 = arith.constant 0 : index
      %c0_113 = arith.constant 0 : index
      %207 = vector.load %arg9[%c2, %c0_112, %c0_113] : memref<8x8x128xf32, #tpu.memory_space<vmem>>, vector<1x8x128xf32>
      %208 = vector.shape_cast %207 : vector<1x8x128xf32> to vector<8x128xf32>
      %c0_114 = arith.constant 0 : index
      %c0_115 = arith.constant 0 : index
      %209 = vector.load %arg10[%c0_114, %c0_115] : memref<8x32xf32, #tpu.memory_space<vmem>>, vector<8x32xf32>
      %cst_116 = arith.constant dense<0.000000e+00> : vector<8x128xf32>
      %210 = tpu.matmul %209, %17, %cst_116 {dimension_numbers = #tpu.dot_dimension_numbers<[1], [0], [0], [1], [0, 0, 1, 1], [], []>} : vector<8x32xf32>, vector<32x128xf32>, vector<8x128xf32> -> vector<8x128xf32>
      %211 = arith.addf %208, %210 : vector<8x128xf32>
      %212 = vector.extract_strided_slice %211 {offsets = [0, 0], sizes = [8, 32], strides = [1, 1]} : vector<8x128xf32> to vector<8x32xf32>
      %213 = arith.negf %212 : vector<8x32xf32>
      %214 = math.exp %213 : vector<8x32xf32>
      %cst_117 = arith.constant 1.000000e+00 : f32
      %215 = vector.broadcast %cst_117 : f32 to vector<8x32xf32>
      %216 = arith.addf %215, %214 : vector<8x32xf32>
      %217 = arith.divf %215, %216 : vector<8x32xf32>
      %218 = vector.extract_strided_slice %211 {offsets = [0, 32], sizes = [8, 32], strides = [1, 1]} : vector<8x128xf32> to vector<8x32xf32>
      %219 = arith.negf %218 : vector<8x32xf32>
      %220 = math.exp %219 : vector<8x32xf32>
      %cst_118 = arith.constant 1.000000e+00 : f32
      %221 = vector.broadcast %cst_118 : f32 to vector<8x32xf32>
      %222 = arith.addf %221, %220 : vector<8x32xf32>
      %223 = arith.divf %221, %222 : vector<8x32xf32>
      %224 = vector.extract_strided_slice %211 {offsets = [0, 64], sizes = [8, 32], strides = [1, 1]} : vector<8x128xf32> to vector<8x32xf32>
      %225 = math.tanh %224 : vector<8x32xf32>
      %226 = vector.extract_strided_slice %211 {offsets = [0, 96], sizes = [8, 32], strides = [1, 1]} : vector<8x128xf32> to vector<8x32xf32>
      %227 = arith.negf %226 : vector<8x32xf32>
      %228 = math.exp %227 : vector<8x32xf32>
      %cst_119 = arith.constant 1.000000e+00 : f32
      %229 = vector.broadcast %cst_119 : f32 to vector<8x32xf32>
      %230 = arith.addf %229, %228 : vector<8x32xf32>
      %231 = arith.divf %229, %230 : vector<8x32xf32>
      %c0_120 = arith.constant 0 : index
      %c0_121 = arith.constant 0 : index
      %232 = vector.load %arg11[%c0_120, %c0_121] : memref<8x32xf32, #tpu.memory_space<vmem>>, vector<8x32xf32>
      %233 = arith.mulf %223, %232 : vector<8x32xf32>
      %234 = arith.mulf %217, %225 : vector<8x32xf32>
      %235 = arith.addf %233, %234 : vector<8x32xf32>
      %236 = math.tanh %235 : vector<8x32xf32>
      %237 = arith.mulf %231, %236 : vector<8x32xf32>
      %c0_122 = arith.constant 0 : index
      %c0_123 = arith.constant 0 : index
      %238 = vector.load %arg10[%c0_122, %c0_123] : memref<8x32xf32, #tpu.memory_space<vmem>>, vector<8x32xf32>
      tpu.vector_store %arg10[%c0_122, %c0_123], %237 {strides = array<i32>} : memref<8x32xf32, #tpu.memory_space<vmem>>, vector<8x32xf32>,
      %c0_124 = arith.constant 0 : index
      %c0_125 = arith.constant 0 : index
      %239 = vector.load %arg11[%c0_124, %c0_125] : memref<8x32xf32, #tpu.memory_space<vmem>>, vector<8x32xf32>
      tpu.vector_store %arg11[%c0_124, %c0_125], %235 {strides = array<i32>} : memref<8x32xf32, #tpu.memory_space<vmem>>, vector<8x32xf32>,
      %c0_126 = arith.constant 0 : index
      %c2_127 = arith.constant 2 : index
      %c0_128 = arith.constant 0 : index
      %c0_129 = arith.constant 0 : index
      %240 = vector.load %arg6[%c0_126, %c2_127, %c0_128, %c0_129] : memref<1x8x8x32xf32, #tpu.memory_space<vmem>>, vector<1x1x8x32xf32>
      %241 = vector.shape_cast %240 : vector<1x1x8x32xf32> to vector<8x32xf32>
      %242 = vector.shape_cast %237 : vector<8x32xf32> to vector<1x1x8x32xf32>
      tpu.vector_store %arg6[%c0_126, %c2_127, %c0_128, %c0_129], %242 {strides = array<i32>} : memref<1x8x8x32xf32, #tpu.memory_space<vmem>>, vector<1x1x8x32xf32>,
      %c1 = arith.constant 1 : index
      %c0_130 = arith.constant 0 : index
      %c0_131 = arith.constant 0 : index
      %243 = vector.load %arg9[%c1, %c0_130, %c0_131] : memref<8x8x128xf32, #tpu.memory_space<vmem>>, vector<1x8x128xf32>
      %244 = vector.shape_cast %243 : vector<1x8x128xf32> to vector<8x128xf32>
      %c0_132 = arith.constant 0 : index
      %c0_133 = arith.constant 0 : index
      %245 = vector.load %arg10[%c0_132, %c0_133] : memref<8x32xf32, #tpu.memory_space<vmem>>, vector<8x32xf32>
      %cst_134 = arith.constant dense<0.000000e+00> : vector<8x128xf32>
      %246 = tpu.matmul %245, %17, %cst_134 {dimension_numbers = #tpu.dot_dimension_numbers<[1], [0], [0], [1], [0, 0, 1, 1], [], []>} : vector<8x32xf32>, vector<32x128xf32>, vector<8x128xf32> -> vector<8x128xf32>
      %247 = arith.addf %244, %246 : vector<8x128xf32>
      %248 = vector.extract_strided_slice %247 {offsets = [0, 0], sizes = [8, 32], strides = [1, 1]} : vector<8x128xf32> to vector<8x32xf32>
      %249 = arith.negf %248 : vector<8x32xf32>
      %250 = math.exp %249 : vector<8x32xf32>
      %cst_135 = arith.constant 1.000000e+00 : f32
      %251 = vector.broadcast %cst_135 : f32 to vector<8x32xf32>
      %252 = arith.addf %251, %250 : vector<8x32xf32>
      %253 = arith.divf %251, %252 : vector<8x32xf32>
      %254 = vector.extract_strided_slice %247 {offsets = [0, 32], sizes = [8, 32], strides = [1, 1]} : vector<8x128xf32> to vector<8x32xf32>
      %255 = arith.negf %254 : vector<8x32xf32>
      %256 = math.exp %255 : vector<8x32xf32>
      %cst_136 = arith.constant 1.000000e+00 : f32
      %257 = vector.broadcast %cst_136 : f32 to vector<8x32xf32>
      %258 = arith.addf %257, %256 : vector<8x32xf32>
      %259 = arith.divf %257, %258 : vector<8x32xf32>
      %260 = vector.extract_strided_slice %247 {offsets = [0, 64], sizes = [8, 32], strides = [1, 1]} : vector<8x128xf32> to vector<8x32xf32>
      %261 = math.tanh %260 : vector<8x32xf32>
      %262 = vector.extract_strided_slice %247 {offsets = [0, 96], sizes = [8, 32], strides = [1, 1]} : vector<8x128xf32> to vector<8x32xf32>
      %263 = arith.negf %262 : vector<8x32xf32>
      %264 = math.exp %263 : vector<8x32xf32>
      %cst_137 = arith.constant 1.000000e+00 : f32
      %265 = vector.broadcast %cst_137 : f32 to vector<8x32xf32>
      %266 = arith.addf %265, %264 : vector<8x32xf32>
      %267 = arith.divf %265, %266 : vector<8x32xf32>
      %c0_138 = arith.constant 0 : index
      %c0_139 = arith.constant 0 : index
      %268 = vector.load %arg11[%c0_138, %c0_139] : memref<8x32xf32, #tpu.memory_space<vmem>>, vector<8x32xf32>
      %269 = arith.mulf %259, %268 : vector<8x32xf32>
      %270 = arith.mulf %253, %261 : vector<8x32xf32>
      %271 = arith.addf %269, %270 : vector<8x32xf32>
      %272 = math.tanh %271 : vector<8x32xf32>
      %273 = arith.mulf %267, %272 : vector<8x32xf32>
      %c0_140 = arith.constant 0 : index
      %c0_141 = arith.constant 0 : index
      %274 = vector.load %arg10[%c0_140, %c0_141] : memref<8x32xf32, #tpu.memory_space<vmem>>, vector<8x32xf32>
      tpu.vector_store %arg10[%c0_140, %c0_141], %273 {strides = array<i32>} : memref<8x32xf32, #tpu.memory_space<vmem>>, vector<8x32xf32>,
      %c0_142 = arith.constant 0 : index
      %c0_143 = arith.constant 0 : index
      %275 = vector.load %arg11[%c0_142, %c0_143] : memref<8x32xf32, #tpu.memory_space<vmem>>, vector<8x32xf32>
      tpu.vector_store %arg11[%c0_142, %c0_143], %271 {strides = array<i32>} : memref<8x32xf32, #tpu.memory_space<vmem>>, vector<8x32xf32>,
      %c0_144 = arith.constant 0 : index
      %c1_145 = arith.constant 1 : index
      %c0_146 = arith.constant 0 : index
      %c0_147 = arith.constant 0 : index
      %276 = vector.load %arg6[%c0_144, %c1_145, %c0_146, %c0_147] : memref<1x8x8x32xf32, #tpu.memory_space<vmem>>, vector<1x1x8x32xf32>
      %277 = vector.shape_cast %276 : vector<1x1x8x32xf32> to vector<8x32xf32>
      %278 = vector.shape_cast %273 : vector<8x32xf32> to vector<1x1x8x32xf32>
      tpu.vector_store %arg6[%c0_144, %c1_145, %c0_146, %c0_147], %278 {strides = array<i32>} : memref<1x8x8x32xf32, #tpu.memory_space<vmem>>, vector<1x1x8x32xf32>,
      %c0_148 = arith.constant 0 : index
      %c0_149 = arith.constant 0 : index
      %c0_150 = arith.constant 0 : index
      %279 = vector.load %arg9[%c0_148, %c0_149, %c0_150] : memref<8x8x128xf32, #tpu.memory_space<vmem>>, vector<1x8x128xf32>
      %280 = vector.shape_cast %279 : vector<1x8x128xf32> to vector<8x128xf32>
      %c0_151 = arith.constant 0 : index
      %c0_152 = arith.constant 0 : index
      %281 = vector.load %arg10[%c0_151, %c0_152] : memref<8x32xf32, #tpu.memory_space<vmem>>, vector<8x32xf32>
      %cst_153 = arith.constant dense<0.000000e+00> : vector<8x128xf32>
      %282 = tpu.matmul %281, %17, %cst_153 {dimension_numbers = #tpu.dot_dimension_numbers<[1], [0], [0], [1], [0, 0, 1, 1], [], []>} : vector<8x32xf32>, vector<32x128xf32>, vector<8x128xf32> -> vector<8x128xf32>
      %283 = arith.addf %280, %282 : vector<8x128xf32>
      %284 = vector.extract_strided_slice %283 {offsets = [0, 0], sizes = [8, 32], strides = [1, 1]} : vector<8x128xf32> to vector<8x32xf32>
      %285 = arith.negf %284 : vector<8x32xf32>
      %286 = math.exp %285 : vector<8x32xf32>
      %cst_154 = arith.constant 1.000000e+00 : f32
      %287 = vector.broadcast %cst_154 : f32 to vector<8x32xf32>
      %288 = arith.addf %287, %286 : vector<8x32xf32>
      %289 = arith.divf %287, %288 : vector<8x32xf32>
      %290 = vector.extract_strided_slice %283 {offsets = [0, 32], sizes = [8, 32], strides = [1, 1]} : vector<8x128xf32> to vector<8x32xf32>
      %291 = arith.negf %290 : vector<8x32xf32>
      %292 = math.exp %291 : vector<8x32xf32>
      %cst_155 = arith.constant 1.000000e+00 : f32
      %293 = vector.broadcast %cst_155 : f32 to vector<8x32xf32>
      %294 = arith.addf %293, %292 : vector<8x32xf32>
      %295 = arith.divf %293, %294 : vector<8x32xf32>
      %296 = vector.extract_strided_slice %283 {offsets = [0, 64], sizes = [8, 32], strides = [1, 1]} : vector<8x128xf32> to vector<8x32xf32>
      %297 = math.tanh %296 : vector<8x32xf32>
      %298 = vector.extract_strided_slice %283 {offsets = [0, 96], sizes = [8, 32], strides = [1, 1]} : vector<8x128xf32> to vector<8x32xf32>
      %299 = arith.negf %298 : vector<8x32xf32>
      %300 = math.exp %299 : vector<8x32xf32>
      %cst_156 = arith.constant 1.000000e+00 : f32
      %301 = vector.broadcast %cst_156 : f32 to vector<8x32xf32>
      %302 = arith.addf %301, %300 : vector<8x32xf32>
      %303 = arith.divf %301, %302 : vector<8x32xf32>
      %c0_157 = arith.constant 0 : index
      %c0_158 = arith.constant 0 : index
      %304 = vector.load %arg11[%c0_157, %c0_158] : memref<8x32xf32, #tpu.memory_space<vmem>>, vector<8x32xf32>
      %305 = arith.mulf %295, %304 : vector<8x32xf32>
      %306 = arith.mulf %289, %297 : vector<8x32xf32>
      %307 = arith.addf %305, %306 : vector<8x32xf32>
      %308 = math.tanh %307 : vector<8x32xf32>
      %309 = arith.mulf %303, %308 : vector<8x32xf32>
      %c0_159 = arith.constant 0 : index
      %c0_160 = arith.constant 0 : index
      %310 = vector.load %arg10[%c0_159, %c0_160] : memref<8x32xf32, #tpu.memory_space<vmem>>, vector<8x32xf32>
      tpu.vector_store %arg10[%c0_159, %c0_160], %309 {strides = array<i32>} : memref<8x32xf32, #tpu.memory_space<vmem>>, vector<8x32xf32>,
      %c0_161 = arith.constant 0 : index
      %c0_162 = arith.constant 0 : index
      %311 = vector.load %arg11[%c0_161, %c0_162] : memref<8x32xf32, #tpu.memory_space<vmem>>, vector<8x32xf32>
      tpu.vector_store %arg11[%c0_161, %c0_162], %307 {strides = array<i32>} : memref<8x32xf32, #tpu.memory_space<vmem>>, vector<8x32xf32>,
      %c0_163 = arith.constant 0 : index
      %c0_164 = arith.constant 0 : index
      %c0_165 = arith.constant 0 : index
      %c0_166 = arith.constant 0 : index
      %312 = vector.load %arg6[%c0_163, %c0_164, %c0_165, %c0_166] : memref<1x8x8x32xf32, #tpu.memory_space<vmem>>, vector<1x1x8x32xf32>
      %313 = vector.shape_cast %312 : vector<1x1x8x32xf32> to vector<8x32xf32>
      %314 = vector.shape_cast %309 : vector<8x32xf32> to vector<1x1x8x32xf32>
      tpu.vector_store %arg6[%c0_163, %c0_164, %c0_165, %c0_166], %314 {strides = array<i32>} : memref<1x8x8x32xf32, #tpu.memory_space<vmem>>, vector<1x1x8x32xf32>,
    } else {
    }
    %c0_i32_20 = arith.constant 0 : i32
    %24 = arith.cmpi eq, %arg1, %c0_i32_20 : i32
    %25 = arith.extui %24 : i1 to i32
    %c0_i32_21 = arith.constant 0 : i32
    %26 = arith.cmpi ne, %25, %c0_i32_21 : i32
    scf.if %26 {
      %c0_22 = arith.constant 0 : index
      %c0_23 = arith.constant 0 : index
      %27 = vector.load %arg10[%c0_22, %c0_23] : memref<8x32xf32, #tpu.memory_space<vmem>>, vector<8x32xf32>
      %c0_24 = arith.constant 0 : index
      %c0_25 = arith.constant 0 : index
      %c0_26 = arith.constant 0 : index
      %28 = vector.load %arg7[%c0_24, %c0_25, %c0_26] : memref<1x8x32xf32, #tpu.memory_space<vmem>>, vector<1x8x32xf32>
      %29 = vector.shape_cast %28 : vector<1x8x32xf32> to vector<8x32xf32>
      %30 = vector.shape_cast %27 : vector<8x32xf32> to vector<1x8x32xf32>
      tpu.vector_store %arg7[%c0_24, %c0_25, %c0_26], %30 {strides = array<i32>} : memref<1x8x32xf32, #tpu.memory_space<vmem>>, vector<1x8x32xf32>,
      %c0_27 = arith.constant 0 : index
      %c0_28 = arith.constant 0 : index
      %31 = vector.load %arg11[%c0_27, %c0_28] : memref<8x32xf32, #tpu.memory_space<vmem>>, vector<8x32xf32>
      %c0_29 = arith.constant 0 : index
      %c0_30 = arith.constant 0 : index
      %c0_31 = arith.constant 0 : index
      %32 = vector.load %arg8[%c0_29, %c0_30, %c0_31] : memref<1x8x32xf32, #tpu.memory_space<vmem>>, vector<1x8x32xf32>
      %33 = vector.shape_cast %32 : vector<1x8x32xf32> to vector<8x32xf32>
      %34 = vector.shape_cast %31 : vector<8x32xf32> to vector<1x8x32xf32>
      tpu.vector_store %arg8[%c0_29, %c0_30, %c0_31], %34 {strides = array<i32>} : memref<1x8x32xf32, #tpu.memory_space<vmem>>, vector<1x8x32xf32>,
    } else {
    }
    return
  }
  func.func @transform_0(%arg0: i32, %arg1: i32) -> (i32, i32, i32, i32) {
    %c2_i32 = arith.constant 2 : i32
    %0 = arith.muli %c2_i32, %arg1 : i32
    %c0_i32 = arith.constant 0 : i32
    %1 = arith.subi %c0_i32, %0 : i32
    %2 = arith.muli %arg0, %1 : i32
    %3 = arith.addi %arg1, %2 : i32
    %c0_i32_0 = arith.constant 0 : i32
    %c0_i32_1 = arith.constant 0 : i32
    %c0_i32_2 = arith.constant 0 : i32
    %c0_i32_3 = arith.constant 0 : i32
    return %c0_i32_0, %3, %c0_i32_1, %c0_i32_2 : i32, i32, i32, i32
  }
  func.func @transform_1(%arg0: i32, %arg1: i32) -> (i32, i32, i32, i32) {
    %c0_i32 = arith.constant 0 : i32
    %c0_i32_0 = arith.constant 0 : i32
    %c0_i32_1 = arith.constant 0 : i32
    %c0_i32_2 = arith.constant 0 : i32
    return %arg0, %c0_i32, %c0_i32_0, %c0_i32_1 : i32, i32, i32, i32
  }
  func.func @transform_2(%arg0: i32, %arg1: i32) -> (i32, i32, i32) {
    %c0_i32 = arith.constant 0 : i32
    %c0_i32_0 = arith.constant 0 : i32
    %c0_i32_1 = arith.constant 0 : i32
    return %arg0, %c0_i32, %c0_i32_0 : i32, i32, i32
  }
  func.func @transform_3(%arg0: i32, %arg1: i32) -> (i32, i32, i32) {
    %c0_i32 = arith.constant 0 : i32
    %c0_i32_0 = arith.constant 0 : i32
    %c0_i32_1 = arith.constant 0 : i32
    return %arg0, %c0_i32, %c0_i32_0 : i32, i32, i32
  }
  func.func @transform_4(%arg0: i32, %arg1: i32) -> (i32, i32, i32, i32) {
    %c2_i32 = arith.constant 2 : i32
    %0 = arith.muli %c2_i32, %arg1 : i32
    %c0_i32 = arith.constant 0 : i32
    %1 = arith.subi %c0_i32, %0 : i32
    %2 = arith.muli %arg0, %1 : i32
    %3 = arith.addi %arg1, %2 : i32
    %c0_i32_0 = arith.constant 0 : i32
    %c0_i32_1 = arith.constant 0 : i32
    %c0_i32_2 = arith.constant 0 : i32
    return %arg0, %3, %c0_i32_0, %c0_i32_1 : i32, i32, i32, i32
  }
  func.func @transform_5(%arg0: i32, %arg1: i32) -> (i32, i32, i32) {
    %c0_i32 = arith.constant 0 : i32
    %c0_i32_0 = arith.constant 0 : i32
    %c0_i32_1 = arith.constant 0 : i32
    return %arg0, %c0_i32, %c0_i32_0 : i32, i32, i32
  }
  func.func @transform_6(%arg0: i32, %arg1: i32) -> (i32, i32, i32) {
    %c0_i32 = arith.constant 0 : i32
    %c0_i32_0 = arith.constant 0 : i32
    %c0_i32_1 = arith.constant 0 : i32
    return %arg0, %c0_i32, %c0_i32_0 : i32, i32, i32
  }
}

</mosaic_0001>

<llo_original>
// kernel: tpu_custom_call.1
$region0: #{tpu_custom_call.1}
  #allocation0 [shape = 'u32[]', space=smem, size = 0x4, offset = 0x4, fixed_abs, tag = 'smem constant byte address 0x4 - core index']
  #allocation1 [shape = 'u32[144,128]{1,0:T(1,128)}', space=vmem, size = 0x12000, scoped, tag = 'internal scratch']
  #allocation2 [shape = 'f32[8,8,128]{2,1,0:T(8,128)}', space=vmem, size = 0x8000, scoped, tag = 'scratch operand']
  #allocation3 [shape = 'f32[8,32]{1,0:T(8,128)}', space=vmem, size = 0x1000, scoped, tag = 'scratch operand']
  #allocation4 [shape = 'f32[8,32]{1,0:T(8,128)}', space=vmem, size = 0x1000, scoped, tag = 'scratch operand']
  %s0 = inlined_call_operand.hbm [shape: f32[1,8,8,16], index: 0, kind: input, shape index: {}]
  %s1 = inlined_call_operand.hbm [shape: f32[2,1,16,128], index: 1, kind: input, shape index: {}]
  %s2 = inlined_call_operand.hbm [shape: f32[2,32,128], index: 2, kind: input, shape index: {}]
  %s3 = inlined_call_operand.vmem [shape: f32[2,1,128], index: 3, kind: input, shape index: {}]
  %s4 = inlined_call_operand.hbm [shape: f32[2,8,8,32], index: 4, kind: output, shape index: {0}]
  %s5 = inlined_call_operand.hbm [shape: f32[2,8,32], index: 5, kind: output, shape index: {1}]
  %s6 = inlined_call_operand.hbm [shape: f32[2,8,32], index: 6, kind: output, shape index: {2}]
  %7 = xla_tuple %s4, %s5, %s6
  %s8 = sld [smem:[#allocation0]]
  $region93: #{tpu_custom_call.1} parent=0
    _
  %s10 = ssub.s32 1, %s8
  %s11 = scalar_select 0, %s10, %s8
  $region1: #{tpu_custom_call.1} parent=0
    #allocation5 [shape = 'u8[65536]{0}', space=vmem, size = 0x10000, scoped, tag = 'input window, operand 0']
    #allocation6 [shape = 's32[2]{0}', space=sflag, size = 0x8, scoped, tag = 'scoped memory for tpu_custom_call.1']
    #allocation7 [shape = 's32[2]{0}', space=sflag, size = 0x8, scoped, tag = 'scoped memory for tpu_custom_call.1']
    #allocation8 [shape = 'u8[16384]{0}', space=vmem, size = 0x4000, scoped, tag = 'input window, operand 1']
    #allocation9 [shape = 's32[2]{0}', space=sflag, size = 0x8, scoped, tag = 'scoped memory for tpu_custom_call.1']
    #allocation10 [shape = 'u8[32768]{0}', space=vmem, size = 0x8000, scoped, tag = 'input window, operand 2']
    #allocation11 [shape = 'u8[65536]{0}', space=vmem, size = 0x10000, scoped, tag = 'output window, operand 0']
    #allocation12 [shape = 'u8[8192]{0}', space=vmem, size = 0x2000, scoped, tag = 'output window, operand 1']
    #allocation13 [shape = 's32[2]{0}', space=sflag, size = 0x8, scoped, tag = 'scoped memory for tpu_custom_call.1']
    #allocation14 [shape = 'u8[8192]{0}', space=vmem, size = 0x2000, scoped, tag = 'output window, operand 2']
    %12 = vsyncpa [#allocation6], 0
    %s13 = scalar_lea.sflag [#allocation6], 1
    %14 = vsyncpa %s13, 0
    %15 = vsyncpa [#allocation9], 0
    %s16 = scalar_lea.sflag [#allocation9], 1
    %17 = vsyncpa %s16, 0
    %18 = vsyncpa [#allocation7], 0
    %s19 = scalar_lea.sflag [#allocation7], 1
    %20 = vsyncpa %s19, 0
    %21 = vsyncpa [#allocation13], 0
    %s22 = scalar_lea.sflag [#allocation13], 1
    %23 = vsyncpa %s22, 0
    loop: start=0, step=1, limit=4
    $region2: #{tpu_custom_call.1} parent=1 // loop_pre_header
      _
    $region3: #{tpu_custom_call.1} parent=1 // loop_header
      %s25 = sphi 0, %s29
      %p26 = scmp.ge.s32.totalorder %s25, 4
      %s32 = sphi 0, %s44
      %s33 = sphi 0, %s40
      %s34 = sphi 0, %s32
      %s35 = sphi 0, %s33
      %s36 = sphi 0, %s34
      %s37 = sphi 0, %s35
      %s55 = sphi 0, %s57
      %s58 = sphi 0, %s55
      %s59 = sphi 0, %s58
      %s75 = sphi 0, %s59
      %s81 = sphi 0, %s83
      %s84 = sphi 0, %s81
      %s85 = sphi 0, %s84
      %s101 = sphi 0, %s85
      %s107 = sphi 0, %s109
      %s110 = sphi 0, %s107
      %s111 = sphi 0, %s110
      %s127 = sphi 0, %s111
      %s133 = sphi 0, %s135
      %s136 = sphi 0, %s133
      %s137 = sphi 0, %s136
      %s153 = sphi 0, %s137
      %s169 = sphi 0, %s171
      %s172 = sphi 0, %s169
      %s173 = sphi 0, %s172
      %s189 = sphi 0, %s173
      %s195 = sphi 0, %s197
      %s198 = sphi 0, %s195
      %s199 = sphi 0, %s198
      %s215 = sphi 0, %s199
      %s221 = sphi 0, %s223
      %s224 = sphi 0, %s221
      %s225 = sphi 0, %s224
      %s241 = sphi 0, %s225
    $region4: #{tpu_custom_call.1} parent=1 // loop_header_branch
      %28 = sbr.rel (%p26) target = $region8
    $region5: #{tpu_custom_call.1} parent=1 // loop_body
      %s30 = ssub.s32 %s25, 1
      %s31 = ssub.s32 %s25, 2
      %s38 = sadd.s32 1, %s33
      %p39 = scmp.ge.s32.totalorder %s38, 1
      %s40 = scalar_select %p39, 0, %s38
      %s41 = sadd.s32 1, %s32
      %s42 = scalar_select %p39, %s41, %s32
      %p43 = scmp.ge.s32.totalorder %s42, 2
      %s44 = scalar_select %p43, 0, %s42
      %s45 = smul.u32 %s33, 2
      %s46 = ssub.s32 0, %s45
      %s47 = smul.u32 %s32, %s46
      %s48 = sadd.s32 %s33, %s47
      %s49 = smul.u32 %s40, 2
      %s50 = ssub.s32 0, %s49
      %s51 = smul.u32 %s44, %s50
      %s52 = sadd.s32 %s40, %s51
      %s53 = ssub.s32 %s48, %s52
      %p54 = scmp.eq.s32.totalorder %s53, 0
      %s56 = sadd.s32 %s55, 1
      %s57 = scalar_select %p54, %s55, %s56
      %p60 = pneg %p54
      %p61 = scmp.eq.s32.totalorder %s25, 1
      %p62 = por %p60, %p61
      %p63 = scmp.ne.s32.totalorder %s55, %s58
      %p64 = scmp.eq.s32.totalorder %s25, 0
      %p65 = por %p63, %p64
      %p66 = scmp.ne.s32.totalorder %s55, %s58
      %p67 = scmp.eq.s32.totalorder %s30, 1
      %p68 = por %p66, %p67
      %p69 = scmp.ne.s32.totalorder %s58, %s59
      %p70 = scmp.eq.s32.totalorder %s30, 0
      %p71 = por %p69, %p70
      %p72 = scmp.ne.s32.totalorder %s58, %s59
      %p73 = scmp.eq.s32.totalorder %s31, 1
      %p74 = por %p72, %p73
      %p76 = scmp.ne.s32.totalorder %s59, %s75
      %p77 = scmp.eq.s32.totalorder %s31, 0
      %p78 = por %p76, %p77
      %s79 = ssub.s32 %s32, %s44
      %p80 = scmp.eq.s32.totalorder %s79, 0
      %s82 = sadd.s32 %s81, 1
      %s83 = scalar_select %p80, %s81, %s82
      %p86 = pneg %p80
      %p87 = scmp.eq.s32.totalorder %s25, 1
      %p88 = por %p86, %p87
      %p89 = scmp.ne.s32.totalorder %s81, %s84
      %p90 = scmp.eq.s32.totalorder %s25, 0
      %p91 = por %p89, %p90
      %p92 = scmp.ne.s32.totalorder %s81, %s84
      %p93 = scmp.eq.s32.totalorder %s30, 1
      %p94 = por %p92, %p93
      %p95 = scmp.ne.s32.totalorder %s84, %s85
      %p96 = scmp.eq.s32.totalorder %s30, 0
      %p97 = por %p95, %p96
      %p98 = scmp.ne.s32.totalorder %s84, %s85
      %p99 = scmp.eq.s32.totalorder %s31, 1
      %p100 = por %p98, %p99
      %p102 = scmp.ne.s32.totalorder %s85, %s101
      %p103 = scmp.eq.s32.totalorder %s31, 0
      %p104 = por %p102, %p103
      %s105 = ssub.s32 %s32, %s44
      %p106 = scmp.eq.s32.totalorder %s105, 0
      %s108 = sadd.s32 %s107, 1
      %s109 = scalar_select %p106, %s107, %s108
      %p112 = pneg %p106
      %p113 = scmp.eq.s32.totalorder %s25, 1
      %p114 = por %p112, %p113
      %p115 = scmp.ne.s32.totalorder %s107, %s110
      %p116 = scmp.eq.s32.totalorder %s25, 0
      %p117 = por %p115, %p116
      %p118 = scmp.ne.s32.totalorder %s107, %s110
      %p119 = scmp.eq.s32.totalorder %s30, 1
      %p120 = por %p118, %p119
      %p121 = scmp.ne.s32.totalorder %s110, %s111
      %p122 = scmp.eq.s32.totalorder %s30, 0
      %p123 = por %p121, %p122
      %p124 = scmp.ne.s32.totalorder %s110, %s111
      %p125 = scmp.eq.s32.totalorder %s31, 1
      %p126 = por %p124, %p125
      %p128 = scmp.ne.s32.totalorder %s111, %s127
      %p129 = scmp.eq.s32.totalorder %s31, 0
      %p130 = por %p128, %p129
      %s131 = ssub.s32 %s32, %s44
      %p132 = scmp.eq.s32.totalorder %s131, 0
      %s134 = sadd.s32 %s133, 1
      %s135 = scalar_select %p132, %s133, %s134
      %p138 = pneg %p132
      %p139 = scmp.eq.s32.totalorder %s25, 1
      %p140 = por %p138, %p139
      %p141 = scmp.ne.s32.totalorder %s133, %s136
      %p142 = scmp.eq.s32.totalorder %s25, 0
      %p143 = por %p141, %p142
      %p144 = scmp.ne.s32.totalorder %s133, %s136
      %p145 = scmp.eq.s32.totalorder %s30, 1
      %p146 = por %p144, %p145
      %p147 = scmp.ne.s32.totalorder %s136, %s137
      %p148 = scmp.eq.s32.totalorder %s30, 0
      %p149 = por %p147, %p148
      %p150 = scmp.ne.s32.totalorder %s136, %s137
      %p151 = scmp.eq.s32.totalorder %s31, 1
      %p152 = por %p150, %p151
      %p154 = scmp.ne.s32.totalorder %s137, %s153
      %p155 = scmp.eq.s32.totalorder %s31, 0
      %p156 = por %p154, %p155
      %s157 = smul.u32 %s33, 2
      %s158 = ssub.s32 0, %s157
      %s159 = smul.u32 %s32, %s158
      %s160 = sadd.s32 %s33, %s159
      %s161 = smul.u32 %s40, 2
      %s162 = ssub.s32 0, %s161
      %s163 = smul.u32 %s44, %s162
      %s164 = sadd.s32 %s40, %s163
      %s165 = ssub.s32 %s32, %s44
      %s166 = ssub.s32 %s160, %s164
      %s167 = sor.u32 %s165, %s166
      %p168 = scmp.eq.s32.totalorder %s167, 0
      %s170 = sadd.s32 %s169, 1
      %s171 = scalar_select %p168, %s169, %s170
      %p174 = pneg %p168
      %p175 = scmp.eq.s32.totalorder %s25, 1
      %p176 = por %p174, %p175
      %p177 = scmp.ne.s32.totalorder %s169, %s172
      %p178 = scmp.eq.s32.totalorder %s25, 0
      %p179 = por %p177, %p178
      %p180 = scmp.ne.s32.totalorder %s169, %s172
      %p181 = scmp.eq.s32.totalorder %s30, 1
      %p182 = por %p180, %p181
      %p183 = scmp.ne.s32.totalorder %s172, %s173
      %p184 = scmp.eq.s32.totalorder %s30, 0
      %p185 = por %p183, %p184
      %p186 = scmp.ne.s32.totalorder %s172, %s173
      %p187 = scmp.eq.s32.totalorder %s31, 1
      %p188 = por %p186, %p187
      %p190 = scmp.ne.s32.totalorder %s173, %s189
      %p191 = scmp.eq.s32.totalorder %s31, 0
      %p192 = por %p190, %p191
      %s193 = ssub.s32 %s32, %s44
      %p194 = scmp.eq.s32.totalorder %s193, 0
      %s196 = sadd.s32 %s195, 1
      %s197 = scalar_select %p194, %s195, %s196
      %p200 = pneg %p194
      %p201 = scmp.eq.s32.totalorder %s25, 1
      %p202 = por %p200, %p201
      %p203 = scmp.ne.s32.totalorder %s195, %s198
      %p204 = scmp.eq.s32.totalorder %s25, 0
      %p205 = por %p203, %p204
      %p206 = scmp.ne.s32.totalorder %s195, %s198
      %p207 = scmp.eq.s32.totalorder %s30, 1
      %p208 = por %p206, %p207
      %p209 = scmp.ne.s32.totalorder %s198, %s199
      %p210 = scmp.eq.s32.totalorder %s30, 0
      %p211 = por %p209, %p210
      %p212 = scmp.ne.s32.totalorder %s198, %s199
      %p213 = scmp.eq.s32.totalorder %s31, 1
      %p214 = por %p212, %p213
      %p216 = scmp.ne.s32.totalorder %s199, %s215
      %p217 = scmp.eq.s32.totalorder %s31, 0
      %p218 = por %p216, %p217
      %s219 = ssub.s32 %s32, %s44
      %p220 = scmp.eq.s32.totalorder %s219, 0
      %s222 = sadd.s32 %s221, 1
      %s223 = scalar_select %p220, %s221, %s222
      %p226 = pneg %p220
      %p227 = scmp.eq.s32.totalorder %s25, 1
      %p228 = por %p226, %p227
      %p229 = scmp.ne.s32.totalorder %s221, %s224
      %p230 = scmp.eq.s32.totalorder %s25, 0
      %p231 = por %p229, %p230
      %p232 = scmp.ne.s32.totalorder %s221, %s224
      %p233 = scmp.eq.s32.totalorder %s30, 1
      %p234 = por %p232, %p233
      %p235 = scmp.ne.s32.totalorder %s224, %s225
      %p236 = scmp.eq.s32.totalorder %s30, 0
      %p237 = por %p235, %p236
      %p238 = scmp.ne.s32.totalorder %s224, %s225
      %p239 = scmp.eq.s32.totalorder %s31, 1
      %p240 = por %p238, %p239
      %p242 = scmp.ne.s32.totalorder %s225, %s241
      %p243 = scmp.eq.s32.totalorder %s31, 0
      %p244 = por %p242, %p243
      %p245 = scmp.le.s32.totalorder 1, %s25
      %p246 = scmp.lt.s32.totalorder %s25, 3
      %p247 = pnand %p245, %p246
      %p248 = pneg %p247
      // Predicated region
      $region9: #{tpu_custom_call.1} parent=5 // pred_check
        _
      $region10: #{tpu_custom_call.1} parent=5 // pred_check_branch
        %250 = sbr.rel (%p247) target = $region12
      $region11: #{tpu_custom_call.1} parent=5 // pred_region
        %s251 = ssub.s32 %s25, 1
      $region12: #{tpu_custom_call.1} parent=5 // pred_fallthru
        _
      %p252 = scmp.lt.s32.totalorder %s25, 2
      // Predicated region
      $region13: #{tpu_custom_call.1} parent=5 // pred_check
        %p253 = pneg %p252
      $region14: #{tpu_custom_call.1} parent=5 // pred_check_branch
        %255 = sbr.rel (%p253) target = $region16
      $region15: #{tpu_custom_call.1} parent=5 // pred_region
        // Predicated region
        $region17: #{tpu_custom_call.1} parent=15 // pred_check
          %p256 = pneg %p65
        $region18: #{tpu_custom_call.1} parent=15 // pred_check_branch
          %258 = sbr.rel (%p256) target = $region20
        $region19: #{tpu_custom_call.1} parent=15 // pred_region
          %s259 = sand.u32 %s55, 1
          %s260 = scalar_lea.sflag [#allocation6], %s259
          %s261 = sand.u32 %s55, 1
          %s262 = smul.addr %s261, 64
          %s263 = scalar_lea.vmem [#allocation5], %s262
          %s264 = smul.u32 %s33, 2
          %s265 = ssub.s32 0, %s264
          %s266 = smul.u32 %s32, %s265
          %s267 = sadd.s32 %s33, %s266
          %s268 = smul.u32 8, %s267
          %s270 = ssub.s32 1024, 1024
          %271 = vsyncadd %s260, %s270
          %s272 = smul.addr %s268, 128
          %s273 = scalar_lea.hbm %s0, %s272
          %s274 = sshll.u32 %s263, 4
          %s275 = int_to_ptr.vmem [resolvable:$true] %s274
          %280 = dma.hbm_to_vmem [thread:$0]  %s273, 1024, %s275, %s260, 128, 128, 8
        $region20: #{tpu_custom_call.1} parent=15 // pred_fallthru
          _
        // Predicated region
        $region21: #{tpu_custom_call.1} parent=15 // pred_check
          %p281 = pneg %p91
        $region22: #{tpu_custom_call.1} parent=15 // pred_check_branch
          %283 = sbr.rel (%p281) target = $region24
        $region23: #{tpu_custom_call.1} parent=15 // pred_region
          %s284 = sand.u32 %s25, 1
          %s285 = scalar_lea.sflag [#allocation9], %s284
          %s286 = sand.u32 %s81, 1
          %s287 = smul.addr %s286, 16
          %s288 = scalar_lea.vmem [#allocation8], %s287
          %s290 = ssub.s32 256, 256
          %291 = vsyncadd %s285, %s290
          %s292 = smul.addr %s32, 2
          %s293 = smul.addr %s292, 128
          %s294 = scalar_lea.hbm %s1, %s293
          %s295 = sshll.u32 %s288, 4
          %s296 = int_to_ptr.vmem [resolvable:$true] %s295
          %301 = dma.hbm_to_vmem [thread:$0]  %s294, 256, %s296, %s285, 128, 128, 8
        $region24: #{tpu_custom_call.1} parent=15 // pred_fallthru
          _
        // Predicated region
        $region25: #{tpu_custom_call.1} parent=15 // pred_check
          %p302 = pneg %p117
        $region26: #{tpu_custom_call.1} parent=15 // pred_check_branch
          %304 = sbr.rel (%p302) target = $region28
        $region27: #{tpu_custom_call.1} parent=15 // pred_region
          %s305 = sand.u32 %s25, 1
          %s306 = scalar_lea.sflag [#allocation9], %s305
          %s307 = sand.u32 %s107, 1
          %s308 = smul.addr %s307, 32
          %s309 = scalar_lea.vmem [#allocation10], %s308
          %s311 = ssub.s32 512, 512
          %312 = vsyncadd %s306, %s311
          %s313 = smul.addr %s32, 4
          %s314 = smul.addr %s313, 128
          %s315 = scalar_lea.hbm %s2, %s314
          %s316 = sshll.u32 %s309, 4
          %s317 = int_to_ptr.vmem [resolvable:$true] %s316
          %322 = dma.hbm_to_vmem [thread:$0]  %s315, 512, %s317, %s306, 128, 128, 8
        $region28: #{tpu_custom_call.1} parent=15 // pred_fallthru
          _
        // Predicated region
        $region29: #{tpu_custom_call.1} parent=15 // pred_check
          %p323 = pneg %p143
        $region30: #{tpu_custom_call.1} parent=15 // pred_check_branch
          %325 = sbr.rel (%p323) target = $region32
        $region31: #{tpu_custom_call.1} parent=15 // pred_region
          %p326 = scmp.lt.s32.totalorder %s32, 1
          %s327 = scalar_select %p326, %s32, 1
          %s328 = scalar_lea.vmem %s3, %s327
        $region32: #{tpu_custom_call.1} parent=15 // pred_fallthru
          _
      $region16: #{tpu_custom_call.1} parent=5 // pred_fallthru
        _
      %p329 = scmp.le.s32.totalorder 1, %s25
      %p330 = scmp.lt.s32.totalorder %s25, 3
      %p331 = pnand %p329, %p330
      %p332 = pneg %p331
      // Predicated region
      $region33: #{tpu_custom_call.1} parent=5 // pred_check
        _
      $region34: #{tpu_custom_call.1} parent=5 // pred_check_branch
        %334 = sbr.rel (%p331) target = $region36
      $region35: #{tpu_custom_call.1} parent=5 // pred_region
        %s335 = ssub.s32 %s25, 1
        %s336 = sand.u32 %s58, 1
        %s337 = scalar_lea.sflag [#allocation6], %s336
        %s338 = sand.u32 %s58, 1
        %s339 = smul.addr %s338, 64
        %s340 = scalar_lea.vmem [#allocation5], %s339
        // Predicated region
        $region37: #{tpu_custom_call.1} parent=35 // pred_check
          %p341 = pneg %p71
        $region38: #{tpu_custom_call.1} parent=35 // pred_check_branch
          %343 = sbr.rel (%p341) target = $region40
        $region39: #{tpu_custom_call.1} parent=35 // pred_region
          %344 = dma.done %s337, 1024
        $region40: #{tpu_custom_call.1} parent=35 // pred_fallthru
          _
        %s345 = sand.u32 %s30, 1
        %s346 = scalar_lea.sflag [#allocation9], %s345
        %s347 = sand.u32 %s84, 1
        %s348 = smul.addr %s347, 16
        %s349 = scalar_lea.vmem [#allocation8], %s348
        // Predicated region
        $region41: #{tpu_custom_call.1} parent=35 // pred_check
          %p350 = pneg %p97
        $region42: #{tpu_custom_call.1} parent=35 // pred_check_branch
          %352 = sbr.rel (%p350) target = $region44
        $region43: #{tpu_custom_call.1} parent=35 // pred_region
          %353 = dma.done %s346, 256
        $region44: #{tpu_custom_call.1} parent=35 // pred_fallthru
          _
        %s354 = sand.u32 %s30, 1
        %s355 = scalar_lea.sflag [#allocation9], %s354
        %s356 = sand.u32 %s110, 1
        %s357 = smul.addr %s356, 32
        %s358 = scalar_lea.vmem [#allocation10], %s357
        // Predicated region
        $region45: #{tpu_custom_call.1} parent=35 // pred_check
          %p359 = pneg %p123
        $region46: #{tpu_custom_call.1} parent=35 // pred_check_branch
          %361 = sbr.rel (%p359) target = $region48
        $region47: #{tpu_custom_call.1} parent=35 // pred_region
          %362 = dma.done %s355, 512
        $region48: #{tpu_custom_call.1} parent=35 // pred_fallthru
          _
        %s363 = sand.u32 %s58, 1
        %s364 = scalar_lea.sflag [#allocation6], %s363
        %s365 = sand.u32 %s58, 1
        %s366 = smul.addr %s365, 64
        %s367 = scalar_lea.vmem [#allocation5], %s366
        %p368 = pneg %p71
        %p369 = pneg %p68
        %s370 = sand.u32 %s30, 1
        %s371 = scalar_lea.sflag [#allocation9], %s370
        %s372 = sand.u32 %s84, 1
        %s373 = smul.addr %s372, 16
        %s374 = scalar_lea.vmem [#allocation8], %s373
        %p375 = pneg %p97
        %p376 = pneg %p94
        %s377 = sand.u32 %s30, 1
        %s378 = scalar_lea.sflag [#allocation9], %s377
        %s379 = sand.u32 %s110, 1
        %s380 = smul.addr %s379, 32
        %s381 = scalar_lea.vmem [#allocation10], %s380
        %p382 = pneg %p123
        %p383 = pneg %p120
        %p384 = scmp.lt.s32.totalorder %s34, 1
        %s385 = scalar_select %p384, %s34, 1
        %s386 = scalar_lea.vmem %s3, %s385
        %p387 = pneg %p149
        %p388 = pneg %p146
        %p389 = pneg %p185
        %p390 = pneg %p182
        %s391 = sand.u32 %s172, 1
        %s392 = scalar_lea.sflag [#allocation7], %s391
        %s393 = sand.u32 %s172, 1
        %s394 = smul.addr %s393, 64
        %s395 = scalar_lea.vmem [#allocation11], %s394
        %p396 = pneg %p211
        %p397 = pneg %p208
        %s398 = sand.u32 %s30, 1
        %s399 = scalar_lea.sflag [#allocation13], %s398
        %s400 = sand.u32 %s198, 1
        %s401 = smul.addr %s400, 8
        %s402 = scalar_lea.vmem [#allocation12], %s401
        %p403 = pneg %p237
        %p404 = pneg %p234
        %s405 = sand.u32 %s30, 1
        %s406 = scalar_lea.sflag [#allocation13], %s405
        %s407 = sand.u32 %s224, 1
        %s408 = smul.addr %s407, 8
        %s409 = scalar_lea.vmem [#allocation14], %s408
        %s410 = smul.u32 %s35, 2
        %s411 = ssub.s32 0, %s410
        %s412 = smul.u32 %s34, %s411
        %s413 = sadd.s32 %s35, %s412
        %s414 = smul.u32 8, %s413
        %p415 = scmp.lt.s32.totalorder %s34, 1
        %s416 = scalar_select %p415, %s34, 1
        %s417 = scalar_lea.vmem %s3, %s416
        %s418 = smul.u32 %s35, 2
        %s419 = ssub.s32 0, %s418
        %s420 = smul.u32 %s34, %s419
        %s421 = sadd.s32 %s35, %s420
        %s422 = smul.u32 8, %s421
        %p423 = scmp.eq.s32.totalorder %s35, 0
        // Predicated region
        $region49: #{tpu_custom_call.1} parent=35 // pred_check
          %p424 = pneg %p423
        $region50: #{tpu_custom_call.1} parent=35 // pred_check_branch
          %426 = sbr.rel (%p424) target = $region52
        $region51: #{tpu_custom_call.1} parent=35 // pred_region
          %vm427 = vcmask 261120
          %428 = vst.msk [vmem:[#allocation3] sm:$0xff] %vm427, 0.0
          %429 = vst.msk [vmem:[#allocation4] sm:$0xff] %vm427, 0.0
        $region52: #{tpu_custom_call.1} parent=35 // pred_fallthru
          _
        %v430 = vld [vmem:[%s340] sm:$0xff]
        %v431 = vld [vmem:[%s340 + $0x8] sm:$0xff]
        %v432 = vld [vmem:[%s340 + $0x10] sm:$0xff]
        %v433 = vld [vmem:[%s340 + $0x18] sm:$0xff]
        %v434 = vld [vmem:[%s340 + $0x20] sm:$0xff]
        %v435 = vld [vmem:[%s340 + $0x28] sm:$0xff]
        %v436 = vld [vmem:[%s340 + $0x30] sm:$0xff]
        %v437 = vld [vmem:[%s340 + $0x38] sm:$0xff]
        %v438 = vld [vmem:[%s349] sm:$0xff]
        %v439 = vld [vmem:[%s349 + $0x8] sm:$0xff]
        %vm440 = vcmask 130048
        %v442 = vsel %vm440, %v430, 0
        %v445 = vsel %vm440, %v431, 0
        %v448 = vsel %vm440, %v432, 0
        %v451 = vsel %vm440, %v433, 0
        %v454 = vsel %vm440, %v434, 0
        %v457 = vsel %vm440, %v435, 0
        %v460 = vsel %vm440, %v436, 0
        %v463 = vsel %vm440, %v437, 0
        %465 = vmatprep.subr.mxu0 0.0
        %466 = vmatpush1.msra.mxu0 %v438
        %467 = vmatprep.subr.mxu0 0.0
        %468 = vmatpush1.msra.mxu0 %v439
        %469 = vmatprep.subr.mxu0 0.0
        %470 = vmatpush1.msra.mxu0 0.0
        %471 = vmatprep.subr.mxu0 0.0
        %472 = vmatpush1.msra.mxu0 0.0
        %473 = vmatprep.subr.mxu0 0.0
        %474 = vmatpush1.msra.mxu0 0.0
        %475 = vmatprep.subr.mxu0 0.0
        %476 = vmatpush1.msra.mxu0 0.0
        %477 = vmatprep.subr.mxu0 0.0
        %478 = vmatpush1.msra.mxu0 0.0
        %479 = vmatprep.subr.mxu0 0.0
        %480 = vmatpush1.msra.mxu0 0.0
        %481 = vmatprep.subr.mxu0 0.0
        %482 = vmatpush1.msra.mxu0 0.0
        %483 = vmatprep.subr.mxu0 0.0
        %484 = vmatpush1.msra.mxu0 0.0
        %485 = vmatprep.subr.mxu0 0.0
        %486 = vmatpush1.msra.mxu0 0.0
        %487 = vmatprep.subr.mxu0 0.0
        %488 = vmatpush1.msra.mxu0 0.0
        %489 = vmatprep.subr.mxu0 0.0
        %490 = vmatpush1.msra.mxu0 0.0
        %491 = vmatprep.subr.mxu0 0.0
        %492 = vmatpush1.msra.mxu0 0.0
        %493 = vmatprep.subr.mxu0 0.0
        %494 = vmatpush1.msra.mxu0 0.0
        %495 = vmatprep.subr.mxu0 0.0
        %496 = vmatpush1.msra.mxu0 0.0
        %497 = vmatprep.subr.mxu0 0.0
        %498 = vmatpush1.msra.mxu0 0.0
        %499 = vmatprep.subr.mxu0 0.0
        %500 = vmatpush1.msra.mxu0 0.0
        %501 = vmatprep.subr.mxu0 0.0
        %502 = vmatpush1.msra.mxu0 0.0
        %503 = vmatprep.subr.mxu0 0.0
        %504 = vmatpush1.msra.mxu0 0.0
        %505 = vmatprep.subr.mxu0 0.0
        %506 = vmatpush1.msra.mxu0 0.0
        %507 = vmatprep.subr.mxu0 0.0
        %508 = vmatpush1.msra.mxu0 0.0
        %509 = vmatprep.subr.mxu0 0.0
        %510 = vmatpush1.msra.mxu0 0.0
        %511 = vmatprep.subr.mxu0 0.0
        %512 = vmatpush1.msra.mxu0 0.0
        %513 = vmatprep.subr.mxu0 0.0
        %514 = vmatpush1.msra.mxu0 0.0
        %515 = vmatprep.subr.mxu0 0.0
        %516 = vmatpush1.msra.mxu0 0.0
        %517 = vmatprep.subr.mxu0 0.0
        %518 = vmatpush1.msra.mxu0 0.0
        %519 = vmatprep.subr.mxu0 0.0
        %520 = vmatpush1.msra.mxu0 0.0
        %521 = vmatprep.subr.mxu0 0.0
        %522 = vmatpush1.msra.mxu0 0.0
        %523 = vmatprep.subr.mxu0 0.0
        %524 = vmatpush1.msra.mxu0 0.0
        %525 = vmatprep.subr.mxu0 0.0
        %526 = vmatpush1.msra.mxu0 0.0
        %527 = vmatprep.subr.mxu0 0.0
        %528 = vmatpush1.msra.mxu0 0.0
        %529 = vmatprep.mubr.f32.mxu0 0.0
        %530 = vmatmul.mubr.f32.gmra.mrb[0].mxu0 %v442
        %v531 = vpop.f32.mrb[0].mxu0
        %v532 = vadd.f32 0.0, %v531
        %v533 = vpop.f32.mrb[0].mxu0
        %534 = vmatprep.mubr.f32.mxu0 0.0
        %535 = vmatmul.mubr.f32.gmra.mrb[0].mxu0 %v445
        %v536 = vpop.f32.mrb[0].mxu0
        %v537 = vadd.f32 0.0, %v536
        %v538 = vpop.f32.mrb[0].mxu0
        %539 = vmatprep.mubr.f32.mxu0 0.0
        %540 = vmatmul.mubr.f32.gmra.mrb[0].mxu0 %v448
        %v541 = vpop.f32.mrb[0].mxu0
        %v542 = vadd.f32 0.0, %v541
        %v543 = vpop.f32.mrb[0].mxu0
        %544 = vmatprep.mubr.f32.mxu0 0.0
        %545 = vmatmul.mubr.f32.gmra.mrb[0].mxu0 %v451
        %v546 = vpop.f32.mrb[0].mxu0
        %v547 = vadd.f32 0.0, %v546
        %v548 = vpop.f32.mrb[0].mxu0
        %549 = vmatprep.mubr.f32.mxu0 0.0
        %550 = vmatmul.mubr.f32.gmra.mrb[0].mxu0 %v454
        %v551 = vpop.f32.mrb[0].mxu0
        %v552 = vadd.f32 0.0, %v551
        %v553 = vpop.f32.mrb[0].mxu0
        %554 = vmatprep.mubr.f32.mxu0 0.0
        %555 = vmatmul.mubr.f32.gmra.mrb[0].mxu0 %v457
        %v556 = vpop.f32.mrb[0].mxu0
        %v557 = vadd.f32 0.0, %v556
        %v558 = vpop.f32.mrb[0].mxu0
        %559 = vmatprep.mubr.f32.mxu0 0.0
        %560 = vmatmul.mubr.f32.gmra.mrb[0].mxu0 %v460
        %v561 = vpop.f32.mrb[0].mxu0
        %v562 = vadd.f32 0.0, %v561
        %v563 = vpop.f32.mrb[0].mxu0
        %564 = vmatprep.mubr.f32.mxu0 0.0
        %565 = vmatmul.mubr.f32.gmra.mrb[0].mxu0 %v463
        %v566 = vpop.f32.mrb[0].mxu0
        %v567 = vadd.f32 0.0, %v566
        %v568 = vpop.f32.mrb[0].mxu0
        %569 = vdwg.mxu0
        %v570 = vld [vmem:[%s417] sm:$0x1]
        %v572 = vlaneseq
        %v573 = vshrl.u32 %v572, 7
        %v574 = vsub.s32 0, %v573
        %v575 = vrot.slane %v570, %v574
        %v577 = vadd.f32 %v532, %v575
        %v578 = vadd.f32 %v537, %v575
        %v579 = vadd.f32 %v542, %v575
        %v580 = vadd.f32 %v547, %v575
        %v581 = vadd.f32 %v552, %v575
        %v582 = vadd.f32 %v557, %v575
        %v583 = vadd.f32 %v562, %v575
        %v584 = vadd.f32 %v567, %v575
        %585 = vst [vmem:[#allocation2] sm:$0xff] %v577
        %586 = vst [vmem:[#allocation2 + $0x8] sm:$0xff] %v578
        %587 = vst [vmem:[#allocation2 + $0x10] sm:$0xff] %v579
        %588 = vst [vmem:[#allocation2 + $0x18] sm:$0xff] %v580
        %589 = vst [vmem:[#allocation2 + $0x20] sm:$0xff] %v581
        %590 = vst [vmem:[#allocation2 + $0x28] sm:$0xff] %v582
        %591 = vst [vmem:[#allocation2 + $0x30] sm:$0xff] %v583
        %592 = vst [vmem:[#allocation2 + $0x38] sm:$0xff] %v584
        %v593 = vld [vmem:[%s358] sm:$0xff]
        %v594 = vld [vmem:[%s358 + $0x8] sm:$0xff]
        %v595 = vld [vmem:[%s358 + $0x10] sm:$0xff]
        %v596 = vld [vmem:[%s358 + $0x18] sm:$0xff]
        %p597 = scmp.eq.s32.totalorder %s34, 0
        // Predicated region
        $region53: #{tpu_custom_call.1} parent=35 // pred_check
          %p598 = pneg %p597
        $region54: #{tpu_custom_call.1} parent=35 // pred_check_branch
          %600 = sbr.rel (%p598) target = $region56
        $region55: #{tpu_custom_call.1} parent=35 // pred_region
          %v601 = vld [vmem:[#allocation2] sm:$0xff]
          %v602 = vld [vmem:[#allocation3] sm:$0xff]
          %vm603 = vcmask 261120
          %v605 = vsel %vm603, %v602, 0
          %607 = vmatprep.subr.mxu0 0.0
          %608 = vmatpush1.msra.mxu0 %v593
          %609 = vmatprep.subr.mxu0 0.0
          %610 = vmatpush1.msra.mxu0 %v594
          %611 = vmatprep.subr.mxu0 0.0
          %612 = vmatpush1.msra.mxu0 %v595
          %613 = vmatprep.subr.mxu0 0.0
          %614 = vmatpush1.msra.mxu0 %v596
          %615 = vmatprep.subr.mxu0 0.0
          %616 = vmatpush1.msra.mxu0 0.0
          %617 = vmatprep.subr.mxu0 0.0
          %618 = vmatpush1.msra.mxu0 0.0
          %619 = vmatprep.subr.mxu0 0.0
          %620 = vmatpush1.msra.mxu0 0.0
          %621 = vmatprep.subr.mxu0 0.0
          %622 = vmatpush1.msra.mxu0 0.0
          %623 = vmatprep.subr.mxu0 0.0
          %624 = vmatpush1.msra.mxu0 0.0
          %625 = vmatprep.subr.mxu0 0.0
          %626 = vmatpush1.msra.mxu0 0.0
          %627 = vmatprep.subr.mxu0 0.0
          %628 = vmatpush1.msra.mxu0 0.0
          %629 = vmatprep.subr.mxu0 0.0
          %630 = vmatpush1.msra.mxu0 0.0
          %631 = vmatprep.subr.mxu0 0.0
          %632 = vmatpush1.msra.mxu0 0.0
          %633 = vmatprep.subr.mxu0 0.0
          %634 = vmatpush1.msra.mxu0 0.0
          %635 = vmatprep.subr.mxu0 0.0
          %636 = vmatpush1.msra.mxu0 0.0
          %637 = vmatprep.subr.mxu0 0.0
          %638 = vmatpush1.msra.mxu0 0.0
          %639 = vmatprep.subr.mxu0 0.0
          %640 = vmatpush1.msra.mxu0 0.0
          %641 = vmatprep.subr.mxu0 0.0
          %642 = vmatpush1.msra.mxu0 0.0
          %643 = vmatprep.subr.mxu0 0.0
          %644 = vmatpush1.msra.mxu0 0.0
          %645 = vmatprep.subr.mxu0 0.0
          %646 = vmatpush1.msra.mxu0 0.0
          %647 = vmatprep.subr.mxu0 0.0
          %648 = vmatpush1.msra.mxu0 0.0
          %649 = vmatprep.subr.mxu0 0.0
          %650 = vmatpush1.msra.mxu0 0.0
          %651 = vmatprep.subr.mxu0 0.0
          %652 = vmatpush1.msra.mxu0 0.0
          %653 = vmatprep.subr.mxu0 0.0
          %654 = vmatpush1.msra.mxu0 0.0
          %655 = vmatprep.subr.mxu0 0.0
          %656 = vmatpush1.msra.mxu0 0.0
          %657 = vmatprep.subr.mxu0 0.0
          %658 = vmatpush1.msra.mxu0 0.0
          %659 = vmatprep.subr.mxu0 0.0
          %660 = vmatpush1.msra.mxu0 0.0
          %661 = vmatprep.subr.mxu0 0.0
          %662 = vmatpush1.msra.mxu0 0.0
          %663 = vmatprep.subr.mxu0 0.0
          %664 = vmatpush1.msra.mxu0 0.0
          %665 = vmatprep.subr.mxu0 0.0
          %666 = vmatpush1.msra.mxu0 0.0
          %667 = vmatprep.subr.mxu0 0.0
          %668 = vmatpush1.msra.mxu0 0.0
          %669 = vmatprep.subr.mxu0 0.0
          %670 = vmatpush1.msra.mxu0 0.0
          %671 = vmatprep.mubr.f32.mxu0 0.0
          %672 = vmatmul.mubr.f32.gmra.mrb[0].mxu0 %v605
          %v673 = vpop.f32.mrb[0].mxu0
          %v674 = vadd.f32 0.0, %v673
          %v675 = vpop.f32.mrb[0].mxu0
          %676 = vdwg.mxu0
          %v677 = vadd.f32 %v601, %v674
          %v678 = vxor.u32 %v677, 2147483648
          %v679 = vmul.f32 %v678, 1.442695
          %v680 = vpow.pop %v679
          %v681 = vadd.f32 %v680, 1.0
          %v682 = vrcp.pop %v681
          %v683 = vmul.f32 1.0, %v682
          %v684 = vtanh.pop %v677
          %v685 = vld [vmem:[#allocation4] sm:$0xff]
          %687 = vrot.lane.b32.xlu0 %v685, 32
          %v688 = vpop.permute.xlu0 %687
          %v690 = vmul.f32 %v683, %v688
          %692 = vrot.lane.b32.xlu0 %v684, 64
          %v693 = vpop.permute.xlu0 %692
          %v695 = vmul.f32 %v683, %v693
          %697 = vrot.lane.b32.xlu0 %v695, 32
          %v698 = vpop.permute.xlu0 %697
          %v700 = vadd.f32 %v690, %v698
          %v701 = vtanh.pop %v700
          %703 = vrot.lane.b32.xlu0 %v701, 64
          %v704 = vpop.permute.xlu0 %703
          %v706 = vmul.f32 %v683, %v704
          %708 = vrot.lane.b32.xlu0 %v706, 32
          %v709 = vpop.permute.xlu0 %708
          %711 = vst.msk [vmem:[#allocation3] sm:$0xff] %vm603, %v709
          %713 = vrot.lane.b32.xlu0 %v700, 96
          %v714 = vpop.permute.xlu0 %713
          %716 = vst.msk [vmem:[#allocation4] sm:$0xff] %vm603, %v714
          %717 = vst.msk [vmem:[%s395] sm:$0xff] %vm603, %v709
          %s718 = scalar_lea.vmem [#allocation2], 8
          %v719 = vld [vmem:[%s718] sm:$0xff]
          %v720 = vld [vmem:[#allocation3] sm:$0xff]
          %v722 = vsel %vm603, %v720, 0
          %724 = vmatprep.subr.mxu0 0.0
          %725 = vmatpush1.msra.mxu0 %v593
          %726 = vmatprep.subr.mxu0 0.0
          %727 = vmatpush1.msra.mxu0 %v594
          %728 = vmatprep.subr.mxu0 0.0
          %729 = vmatpush1.msra.mxu0 %v595
          %730 = vmatprep.subr.mxu0 0.0
          %731 = vmatpush1.msra.mxu0 %v596
          %732 = vmatprep.subr.mxu0 0.0
          %733 = vmatpush1.msra.mxu0 0.0
          %734 = vmatprep.subr.mxu0 0.0
          %735 = vmatpush1.msra.mxu0 0.0
          %736 = vmatprep.subr.mxu0 0.0
          %737 = vmatpush1.msra.mxu0 0.0
          %738 = vmatprep.subr.mxu0 0.0
          %739 = vmatpush1.msra.mxu0 0.0
          %740 = vmatprep.subr.mxu0 0.0
          %741 = vmatpush1.msra.mxu0 0.0
          %742 = vmatprep.subr.mxu0 0.0
          %743 = vmatpush1.msra.mxu0 0.0
          %744 = vmatprep.subr.mxu0 0.0
          %745 = vmatpush1.msra.mxu0 0.0
          %746 = vmatprep.subr.mxu0 0.0
          %747 = vmatpush1.msra.mxu0 0.0
          %748 = vmatprep.subr.mxu0 0.0
          %749 = vmatpush1.msra.mxu0 0.0
          %750 = vmatprep.subr.mxu0 0.0
          %751 = vmatpush1.msra.mxu0 0.0
          %752 = vmatprep.subr.mxu0 0.0
          %753 = vmatpush1.msra.mxu0 0.0
          %754 = vmatprep.subr.mxu0 0.0
          %755 = vmatpush1.msra.mxu0 0.0
          %756 = vmatprep.subr.mxu0 0.0
          %757 = vmatpush1.msra.mxu0 0.0
          %758 = vmatprep.subr.mxu0 0.0
          %759 = vmatpush1.msra.mxu0 0.0
          %760 = vmatprep.subr.mxu0 0.0
          %761 = vmatpush1.msra.mxu0 0.0
          %762 = vmatprep.subr.mxu0 0.0
          %763 = vmatpush1.msra.mxu0 0.0
          %764 = vmatprep.subr.mxu0 0.0
          %765 = vmatpush1.msra.mxu0 0.0
          %766 = vmatprep.subr.mxu0 0.0
          %767 = vmatpush1.msra.mxu0 0.0
          %768 = vmatprep.subr.mxu0 0.0
          %769 = vmatpush1.msra.mxu0 0.0
          %770 = vmatprep.subr.mxu0 0.0
          %771 = vmatpush1.msra.mxu0 0.0
          %772 = vmatprep.subr.mxu0 0.0
          %773 = vmatpush1.msra.mxu0 0.0
          %774 = vmatprep.subr.mxu0 0.0
          %775 = vmatpush1.msra.mxu0 0.0
          %776 = vmatprep.subr.mxu0 0.0
          %777 = vmatpush1.msra.mxu0 0.0
          %778 = vmatprep.subr.mxu0 0.0
          %779 = vmatpush1.msra.mxu0 0.0
          %780 = vmatprep.subr.mxu0 0.0
          %781 = vmatpush1.msra.mxu0 0.0
          %782 = vmatprep.subr.mxu0 0.0
          %783 = vmatpush1.msra.mxu0 0.0
          %784 = vmatprep.subr.mxu0 0.0
          %785 = vmatpush1.msra.mxu0 0.0
          %786 = vmatprep.subr.mxu0 0.0
          %787 = vmatpush1.msra.mxu0 0.0
          %788 = vmatprep.mubr.f32.mxu0 0.0
          %789 = vmatmul.mubr.f32.gmra.mrb[0].mxu0 %v722
          %v790 = vpop.f32.mrb[0].mxu0
          %v791 = vadd.f32 0.0, %v790
          %v792 = vpop.f32.mrb[0].mxu0
          %793 = vdwg.mxu0
          %v794 = vadd.f32 %v719, %v791
          %v795 = vxor.u32 %v794, 2147483648
          %v796 = vmul.f32 %v795, 1.442695
          %v797 = vpow.pop %v796
          %v798 = vadd.f32 %v797, 1.0
          %v799 = vrcp.pop %v798
          %v800 = vmul.f32 1.0, %v799
          %v801 = vtanh.pop %v794
          %v802 = vld [vmem:[#allocation4] sm:$0xff]
          %804 = vrot.lane.b32.xlu0 %v802, 32
          %v805 = vpop.permute.xlu0 %804
          %v807 = vmul.f32 %v800, %v805
          %809 = vrot.lane.b32.xlu0 %v801, 64
          %v810 = vpop.permute.xlu0 %809
          %v812 = vmul.f32 %v800, %v810
          %814 = vrot.lane.b32.xlu0 %v812, 32
          %v815 = vpop.permute.xlu0 %814
          %v817 = vadd.f32 %v807, %v815
          %v818 = vtanh.pop %v817
          %820 = vrot.lane.b32.xlu0 %v818, 64
          %v821 = vpop.permute.xlu0 %820
          %v823 = vmul.f32 %v800, %v821
          %825 = vrot.lane.b32.xlu0 %v823, 32
          %v826 = vpop.permute.xlu0 %825
          %828 = vst.msk [vmem:[#allocation3] sm:$0xff] %vm603, %v826
          %830 = vrot.lane.b32.xlu0 %v817, 96
          %v831 = vpop.permute.xlu0 %830
          %833 = vst.msk [vmem:[#allocation4] sm:$0xff] %vm603, %v831
          %s834 = scalar_lea.vmem %s395, 8 [#allocation11]
          %835 = vst.msk [vmem:[%s834] sm:$0xff] %vm603, %v826
          %s836 = scalar_lea.vmem [#allocation2], 16
          %v837 = vld [vmem:[%s836] sm:$0xff]
          %v838 = vld [vmem:[#allocation3] sm:$0xff]
          %v840 = vsel %vm603, %v838, 0
          %842 = vmatprep.subr.mxu0 0.0
          %843 = vmatpush1.msra.mxu0 %v593
          %844 = vmatprep.subr.mxu0 0.0
          %845 = vmatpush1.msra.mxu0 %v594
          %846 = vmatprep.subr.mxu0 0.0
          %847 = vmatpush1.msra.mxu0 %v595
          %848 = vmatprep.subr.mxu0 0.0
          %849 = vmatpush1.msra.mxu0 %v596
          %850 = vmatprep.subr.mxu0 0.0
          %851 = vmatpush1.msra.mxu0 0.0
          %852 = vmatprep.subr.mxu0 0.0
          %853 = vmatpush1.msra.mxu0 0.0
          %854 = vmatprep.subr.mxu0 0.0
          %855 = vmatpush1.msra.mxu0 0.0
          %856 = vmatprep.subr.mxu0 0.0
          %857 = vmatpush1.msra.mxu0 0.0
          %858 = vmatprep.subr.mxu0 0.0
          %859 = vmatpush1.msra.mxu0 0.0
          %860 = vmatprep.subr.mxu0 0.0
          %861 = vmatpush1.msra.mxu0 0.0
          %862 = vmatprep.subr.mxu0 0.0
          %863 = vmatpush1.msra.mxu0 0.0
          %864 = vmatprep.subr.mxu0 0.0
          %865 = vmatpush1.msra.mxu0 0.0
          %866 = vmatprep.subr.mxu0 0.0
          %867 = vmatpush1.msra.mxu0 0.0
          %868 = vmatprep.subr.mxu0 0.0
          %869 = vmatpush1.msra.mxu0 0.0
          %870 = vmatprep.subr.mxu0 0.0
          %871 = vmatpush1.msra.mxu0 0.0
          %872 = vmatprep.subr.mxu0 0.0
          %873 = vmatpush1.msra.mxu0 0.0
          %874 = vmatprep.subr.mxu0 0.0
          %875 = vmatpush1.msra.mxu0 0.0
          %876 = vmatprep.subr.mxu0 0.0
          %877 = vmatpush1.msra.mxu0 0.0
          %878 = vmatprep.subr.mxu0 0.0
          %879 = vmatpush1.msra.mxu0 0.0
          %880 = vmatprep.subr.mxu0 0.0
          %881 = vmatpush1.msra.mxu0 0.0
          %882 = vmatprep.subr.mxu0 0.0
          %883 = vmatpush1.msra.mxu0 0.0
          %884 = vmatprep.subr.mxu0 0.0
          %885 = vmatpush1.msra.mxu0 0.0
          %886 = vmatprep.subr.mxu0 0.0
          %887 = vmatpush1.msra.mxu0 0.0
          %888 = vmatprep.subr.mxu0 0.0
          %889 = vmatpush1.msra.mxu0 0.0
          %890 = vmatprep.subr.mxu0 0.0
          %891 = vmatpush1.msra.mxu0 0.0
          %892 = vmatprep.subr.mxu0 0.0
          %893 = vmatpush1.msra.mxu0 0.0
          %894 = vmatprep.subr.mxu0 0.0
          %895 = vmatpush1.msra.mxu0 0.0
          %896 = vmatprep.subr.mxu0 0.0
          %897 = vmatpush1.msra.mxu0 0.0
          %898 = vmatprep.subr.mxu0 0.0
          %899 = vmatpush1.msra.mxu0 0.0
          %900 = vmatprep.subr.mxu0 0.0
          %901 = vmatpush1.msra.mxu0 0.0
          %902 = vmatprep.subr.mxu0 0.0
          %903 = vmatpush1.msra.mxu0 0.0
          %904 = vmatprep.subr.mxu0 0.0
          %905 = vmatpush1.msra.mxu0 0.0
          %906 = vmatprep.mubr.f32.mxu0 0.0
          %907 = vmatmul.mubr.f32.gmra.mrb[0].mxu0 %v840
          %v908 = vpop.f32.mrb[0].mxu0
          %v909 = vadd.f32 0.0, %v908
          %v910 = vpop.f32.mrb[0].mxu0
          %911 = vdwg.mxu0
          %v912 = vadd.f32 %v837, %v909
          %v913 = vxor.u32 %v912, 2147483648
          %v914 = vmul.f32 %v913, 1.442695
          %v915 = vpow.pop %v914
          %v916 = vadd.f32 %v915, 1.0
          %v917 = vrcp.pop %v916
          %v918 = vmul.f32 1.0, %v917
          %v919 = vtanh.pop %v912
          %v920 = vld [vmem:[#allocation4] sm:$0xff]
          %922 = vrot.lane.b32.xlu0 %v920, 32
          %v923 = vpop.permute.xlu0 %922
          %v925 = vmul.f32 %v918, %v923
          %927 = vrot.lane.b32.xlu0 %v919, 64
          %v928 = vpop.permute.xlu0 %927
          %v930 = vmul.f32 %v918, %v928
          %932 = vrot.lane.b32.xlu0 %v930, 32
          %v933 = vpop.permute.xlu0 %932
          %v935 = vadd.f32 %v925, %v933
          %v936 = vtanh.pop %v935
          %938 = vrot.lane.b32.xlu0 %v936, 64
          %v939 = vpop.permute.xlu0 %938
          %v941 = vmul.f32 %v918, %v939
          %943 = vrot.lane.b32.xlu0 %v941, 32
          %v944 = vpop.permute.xlu0 %943
          %946 = vst.msk [vmem:[#allocation3] sm:$0xff] %vm603, %v944
          %948 = vrot.lane.b32.xlu0 %v935, 96
          %v949 = vpop.permute.xlu0 %948
          %951 = vst.msk [vmem:[#allocation4] sm:$0xff] %vm603, %v949
          %s952 = scalar_lea.vmem %s395, 16 [#allocation11]
          %953 = vst.msk [vmem:[%s952] sm:$0xff] %vm603, %v944
          %s954 = scalar_lea.vmem [#allocation2], 24
          %v955 = vld [vmem:[%s954] sm:$0xff]
          %v956 = vld [vmem:[#allocation3] sm:$0xff]
          %v958 = vsel %vm603, %v956, 0
          %960 = vmatprep.subr.mxu0 0.0
          %961 = vmatpush1.msra.mxu0 %v593
          %962 = vmatprep.subr.mxu0 0.0
          %963 = vmatpush1.msra.mxu0 %v594
          %964 = vmatprep.subr.mxu0 0.0
          %965 = vmatpush1.msra.mxu0 %v595
          %966 = vmatprep.subr.mxu0 0.0
          %967 = vmatpush1.msra.mxu0 %v596
          %968 = vmatprep.subr.mxu0 0.0
          %969 = vmatpush1.msra.mxu0 0.0
          %970 = vmatprep.subr.mxu0 0.0
          %971 = vmatpush1.msra.mxu0 0.0
          %972 = vmatprep.subr.mxu0 0.0
          %973 = vmatpush1.msra.mxu0 0.0
          %974 = vmatprep.subr.mxu0 0.0
          %975 = vmatpush1.msra.mxu0 0.0
          %976 = vmatprep.subr.mxu0 0.0
          %977 = vmatpush1.msra.mxu0 0.0
          %978 = vmatprep.subr.mxu0 0.0
          %979 = vmatpush1.msra.mxu0 0.0
          %980 = vmatprep.subr.mxu0 0.0
          %981 = vmatpush1.msra.mxu0 0.0
          %982 = vmatprep.subr.mxu0 0.0
          %983 = vmatpush1.msra.mxu0 0.0
          %984 = vmatprep.subr.mxu0 0.0
          %985 = vmatpush1.msra.mxu0 0.0
          %986 = vmatprep.subr.mxu0 0.0
          %987 = vmatpush1.msra.mxu0 0.0
          %988 = vmatprep.subr.mxu0 0.0
          %989 = vmatpush1.msra.mxu0 0.0
          %990 = vmatprep.subr.mxu0 0.0
          %991 = vmatpush1.msra.mxu0 0.0
          %992 = vmatprep.subr.mxu0 0.0
          %993 = vmatpush1.msra.mxu0 0.0
          %994 = vmatprep.subr.mxu0 0.0
          %995 = vmatpush1.msra.mxu0 0.0
          %996 = vmatprep.subr.mxu0 0.0
          %997 = vmatpush1.msra.mxu0 0.0
          %998 = vmatprep.subr.mxu0 0.0
          %999 = vmatpush1.msra.mxu0 0.0
          %1000 = vmatprep.subr.mxu0 0.0
          %1001 = vmatpush1.msra.mxu0 0.0
          %1002 = vmatprep.subr.mxu0 0.0
          %1003 = vmatpush1.msra.mxu0 0.0
          %1004 = vmatprep.subr.mxu0 0.0
          %1005 = vmatpush1.msra.mxu0 0.0
          %1006 = vmatprep.subr.mxu0 0.0
          %1007 = vmatpush1.msra.mxu0 0.0
          %1008 = vmatprep.subr.mxu0 0.0
          %1009 = vmatpush1.msra.mxu0 0.0
          %1010 = vmatprep.subr.mxu0 0.0
          %1011 = vmatpush1.msra.mxu0 0.0
          %1012 = vmatprep.subr.mxu0 0.0
          %1013 = vmatpush1.msra.mxu0 0.0
          %1014 = vmatprep.subr.mxu0 0.0
          %1015 = vmatpush1.msra.mxu0 0.0
          %1016 = vmatprep.subr.mxu0 0.0
          %1017 = vmatpush1.msra.mxu0 0.0
          %1018 = vmatprep.subr.mxu0 0.0
          %1019 = vmatpush1.msra.mxu0 0.0
          %1020 = vmatprep.subr.mxu0 0.0
          %1021 = vmatpush1.msra.mxu0 0.0
          %1022 = vmatprep.subr.mxu0 0.0
          %1023 = vmatpush1.msra.mxu0 0.0
          %1024 = vmatprep.mubr.f32.mxu0 0.0
          %1025 = vmatmul.mubr.f32.gmra.mrb[0].mxu0 %v958
          %v1026 = vpop.f32.mrb[0].mxu0
          %v1027 = vadd.f32 0.0, %v1026
          %v1028 = vpop.f32.mrb[0].mxu0
          %1029 = vdwg.mxu0
          %v1030 = vadd.f32 %v955, %v1027
          %v1031 = vxor.u32 %v1030, 2147483648
          %v1032 = vmul.f32 %v1031, 1.442695
          %v1033 = vpow.pop %v1032
          %v1034 = vadd.f32 %v1033, 1.0
          %v1035 = vrcp.pop %v1034
          %v1036 = vmul.f32 1.0, %v1035
          %v1037 = vtanh.pop %v1030
          %v1038 = vld [vmem:[#allocation4] sm:$0xff]
          %1040 = vrot.lane.b32.xlu0 %v1038, 32
          %v1041 = vpop.permute.xlu0 %1040
          %v1043 = vmul.f32 %v1036, %v1041
          %1045 = vrot.lane.b32.xlu0 %v1037, 64
          %v1046 = vpop.permute.xlu0 %1045
          %v1048 = vmul.f32 %v1036, %v1046
          %1050 = vrot.lane.b32.xlu0 %v1048, 32
          %v1051 = vpop.permute.xlu0 %1050
          %v1053 = vadd.f32 %v1043, %v1051
          %v1054 = vtanh.pop %v1053
          %1056 = vrot.lane.b32.xlu0 %v1054, 64
          %v1057 = vpop.permute.xlu0 %1056
          %v1059 = vmul.f32 %v1036, %v1057
          %1061 = vrot.lane.b32.xlu0 %v1059, 32
          %v1062 = vpop.permute.xlu0 %1061
          %1064 = vst.msk [vmem:[#allocation3] sm:$0xff] %vm603, %v1062
          %1066 = vrot.lane.b32.xlu0 %v1053, 96
          %v1067 = vpop.permute.xlu0 %1066
          %1069 = vst.msk [vmem:[#allocation4] sm:$0xff] %vm603, %v1067
          %s1070 = scalar_lea.vmem %s395, 24 [#allocation11]
          %1071 = vst.msk [vmem:[%s1070] sm:$0xff] %vm603, %v1062
          %s1072 = scalar_lea.vmem [#allocation2], 32
          %v1073 = vld [vmem:[%s1072] sm:$0xff]
          %v1074 = vld [vmem:[#allocation3] sm:$0xff]
          %v1076 = vsel %vm603, %v1074, 0
          %1078 = vmatprep.subr.mxu0 0.0
          %1079 = vmatpush1.msra.mxu0 %v593
          %1080 = vmatprep.subr.mxu0 0.0
          %1081 = vmatpush1.msra.mxu0 %v594
          %1082 = vmatprep.subr.mxu0 0.0
          %1083 = vmatpush1.msra.mxu0 %v595
          %1084 = vmatprep.subr.mxu0 0.0
          %1085 = vmatpush1.msra.mxu0 %v596
          %1086 = vmatprep.subr.mxu0 0.0
          %1087 = vmatpush1.msra.mxu0 0.0
          %1088 = vmatprep.subr.mxu0 0.0
          %1089 = vmatpush1.msra.mxu0 0.0
          %1090 = vmatprep.subr.mxu0 0.0
          %1091 = vmatpush1.msra.mxu0 0.0
          %1092 = vmatprep.subr.mxu0 0.0
          %1093 = vmatpush1.msra.mxu0 0.0
          %1094 = vmatprep.subr.mxu0 0.0
          %1095 = vmatpush1.msra.mxu0 0.0
          %1096 = vmatprep.subr.mxu0 0.0
          %1097 = vmatpush1.msra.mxu0 0.0
          %1098 = vmatprep.subr.mxu0 0.0
          %1099 = vmatpush1.msra.mxu0 0.0
          %1100 = vmatprep.subr.mxu0 0.0
          %1101 = vmatpush1.msra.mxu0 0.0
          %1102 = vmatprep.subr.mxu0 0.0
          %1103 = vmatpush1.msra.mxu0 0.0
          %1104 = vmatprep.subr.mxu0 0.0
          %1105 = vmatpush1.msra.mxu0 0.0
          %1106 = vmatprep.subr.mxu0 0.0
          %1107 = vmatpush1.msra.mxu0 0.0
          %1108 = vmatprep.subr.mxu0 0.0
          %1109 = vmatpush1.msra.mxu0 0.0
          %1110 = vmatprep.subr.mxu0 0.0
          %1111 = vmatpush1.msra.mxu0 0.0
          %1112 = vmatprep.subr.mxu0 0.0
          %1113 = vmatpush1.msra.mxu0 0.0
          %1114 = vmatprep.subr.mxu0 0.0
          %1115 = vmatpush1.msra.mxu0 0.0
          %1116 = vmatprep.subr.mxu0 0.0
          %1117 = vmatpush1.msra.mxu0 0.0
          %1118 = vmatprep.subr.mxu0 0.0
          %1119 = vmatpush1.msra.mxu0 0.0
          %1120 = vmatprep.subr.mxu0 0.0
          %1121 = vmatpush1.msra.mxu0 0.0
          %1122 = vmatprep.subr.mxu0 0.0
          %1123 = vmatpush1.msra.mxu0 0.0
          %1124 = vmatprep.subr.mxu0 0.0
          %1125 = vmatpush1.msra.mxu0 0.0
          %1126 = vmatprep.subr.mxu0 0.0
          %1127 = vmatpush1.msra.mxu0 0.0
          %1128 = vmatprep.subr.mxu0 0.0
          %1129 = vmatpush1.msra.mxu0 0.0
          %1130 = vmatprep.subr.mxu0 0.0
          %1131 = vmatpush1.msra.mxu0 0.0
          %1132 = vmatprep.subr.mxu0 0.0
          %1133 = vmatpush1.msra.mxu0 0.0
          %1134 = vmatprep.subr.mxu0 0.0
          %1135 = vmatpush1.msra.mxu0 0.0
          %1136 = vmatprep.subr.mxu0 0.0
          %1137 = vmatpush1.msra.mxu0 0.0
          %1138 = vmatprep.subr.mxu0 0.0
          %1139 = vmatpush1.msra.mxu0 0.0
          %1140 = vmatprep.subr.mxu0 0.0
          %1141 = vmatpush1.msra.mxu0 0.0
          %1142 = vmatprep.mubr.f32.mxu0 0.0
          %1143 = vmatmul.mubr.f32.gmra.mrb[0].mxu0 %v1076
          %v1144 = vpop.f32.mrb[0].mxu0
          %v1145 = vadd.f32 0.0, %v1144
          %v1146 = vpop.f32.mrb[0].mxu0
          %1147 = vdwg.mxu0
          %v1148 = vadd.f32 %v1073, %v1145
          %v1149 = vxor.u32 %v1148, 2147483648
          %v1150 = vmul.f32 %v1149, 1.442695
          %v1151 = vpow.pop %v1150
          %v1152 = vadd.f32 %v1151, 1.0
          %v1153 = vrcp.pop %v1152
          %v1154 = vmul.f32 1.0, %v1153
          %v1155 = vtanh.pop %v1148
          %v1156 = vld [vmem:[#allocation4] sm:$0xff]
          %1158 = vrot.lane.b32.xlu0 %v1156, 32
          %v1159 = vpop.permute.xlu0 %1158
          %v1161 = vmul.f32 %v1154, %v1159
          %1163 = vrot.lane.b32.xlu0 %v1155, 64
          %v1164 = vpop.permute.xlu0 %1163
          %v1166 = vmul.f32 %v1154, %v1164
          %1168 = vrot.lane.b32.xlu0 %v1166, 32
          %v1169 = vpop.permute.xlu0 %1168
          %v1171 = vadd.f32 %v1161, %v1169
          %v1172 = vtanh.pop %v1171
          %1174 = vrot.lane.b32.xlu0 %v1172, 64
          %v1175 = vpop.permute.xlu0 %1174
          %v1177 = vmul.f32 %v1154, %v1175
          %1179 = vrot.lane.b32.xlu0 %v1177, 32
          %v1180 = vpop.permute.xlu0 %1179
          %1182 = vst.msk [vmem:[#allocation3] sm:$0xff] %vm603, %v1180
          %1184 = vrot.lane.b32.xlu0 %v1171, 96
          %v1185 = vpop.permute.xlu0 %1184
          %1187 = vst.msk [vmem:[#allocation4] sm:$0xff] %vm603, %v1185
          %s1188 = scalar_lea.vmem %s395, 32 [#allocation11]
          %1189 = vst.msk [vmem:[%s1188] sm:$0xff] %vm603, %v1180
          %s1190 = scalar_lea.vmem [#allocation2], 40
          %v1191 = vld [vmem:[%s1190] sm:$0xff]
          %v1192 = vld [vmem:[#allocation3] sm:$0xff]
          %v1194 = vsel %vm603, %v1192, 0
          %1196 = vmatprep.subr.mxu0 0.0
          %1197 = vmatpush1.msra.mxu0 %v593
          %1198 = vmatprep.subr.mxu0 0.0
          %1199 = vmatpush1.msra.mxu0 %v594
          %1200 = vmatprep.subr.mxu0 0.0
          %1201 = vmatpush1.msra.mxu0 %v595
          %1202 = vmatprep.subr.mxu0 0.0
          %1203 = vmatpush1.msra.mxu0 %v596
          %1204 = vmatprep.subr.mxu0 0.0
          %1205 = vmatpush1.msra.mxu0 0.0
          %1206 = vmatprep.subr.mxu0 0.0
          %1207 = vmatpush1.msra.mxu0 0.0
          %1208 = vmatprep.subr.mxu0 0.0
          %1209 = vmatpush1.msra.mxu0 0.0
          %1210 = vmatprep.subr.mxu0 0.0
          %1211 = vmatpush1.msra.mxu0 0.0
          %1212 = vmatprep.subr.mxu0 0.0
          %1213 = vmatpush1.msra.mxu0 0.0
          %1214 = vmatprep.subr.mxu0 0.0
          %1215 = vmatpush1.msra.mxu0 0.0
          %1216 = vmatprep.subr.mxu0 0.0
          %1217 = vmatpush1.msra.mxu0 0.0
          %1218 = vmatprep.subr.mxu0 0.0
          %1219 = vmatpush1.msra.mxu0 0.0
          %1220 = vmatprep.subr.mxu0 0.0
          %1221 = vmatpush1.msra.mxu0 0.0
          %1222 = vmatprep.subr.mxu0 0.0
          %1223 = vmatpush1.msra.mxu0 0.0
          %1224 = vmatprep.subr.mxu0 0.0
          %1225 = vmatpush1.msra.mxu0 0.0
          %1226 = vmatprep.subr.mxu0 0.0
          %1227 = vmatpush1.msra.mxu0 0.0
          %1228 = vmatprep.subr.mxu0 0.0
          %1229 = vmatpush1.msra.mxu0 0.0
          %1230 = vmatprep.subr.mxu0 0.0
          %1231 = vmatpush1.msra.mxu0 0.0
          %1232 = vmatprep.subr.mxu0 0.0
          %1233 = vmatpush1.msra.mxu0 0.0
          %1234 = vmatprep.subr.mxu0 0.0
          %1235 = vmatpush1.msra.mxu0 0.0
          %1236 = vmatprep.subr.mxu0 0.0
          %1237 = vmatpush1.msra.mxu0 0.0
          %1238 = vmatprep.subr.mxu0 0.0
          %1239 = vmatpush1.msra.mxu0 0.0
          %1240 = vmatprep.subr.mxu0 0.0
          %1241 = vmatpush1.msra.mxu0 0.0
          %1242 = vmatprep.subr.mxu0 0.0
          %1243 = vmatpush1.msra.mxu0 0.0
          %1244 = vmatprep.subr.mxu0 0.0
          %1245 = vmatpush1.msra.mxu0 0.0
          %1246 = vmatprep.subr.mxu0 0.0
          %1247 = vmatpush1.msra.mxu0 0.0
          %1248 = vmatprep.subr.mxu0 0.0
          %1249 = vmatpush1.msra.mxu0 0.0
          %1250 = vmatprep.subr.mxu0 0.0
          %1251 = vmatpush1.msra.mxu0 0.0
          %1252 = vmatprep.subr.mxu0 0.0
          %1253 = vmatpush1.msra.mxu0 0.0
          %1254 = vmatprep.subr.mxu0 0.0
          %1255 = vmatpush1.msra.mxu0 0.0
          %1256 = vmatprep.subr.mxu0 0.0
          %1257 = vmatpush1.msra.mxu0 0.0
          %1258 = vmatprep.subr.mxu0 0.0
          %1259 = vmatpush1.msra.mxu0 0.0
          %1260 = vmatprep.mubr.f32.mxu0 0.0
          %1261 = vmatmul.mubr.f32.gmra.mrb[0].mxu0 %v1194
          %v1262 = vpop.f32.mrb[0].mxu0
          %v1263 = vadd.f32 0.0, %v1262
          %v1264 = vpop.f32.mrb[0].mxu0
          %1265 = vdwg.mxu0
          %v1266 = vadd.f32 %v1191, %v1263
          %v1267 = vxor.u32 %v1266, 2147483648
          %v1268 = vmul.f32 %v1267, 1.442695
          %v1269 = vpow.pop %v1268
          %v1270 = vadd.f32 %v1269, 1.0
          %v1271 = vrcp.pop %v1270
          %v1272 = vmul.f32 1.0, %v1271
          %v1273 = vtanh.pop %v1266
          %v1274 = vld [vmem:[#allocation4] sm:$0xff]
          %1276 = vrot.lane.b32.xlu0 %v1274, 32
          %v1277 = vpop.permute.xlu0 %1276
          %v1279 = vmul.f32 %v1272, %v1277
          %1281 = vrot.lane.b32.xlu0 %v1273, 64
          %v1282 = vpop.permute.xlu0 %1281
          %v1284 = vmul.f32 %v1272, %v1282
          %1286 = vrot.lane.b32.xlu0 %v1284, 32
          %v1287 = vpop.permute.xlu0 %1286
          %v1289 = vadd.f32 %v1279, %v1287
          %v1290 = vtanh.pop %v1289
          %1292 = vrot.lane.b32.xlu0 %v1290, 64
          %v1293 = vpop.permute.xlu0 %1292
          %v1295 = vmul.f32 %v1272, %v1293
          %1297 = vrot.lane.b32.xlu0 %v1295, 32
          %v1298 = vpop.permute.xlu0 %1297
          %1300 = vst.msk [vmem:[#allocation3] sm:$0xff] %vm603, %v1298
          %1302 = vrot.lane.b32.xlu0 %v1289, 96
          %v1303 = vpop.permute.xlu0 %1302
          %1305 = vst.msk [vmem:[#allocation4] sm:$0xff] %vm603, %v1303
          %s1306 = scalar_lea.vmem %s395, 40 [#allocation11]
          %1307 = vst.msk [vmem:[%s1306] sm:$0xff] %vm603, %v1298
          %s1308 = scalar_lea.vmem [#allocation2], 48
          %v1309 = vld [vmem:[%s1308] sm:$0xff]
          %v1310 = vld [vmem:[#allocation3] sm:$0xff]
          %v1312 = vsel %vm603, %v1310, 0
          %1314 = vmatprep.subr.mxu0 0.0
          %1315 = vmatpush1.msra.mxu0 %v593
          %1316 = vmatprep.subr.mxu0 0.0
          %1317 = vmatpush1.msra.mxu0 %v594
          %1318 = vmatprep.subr.mxu0 0.0
          %1319 = vmatpush1.msra.mxu0 %v595
          %1320 = vmatprep.subr.mxu0 0.0
          %1321 = vmatpush1.msra.mxu0 %v596
          %1322 = vmatprep.subr.mxu0 0.0
          %1323 = vmatpush1.msra.mxu0 0.0
          %1324 = vmatprep.subr.mxu0 0.0
          %1325 = vmatpush1.msra.mxu0 0.0
          %1326 = vmatprep.subr.mxu0 0.0
          %1327 = vmatpush1.msra.mxu0 0.0
          %1328 = vmatprep.subr.mxu0 0.0
          %1329 = vmatpush1.msra.mxu0 0.0
          %1330 = vmatprep.subr.mxu0 0.0
          %1331 = vmatpush1.msra.mxu0 0.0
          %1332 = vmatprep.subr.mxu0 0.0
          %1333 = vmatpush1.msra.mxu0 0.0
          %1334 = vmatprep.subr.mxu0 0.0
          %1335 = vmatpush1.msra.mxu0 0.0
          %1336 = vmatprep.subr.mxu0 0.0
          %1337 = vmatpush1.msra.mxu0 0.0
          %1338 = vmatprep.subr.mxu0 0.0
          %1339 = vmatpush1.msra.mxu0 0.0
          %1340 = vmatprep.subr.mxu0 0.0
          %1341 = vmatpush1.msra.mxu0 0.0
          %1342 = vmatprep.subr.mxu0 0.0
          %1343 = vmatpush1.msra.mxu0 0.0
          %1344 = vmatprep.subr.mxu0 0.0
          %1345 = vmatpush1.msra.mxu0 0.0
          %1346 = vmatprep.subr.mxu0 0.0
          %1347 = vmatpush1.msra.mxu0 0.0
          %1348 = vmatprep.subr.mxu0 0.0
          %1349 = vmatpush1.msra.mxu0 0.0
          %1350 = vmatprep.subr.mxu0 0.0
          %1351 = vmatpush1.msra.mxu0 0.0
          %1352 = vmatprep.subr.mxu0 0.0
          %1353 = vmatpush1.msra.mxu0 0.0
          %1354 = vmatprep.subr.mxu0 0.0
          %1355 = vmatpush1.msra.mxu0 0.0
          %1356 = vmatprep.subr.mxu0 0.0
          %1357 = vmatpush1.msra.mxu0 0.0
          %1358 = vmatprep.subr.mxu0 0.0
          %1359 = vmatpush1.msra.mxu0 0.0
          %1360 = vmatprep.subr.mxu0 0.0
          %1361 = vmatpush1.msra.mxu0 0.0
          %1362 = vmatprep.subr.mxu0 0.0
          %1363 = vmatpush1.msra.mxu0 0.0
          %1364 = vmatprep.subr.mxu0 0.0
          %1365 = vmatpush1.msra.mxu0 0.0
          %1366 = vmatprep.subr.mxu0 0.0
          %1367 = vmatpush1.msra.mxu0 0.0
          %1368 = vmatprep.subr.mxu0 0.0
          %1369 = vmatpush1.msra.mxu0 0.0
          %1370 = vmatprep.subr.mxu0 0.0
          %1371 = vmatpush1.msra.mxu0 0.0
          %1372 = vmatprep.subr.mxu0 0.0
          %1373 = vmatpush1.msra.mxu0 0.0
          %1374 = vmatprep.subr.mxu0 0.0
          %1375 = vmatpush1.msra.mxu0 0.0
          %1376 = vmatprep.subr.mxu0 0.0
          %1377 = vmatpush1.msra.mxu0 0.0
          %1378 = vmatprep.mubr.f32.mxu0 0.0
          %1379 = vmatmul.mubr.f32.gmra.mrb[0].mxu0 %v1312
          %v1380 = vpop.f32.mrb[0].mxu0
          %v1381 = vadd.f32 0.0, %v1380
          %v1382 = vpop.f32.mrb[0].mxu0
          %1383 = vdwg.mxu0
          %v1384 = vadd.f32 %v1309, %v1381
          %v1385 = vxor.u32 %v1384, 2147483648
          %v1386 = vmul.f32 %v1385, 1.442695
          %v1387 = vpow.pop %v1386
          %v1388 = vadd.f32 %v1387, 1.0
          %v1389 = vrcp.pop %v1388
          %v1390 = vmul.f32 1.0, %v1389
          %v1391 = vtanh.pop %v1384
          %v1392 = vld [vmem:[#allocation4] sm:$0xff]
          %1394 = vrot.lane.b32.xlu0 %v1392, 32
          %v1395 = vpop.permute.xlu0 %1394
          %v1397 = vmul.f32 %v1390, %v1395
          %1399 = vrot.lane.b32.xlu0 %v1391, 64
          %v1400 = vpop.permute.xlu0 %1399
          %v1402 = vmul.f32 %v1390, %v1400
          %1404 = vrot.lane.b32.xlu0 %v1402, 32
          %v1405 = vpop.permute.xlu0 %1404
          %v1407 = vadd.f32 %v1397, %v1405
          %v1408 = vtanh.pop %v1407
          %1410 = vrot.lane.b32.xlu0 %v1408, 64
          %v1411 = vpop.permute.xlu0 %1410
          %v1413 = vmul.f32 %v1390, %v1411
          %1415 = vrot.lane.b32.xlu0 %v1413, 32
          %v1416 = vpop.permute.xlu0 %1415
          %1418 = vst.msk [vmem:[#allocation3] sm:$0xff] %vm603, %v1416
          %1420 = vrot.lane.b32.xlu0 %v1407, 96
          %v1421 = vpop.permute.xlu0 %1420
          %1423 = vst.msk [vmem:[#allocation4] sm:$0xff] %vm603, %v1421
          %s1424 = scalar_lea.vmem %s395, 48 [#allocation11]
          %1425 = vst.msk [vmem:[%s1424] sm:$0xff] %vm603, %v1416
          %s1426 = scalar_lea.vmem [#allocation2], 56
          %v1427 = vld [vmem:[%s1426] sm:$0xff]
          %v1428 = vld [vmem:[#allocation3] sm:$0xff]
          %v1430 = vsel %vm603, %v1428, 0
          %1432 = vmatprep.subr.mxu0 0.0
          %1433 = vmatpush1.msra.mxu0 %v593
          %1434 = vmatprep.subr.mxu0 0.0
          %1435 = vmatpush1.msra.mxu0 %v594
          %1436 = vmatprep.subr.mxu0 0.0
          %1437 = vmatpush1.msra.mxu0 %v595
          %1438 = vmatprep.subr.mxu0 0.0
          %1439 = vmatpush1.msra.mxu0 %v596
          %1440 = vmatprep.subr.mxu0 0.0
          %1441 = vmatpush1.msra.mxu0 0.0
          %1442 = vmatprep.subr.mxu0 0.0
          %1443 = vmatpush1.msra.mxu0 0.0
          %1444 = vmatprep.subr.mxu0 0.0
          %1445 = vmatpush1.msra.mxu0 0.0
          %1446 = vmatprep.subr.mxu0 0.0
          %1447 = vmatpush1.msra.mxu0 0.0
          %1448 = vmatprep.subr.mxu0 0.0
          %1449 = vmatpush1.msra.mxu0 0.0
          %1450 = vmatprep.subr.mxu0 0.0
          %1451 = vmatpush1.msra.mxu0 0.0
          %1452 = vmatprep.subr.mxu0 0.0
          %1453 = vmatpush1.msra.mxu0 0.0
          %1454 = vmatprep.subr.mxu0 0.0
          %1455 = vmatpush1.msra.mxu0 0.0
          %1456 = vmatprep.subr.mxu0 0.0
          %1457 = vmatpush1.msra.mxu0 0.0
          %1458 = vmatprep.subr.mxu0 0.0
          %1459 = vmatpush1.msra.mxu0 0.0
          %1460 = vmatprep.subr.mxu0 0.0
          %1461 = vmatpush1.msra.mxu0 0.0
          %1462 = vmatprep.subr.mxu0 0.0
          %1463 = vmatpush1.msra.mxu0 0.0
          %1464 = vmatprep.subr.mxu0 0.0
          %1465 = vmatpush1.msra.mxu0 0.0
          %1466 = vmatprep.subr.mxu0 0.0
          %1467 = vmatpush1.msra.mxu0 0.0
          %1468 = vmatprep.subr.mxu0 0.0
          %1469 = vmatpush1.msra.mxu0 0.0
          %1470 = vmatprep.subr.mxu0 0.0
          %1471 = vmatpush1.msra.mxu0 0.0
          %1472 = vmatprep.subr.mxu0 0.0
          %1473 = vmatpush1.msra.mxu0 0.0
          %1474 = vmatprep.subr.mxu0 0.0
          %1475 = vmatpush1.msra.mxu0 0.0
          %1476 = vmatprep.subr.mxu0 0.0
          %1477 = vmatpush1.msra.mxu0 0.0
          %1478 = vmatprep.subr.mxu0 0.0
          %1479 = vmatpush1.msra.mxu0 0.0
          %1480 = vmatprep.subr.mxu0 0.0
          %1481 = vmatpush1.msra.mxu0 0.0
          %1482 = vmatprep.subr.mxu0 0.0
          %1483 = vmatpush1.msra.mxu0 0.0
          %1484 = vmatprep.subr.mxu0 0.0
          %1485 = vmatpush1.msra.mxu0 0.0
          %1486 = vmatprep.subr.mxu0 0.0
          %1487 = vmatpush1.msra.mxu0 0.0
          %1488 = vmatprep.subr.mxu0 0.0
          %1489 = vmatpush1.msra.mxu0 0.0
          %1490 = vmatprep.subr.mxu0 0.0
          %1491 = vmatpush1.msra.mxu0 0.0
          %1492 = vmatprep.subr.mxu0 0.0
          %1493 = vmatpush1.msra.mxu0 0.0
          %1494 = vmatprep.subr.mxu0 0.0
          %1495 = vmatpush1.msra.mxu0 0.0
          %1496 = vmatprep.mubr.f32.mxu0 0.0
          %1497 = vmatmul.mubr.f32.gmra.mrb[0].mxu0 %v1430
          %v1498 = vpop.f32.mrb[0].mxu0
          %v1499 = vadd.f32 0.0, %v1498
          %v1500 = vpop.f32.mrb[0].mxu0
          %1501 = vdwg.mxu0
          %v1502 = vadd.f32 %v1427, %v1499
          %v1503 = vxor.u32 %v1502, 2147483648
          %v1504 = vmul.f32 %v1503, 1.442695
          %v1505 = vpow.pop %v1504
          %v1506 = vadd.f32 %v1505, 1.0
          %v1507 = vrcp.pop %v1506
          %v1508 = vmul.f32 1.0, %v1507
          %v1509 = vtanh.pop %v1502
          %v1510 = vld [vmem:[#allocation4] sm:$0xff]
          %1512 = vrot.lane.b32.xlu0 %v1510, 32
          %v1513 = vpop.permute.xlu0 %1512
          %v1515 = vmul.f32 %v1508, %v1513
          %1517 = vrot.lane.b32.xlu0 %v1509, 64
          %v1518 = vpop.permute.xlu0 %1517
          %v1520 = vmul.f32 %v1508, %v1518
          %1522 = vrot.lane.b32.xlu0 %v1520, 32
          %v1523 = vpop.permute.xlu0 %1522
          %v1525 = vadd.f32 %v1515, %v1523
          %v1526 = vtanh.pop %v1525
          %1528 = vrot.lane.b32.xlu0 %v1526, 64
          %v1529 = vpop.permute.xlu0 %1528
          %v1531 = vmul.f32 %v1508, %v1529
          %1533 = vrot.lane.b32.xlu0 %v1531, 32
          %v1534 = vpop.permute.xlu0 %1533
          %1536 = vst.msk [vmem:[#allocation3] sm:$0xff] %vm603, %v1534
          %1538 = vrot.lane.b32.xlu0 %v1525, 96
          %v1539 = vpop.permute.xlu0 %1538
          %1541 = vst.msk [vmem:[#allocation4] sm:$0xff] %vm603, %v1539
          %s1542 = scalar_lea.vmem %s395, 56 [#allocation11]
          %1543 = vst.msk [vmem:[%s1542] sm:$0xff] %vm603, %v1534
        $region56: #{tpu_custom_call.1} parent=35 // pred_fallthru
          _
        %p1544 = scmp.eq.s32.totalorder %s34, 1
        // Predicated region
        $region57: #{tpu_custom_call.1} parent=35 // pred_check
          %p1545 = pneg %p1544
        $region58: #{tpu_custom_call.1} parent=35 // pred_check_branch
          %1547 = sbr.rel (%p1545) target = $region60
        $region59: #{tpu_custom_call.1} parent=35 // pred_region
          %s1548 = scalar_lea.vmem [#allocation2], 56
          %v1549 = vld [vmem:[%s1548] sm:$0xff]
          %v1550 = vld [vmem:[#allocation3] sm:$0xff]
          %vm1551 = vcmask 261120
          %v1553 = vsel %vm1551, %v1550, 0
          %1555 = vmatprep.subr.mxu0 0.0
          %1556 = vmatpush1.msra.mxu0 %v593
          %1557 = vmatprep.subr.mxu0 0.0
          %1558 = vmatpush1.msra.mxu0 %v594
          %1559 = vmatprep.subr.mxu0 0.0
          %1560 = vmatpush1.msra.mxu0 %v595
          %1561 = vmatprep.subr.mxu0 0.0
          %1562 = vmatpush1.msra.mxu0 %v596
          %1563 = vmatprep.subr.mxu0 0.0
          %1564 = vmatpush1.msra.mxu0 0.0
          %1565 = vmatprep.subr.mxu0 0.0
          %1566 = vmatpush1.msra.mxu0 0.0
          %1567 = vmatprep.subr.mxu0 0.0
          %1568 = vmatpush1.msra.mxu0 0.0
          %1569 = vmatprep.subr.mxu0 0.0
          %1570 = vmatpush1.msra.mxu0 0.0
          %1571 = vmatprep.subr.mxu0 0.0
          %1572 = vmatpush1.msra.mxu0 0.0
          %1573 = vmatprep.subr.mxu0 0.0
          %1574 = vmatpush1.msra.mxu0 0.0
          %1575 = vmatprep.subr.mxu0 0.0
          %1576 = vmatpush1.msra.mxu0 0.0
          %1577 = vmatprep.subr.mxu0 0.0
          %1578 = vmatpush1.msra.mxu0 0.0
          %1579 = vmatprep.subr.mxu0 0.0
          %1580 = vmatpush1.msra.mxu0 0.0
          %1581 = vmatprep.subr.mxu0 0.0
          %1582 = vmatpush1.msra.mxu0 0.0
          %1583 = vmatprep.subr.mxu0 0.0
          %1584 = vmatpush1.msra.mxu0 0.0
          %1585 = vmatprep.subr.mxu0 0.0
          %1586 = vmatpush1.msra.mxu0 0.0
          %1587 = vmatprep.subr.mxu0 0.0
          %1588 = vmatpush1.msra.mxu0 0.0
          %1589 = vmatprep.subr.mxu0 0.0
          %1590 = vmatpush1.msra.mxu0 0.0
          %1591 = vmatprep.subr.mxu0 0.0
          %1592 = vmatpush1.msra.mxu0 0.0
          %1593 = vmatprep.subr.mxu0 0.0
          %1594 = vmatpush1.msra.mxu0 0.0
          %1595 = vmatprep.subr.mxu0 0.0
          %1596 = vmatpush1.msra.mxu0 0.0
          %1597 = vmatprep.subr.mxu0 0.0
          %1598 = vmatpush1.msra.mxu0 0.0
          %1599 = vmatprep.subr.mxu0 0.0
          %1600 = vmatpush1.msra.mxu0 0.0
          %1601 = vmatprep.subr.mxu0 0.0
          %1602 = vmatpush1.msra.mxu0 0.0
          %1603 = vmatprep.subr.mxu0 0.0
          %1604 = vmatpush1.msra.mxu0 0.0
          %1605 = vmatprep.subr.mxu0 0.0
          %1606 = vmatpush1.msra.mxu0 0.0
          %1607 = vmatprep.subr.mxu0 0.0
          %1608 = vmatpush1.msra.mxu0 0.0
          %1609 = vmatprep.subr.mxu0 0.0
          %1610 = vmatpush1.msra.mxu0 0.0
          %1611 = vmatprep.subr.mxu0 0.0
          %1612 = vmatpush1.msra.mxu0 0.0
          %1613 = vmatprep.subr.mxu0 0.0
          %1614 = vmatpush1.msra.mxu0 0.0
          %1615 = vmatprep.subr.mxu0 0.0
          %1616 = vmatpush1.msra.mxu0 0.0
          %1617 = vmatprep.subr.mxu0 0.0
          %1618 = vmatpush1.msra.mxu0 0.0
          %1619 = vmatprep.mubr.f32.mxu0 0.0
          %1620 = vmatmul.mubr.f32.gmra.mrb[0].mxu0 %v1553
          %v1621 = vpop.f32.mrb[0].mxu0
          %v1622 = vadd.f32 0.0, %v1621
          %v1623 = vpop.f32.mrb[0].mxu0
          %1624 = vdwg.mxu0
          %v1625 = vadd.f32 %v1549, %v1622
          %v1626 = vxor.u32 %v1625, 2147483648
          %v1627 = vmul.f32 %v1626, 1.442695
          %v1628 = vpow.pop %v1627
          %v1629 = vadd.f32 %v1628, 1.0
          %v1630 = vrcp.pop %v1629
          %v1631 = vmul.f32 1.0, %v1630
          %v1632 = vtanh.pop %v1625
          %v1633 = vld [vmem:[#allocation4] sm:$0xff]
          %1635 = vrot.lane.b32.xlu0 %v1633, 32
          %v1636 = vpop.permute.xlu0 %1635
          %v1638 = vmul.f32 %v1631, %v1636
          %1640 = vrot.lane.b32.xlu0 %v1632, 64
          %v1641 = vpop.permute.xlu0 %1640
          %v1643 = vmul.f32 %v1631, %v1641
          %1645 = vrot.lane.b32.xlu0 %v1643, 32
          %v1646 = vpop.permute.xlu0 %1645
          %v1648 = vadd.f32 %v1638, %v1646
          %v1649 = vtanh.pop %v1648
          %1651 = vrot.lane.b32.xlu0 %v1649, 64
          %v1652 = vpop.permute.xlu0 %1651
          %v1654 = vmul.f32 %v1631, %v1652
          %1656 = vrot.lane.b32.xlu0 %v1654, 32
          %v1657 = vpop.permute.xlu0 %1656
          %1659 = vst.msk [vmem:[#allocation3] sm:$0xff] %vm1551, %v1657
          %1661 = vrot.lane.b32.xlu0 %v1648, 96
          %v1662 = vpop.permute.xlu0 %1661
          %1664 = vst.msk [vmem:[#allocation4] sm:$0xff] %vm1551, %v1662
          %s1665 = scalar_lea.vmem %s395, 56 [#allocation11]
          %1666 = vst.msk [vmem:[%s1665] sm:$0xff] %vm1551, %v1657
          %s1667 = scalar_lea.vmem [#allocation2], 48
          %v1668 = vld [vmem:[%s1667] sm:$0xff]
          %v1669 = vld [vmem:[#allocation3] sm:$0xff]
          %v1671 = vsel %vm1551, %v1669, 0
          %1673 = vmatprep.subr.mxu0 0.0
          %1674 = vmatpush1.msra.mxu0 %v593
          %1675 = vmatprep.subr.mxu0 0.0
          %1676 = vmatpush1.msra.mxu0 %v594
          %1677 = vmatprep.subr.mxu0 0.0
          %1678 = vmatpush1.msra.mxu0 %v595
          %1679 = vmatprep.subr.mxu0 0.0
          %1680 = vmatpush1.msra.mxu0 %v596
          %1681 = vmatprep.subr.mxu0 0.0
          %1682 = vmatpush1.msra.mxu0 0.0
          %1683 = vmatprep.subr.mxu0 0.0
          %1684 = vmatpush1.msra.mxu0 0.0
          %1685 = vmatprep.subr.mxu0 0.0
          %1686 = vmatpush1.msra.mxu0 0.0
          %1687 = vmatprep.subr.mxu0 0.0
          %1688 = vmatpush1.msra.mxu0 0.0
          %1689 = vmatprep.subr.mxu0 0.0
          %1690 = vmatpush1.msra.mxu0 0.0
          %1691 = vmatprep.subr.mxu0 0.0
          %1692 = vmatpush1.msra.mxu0 0.0
          %1693 = vmatprep.subr.mxu0 0.0
          %1694 = vmatpush1.msra.mxu0 0.0
          %1695 = vmatprep.subr.mxu0 0.0
          %1696 = vmatpush1.msra.mxu0 0.0
          %1697 = vmatprep.subr.mxu0 0.0
          %1698 = vmatpush1.msra.mxu0 0.0
          %1699 = vmatprep.subr.mxu0 0.0
          %1700 = vmatpush1.msra.mxu0 0.0
          %1701 = vmatprep.subr.mxu0 0.0
          %1702 = vmatpush1.msra.mxu0 0.0
          %1703 = vmatprep.subr.mxu0 0.0
          %1704 = vmatpush1.msra.mxu0 0.0
          %1705 = vmatprep.subr.mxu0 0.0
          %1706 = vmatpush1.msra.mxu0 0.0
          %1707 = vmatprep.subr.mxu0 0.0
          %1708 = vmatpush1.msra.mxu0 0.0
          %1709 = vmatprep.subr.mxu0 0.0
          %1710 = vmatpush1.msra.mxu0 0.0
          %1711 = vmatprep.subr.mxu0 0.0
          %1712 = vmatpush1.msra.mxu0 0.0
          %1713 = vmatprep.subr.mxu0 0.0
          %1714 = vmatpush1.msra.mxu0 0.0
          %1715 = vmatprep.subr.mxu0 0.0
          %1716 = vmatpush1.msra.mxu0 0.0
          %1717 = vmatprep.subr.mxu0 0.0
          %1718 = vmatpush1.msra.mxu0 0.0
          %1719 = vmatprep.subr.mxu0 0.0
          %1720 = vmatpush1.msra.mxu0 0.0
          %1721 = vmatprep.subr.mxu0 0.0
          %1722 = vmatpush1.msra.mxu0 0.0
          %1723 = vmatprep.subr.mxu0 0.0
          %1724 = vmatpush1.msra.mxu0 0.0
          %1725 = vmatprep.subr.mxu0 0.0
          %1726 = vmatpush1.msra.mxu0 0.0
          %1727 = vmatprep.subr.mxu0 0.0
          %1728 = vmatpush1.msra.mxu0 0.0
          %1729 = vmatprep.subr.mxu0 0.0
          %1730 = vmatpush1.msra.mxu0 0.0
          %1731 = vmatprep.subr.mxu0 0.0
          %1732 = vmatpush1.msra.mxu0 0.0
          %1733 = vmatprep.subr.mxu0 0.0
          %1734 = vmatpush1.msra.mxu0 0.0
          %1735 = vmatprep.subr.mxu0 0.0
          %1736 = vmatpush1.msra.mxu0 0.0
          %1737 = vmatprep.mubr.f32.mxu0 0.0
          %1738 = vmatmul.mubr.f32.gmra.mrb[0].mxu0 %v1671
          %v1739 = vpop.f32.mrb[0].mxu0
          %v1740 = vadd.f32 0.0, %v1739
          %v1741 = vpop.f32.mrb[0].mxu0
          %1742 = vdwg.mxu0
          %v1743 = vadd.f32 %v1668, %v1740
          %v1744 = vxor.u32 %v1743, 2147483648
          %v1745 = vmul.f32 %v1744, 1.442695
          %v1746 = vpow.pop %v1745
          %v1747 = vadd.f32 %v1746, 1.0
          %v1748 = vrcp.pop %v1747
          %v1749 = vmul.f32 1.0, %v1748
          %v1750 = vtanh.pop %v1743
          %v1751 = vld [vmem:[#allocation4] sm:$0xff]
          %1753 = vrot.lane.b32.xlu0 %v1751, 32
          %v1754 = vpop.permute.xlu0 %1753
          %v1756 = vmul.f32 %v1749, %v1754
          %1758 = vrot.lane.b32.xlu0 %v1750, 64
          %v1759 = vpop.permute.xlu0 %1758
          %v1761 = vmul.f32 %v1749, %v1759
          %1763 = vrot.lane.b32.xlu0 %v1761, 32
          %v1764 = vpop.permute.xlu0 %1763
          %v1766 = vadd.f32 %v1756, %v1764
          %v1767 = vtanh.pop %v1766
          %1769 = vrot.lane.b32.xlu0 %v1767, 64
          %v1770 = vpop.permute.xlu0 %1769
          %v1772 = vmul.f32 %v1749, %v1770
          %1774 = vrot.lane.b32.xlu0 %v1772, 32
          %v1775 = vpop.permute.xlu0 %1774
          %1777 = vst.msk [vmem:[#allocation3] sm:$0xff] %vm1551, %v1775
          %1779 = vrot.lane.b32.xlu0 %v1766, 96
          %v1780 = vpop.permute.xlu0 %1779
          %1782 = vst.msk [vmem:[#allocation4] sm:$0xff] %vm1551, %v1780
          %s1783 = scalar_lea.vmem %s395, 48 [#allocation11]
          %1784 = vst.msk [vmem:[%s1783] sm:$0xff] %vm1551, %v1775
          %s1785 = scalar_lea.vmem [#allocation2], 40
          %v1786 = vld [vmem:[%s1785] sm:$0xff]
          %v1787 = vld [vmem:[#allocation3] sm:$0xff]
          %v1789 = vsel %vm1551, %v1787, 0
          %1791 = vmatprep.subr.mxu0 0.0
          %1792 = vmatpush1.msra.mxu0 %v593
          %1793 = vmatprep.subr.mxu0 0.0
          %1794 = vmatpush1.msra.mxu0 %v594
          %1795 = vmatprep.subr.mxu0 0.0
          %1796 = vmatpush1.msra.mxu0 %v595
          %1797 = vmatprep.subr.mxu0 0.0
          %1798 = vmatpush1.msra.mxu0 %v596
          %1799 = vmatprep.subr.mxu0 0.0
          %1800 = vmatpush1.msra.mxu0 0.0
          %1801 = vmatprep.subr.mxu0 0.0
          %1802 = vmatpush1.msra.mxu0 0.0
          %1803 = vmatprep.subr.mxu0 0.0
          %1804 = vmatpush1.msra.mxu0 0.0
          %1805 = vmatprep.subr.mxu0 0.0
          %1806 = vmatpush1.msra.mxu0 0.0
          %1807 = vmatprep.subr.mxu0 0.0
          %1808 = vmatpush1.msra.mxu0 0.0
          %1809 = vmatprep.subr.mxu0 0.0
          %1810 = vmatpush1.msra.mxu0 0.0
          %1811 = vmatprep.subr.mxu0 0.0
          %1812 = vmatpush1.msra.mxu0 0.0
          %1813 = vmatprep.subr.mxu0 0.0
          %1814 = vmatpush1.msra.mxu0 0.0
          %1815 = vmatprep.subr.mxu0 0.0
          %1816 = vmatpush1.msra.mxu0 0.0
          %1817 = vmatprep.subr.mxu0 0.0
          %1818 = vmatpush1.msra.mxu0 0.0
          %1819 = vmatprep.subr.mxu0 0.0
          %1820 = vmatpush1.msra.mxu0 0.0
          %1821 = vmatprep.subr.mxu0 0.0
          %1822 = vmatpush1.msra.mxu0 0.0
          %1823 = vmatprep.subr.mxu0 0.0
          %1824 = vmatpush1.msra.mxu0 0.0
          %1825 = vmatprep.subr.mxu0 0.0
          %1826 = vmatpush1.msra.mxu0 0.0
          %1827 = vmatprep.subr.mxu0 0.0
          %1828 = vmatpush1.msra.mxu0 0.0
          %1829 = vmatprep.subr.mxu0 0.0
          %1830 = vmatpush1.msra.mxu0 0.0
          %1831 = vmatprep.subr.mxu0 0.0
          %1832 = vmatpush1.msra.mxu0 0.0
          %1833 = vmatprep.subr.mxu0 0.0
          %1834 = vmatpush1.msra.mxu0 0.0
          %1835 = vmatprep.subr.mxu0 0.0
          %1836 = vmatpush1.msra.mxu0 0.0
          %1837 = vmatprep.subr.mxu0 0.0
          %1838 = vmatpush1.msra.mxu0 0.0
          %1839 = vmatprep.subr.mxu0 0.0
          %1840 = vmatpush1.msra.mxu0 0.0
          %1841 = vmatprep.subr.mxu0 0.0
          %1842 = vmatpush1.msra.mxu0 0.0
          %1843 = vmatprep.subr.mxu0 0.0
          %1844 = vmatpush1.msra.mxu0 0.0
          %1845 = vmatprep.subr.mxu0 0.0
          %1846 = vmatpush1.msra.mxu0 0.0
          %1847 = vmatprep.subr.mxu0 0.0
          %1848 = vmatpush1.msra.mxu0 0.0
          %1849 = vmatprep.subr.mxu0 0.0
          %1850 = vmatpush1.msra.mxu0 0.0
          %1851 = vmatprep.subr.mxu0 0.0
          %1852 = vmatpush1.msra.mxu0 0.0
          %1853 = vmatprep.subr.mxu0 0.0
          %1854 = vmatpush1.msra.mxu0 0.0
          %1855 = vmatprep.mubr.f32.mxu0 0.0
          %1856 = vmatmul.mubr.f32.gmra.mrb[0].mxu0 %v1789
          %v1857 = vpop.f32.mrb[0].mxu0
          %v1858 = vadd.f32 0.0, %v1857
          %v1859 = vpop.f32.mrb[0].mxu0
          %1860 = vdwg.mxu0
          %v1861 = vadd.f32 %v1786, %v1858
          %v1862 = vxor.u32 %v1861, 2147483648
          %v1863 = vmul.f32 %v1862, 1.442695
          %v1864 = vpow.pop %v1863
          %v1865 = vadd.f32 %v1864, 1.0
          %v1866 = vrcp.pop %v1865
          %v1867 = vmul.f32 1.0, %v1866
          %v1868 = vtanh.pop %v1861
          %v1869 = vld [vmem:[#allocation4] sm:$0xff]
          %1871 = vrot.lane.b32.xlu0 %v1869, 32
          %v1872 = vpop.permute.xlu0 %1871
          %v1874 = vmul.f32 %v1867, %v1872
          %1876 = vrot.lane.b32.xlu0 %v1868, 64
          %v1877 = vpop.permute.xlu0 %1876
          %v1879 = vmul.f32 %v1867, %v1877
          %1881 = vrot.lane.b32.xlu0 %v1879, 32
          %v1882 = vpop.permute.xlu0 %1881
          %v1884 = vadd.f32 %v1874, %v1882
          %v1885 = vtanh.pop %v1884
          %1887 = vrot.lane.b32.xlu0 %v1885, 64
          %v1888 = vpop.permute.xlu0 %1887
          %v1890 = vmul.f32 %v1867, %v1888
          %1892 = vrot.lane.b32.xlu0 %v1890, 32
          %v1893 = vpop.permute.xlu0 %1892
          %1895 = vst.msk [vmem:[#allocation3] sm:$0xff] %vm1551, %v1893
          %1897 = vrot.lane.b32.xlu0 %v1884, 96
          %v1898 = vpop.permute.xlu0 %1897
          %1900 = vst.msk [vmem:[#allocation4] sm:$0xff] %vm1551, %v1898
          %s1901 = scalar_lea.vmem %s395, 40 [#allocation11]
          %1902 = vst.msk [vmem:[%s1901] sm:$0xff] %vm1551, %v1893
          %s1903 = scalar_lea.vmem [#allocation2], 32
          %v1904 = vld [vmem:[%s1903] sm:$0xff]
          %v1905 = vld [vmem:[#allocation3] sm:$0xff]
          %v1907 = vsel %vm1551, %v1905, 0
          %1909 = vmatprep.subr.mxu0 0.0
          %1910 = vmatpush1.msra.mxu0 %v593
          %1911 = vmatprep.subr.mxu0 0.0
          %1912 = vmatpush1.msra.mxu0 %v594
          %1913 = vmatprep.subr.mxu0 0.0
          %1914 = vmatpush1.msra.mxu0 %v595
          %1915 = vmatprep.subr.mxu0 0.0
          %1916 = vmatpush1.msra.mxu0 %v596
          %1917 = vmatprep.subr.mxu0 0.0
          %1918 = vmatpush1.msra.mxu0 0.0
          %1919 = vmatprep.subr.mxu0 0.0
          %1920 = vmatpush1.msra.mxu0 0.0
          %1921 = vmatprep.subr.mxu0 0.0
          %1922 = vmatpush1.msra.mxu0 0.0
          %1923 = vmatprep.subr.mxu0 0.0
          %1924 = vmatpush1.msra.mxu0 0.0
          %1925 = vmatprep.subr.mxu0 0.0
          %1926 = vmatpush1.msra.mxu0 0.0
          %1927 = vmatprep.subr.mxu0 0.0
          %1928 = vmatpush1.msra.mxu0 0.0
          %1929 = vmatprep.subr.mxu0 0.0
          %1930 = vmatpush1.msra.mxu0 0.0
          %1931 = vmatprep.subr.mxu0 0.0
          %1932 = vmatpush1.msra.mxu0 0.0
          %1933 = vmatprep.subr.mxu0 0.0
          %1934 = vmatpush1.msra.mxu0 0.0
          %1935 = vmatprep.subr.mxu0 0.0
          %1936 = vmatpush1.msra.mxu0 0.0
          %1937 = vmatprep.subr.mxu0 0.0
          %1938 = vmatpush1.msra.mxu0 0.0
          %1939 = vmatprep.subr.mxu0 0.0
          %1940 = vmatpush1.msra.mxu0 0.0
          %1941 = vmatprep.subr.mxu0 0.0
          %1942 = vmatpush1.msra.mxu0 0.0
          %1943 = vmatprep.subr.mxu0 0.0
          %1944 = vmatpush1.msra.mxu0 0.0
          %1945 = vmatprep.subr.mxu0 0.0
          %1946 = vmatpush1.msra.mxu0 0.0
          %1947 = vmatprep.subr.mxu0 0.0
          %1948 = vmatpush1.msra.mxu0 0.0
          %1949 = vmatprep.subr.mxu0 0.0
          %1950 = vmatpush1.msra.mxu0 0.0
          %1951 = vmatprep.subr.mxu0 0.0
          %1952 = vmatpush1.msra.mxu0 0.0
          %1953 = vmatprep.subr.mxu0 0.0
          %1954 = vmatpush1.msra.mxu0 0.0
          %1955 = vmatprep.subr.mxu0 0.0
          %1956 = vmatpush1.msra.mxu0 0.0
          %1957 = vmatprep.subr.mxu0 0.0
          %1958 = vmatpush1.msra.mxu0 0.0
          %1959 = vmatprep.subr.mxu0 0.0
          %1960 = vmatpush1.msra.mxu0 0.0
          %1961 = vmatprep.subr.mxu0 0.0
          %1962 = vmatpush1.msra.mxu0 0.0
          %1963 = vmatprep.subr.mxu0 0.0
          %1964 = vmatpush1.msra.mxu0 0.0
          %1965 = vmatprep.subr.mxu0 0.0
          %1966 = vmatpush1.msra.mxu0 0.0
          %1967 = vmatprep.subr.mxu0 0.0
          %1968 = vmatpush1.msra.mxu0 0.0
          %1969 = vmatprep.subr.mxu0 0.0
          %1970 = vmatpush1.msra.mxu0 0.0
          %1971 = vmatprep.subr.mxu0 0.0
          %1972 = vmatpush1.msra.mxu0 0.0
          %1973 = vmatprep.mubr.f32.mxu0 0.0
          %1974 = vmatmul.mubr.f32.gmra.mrb[0].mxu0 %v1907
          %v1975 = vpop.f32.mrb[0].mxu0
          %v1976 = vadd.f32 0.0, %v1975
          %v1977 = vpop.f32.mrb[0].mxu0
          %1978 = vdwg.mxu0
          %v1979 = vadd.f32 %v1904, %v1976
          %v1980 = vxor.u32 %v1979, 2147483648
          %v1981 = vmul.f32 %v1980, 1.442695
          %v1982 = vpow.pop %v1981
          %v1983 = vadd.f32 %v1982, 1.0
          %v1984 = vrcp.pop %v1983
          %v1985 = vmul.f32 1.0, %v1984
          %v1986 = vtanh.pop %v1979
          %v1987 = vld [vmem:[#allocation4] sm:$0xff]
          %1989 = vrot.lane.b32.xlu0 %v1987, 32
          %v1990 = vpop.permute.xlu0 %1989
          %v1992 = vmul.f32 %v1985, %v1990
          %1994 = vrot.lane.b32.xlu0 %v1986, 64
          %v1995 = vpop.permute.xlu0 %1994
          %v1997 = vmul.f32 %v1985, %v1995
          %1999 = vrot.lane.b32.xlu0 %v1997, 32
          %v2000 = vpop.permute.xlu0 %1999
          %v2002 = vadd.f32 %v1992, %v2000
          %v2003 = vtanh.pop %v2002
          %2005 = vrot.lane.b32.xlu0 %v2003, 64
          %v2006 = vpop.permute.xlu0 %2005
          %v2008 = vmul.f32 %v1985, %v2006
          %2010 = vrot.lane.b32.xlu0 %v2008, 32
          %v2011 = vpop.permute.xlu0 %2010
          %2013 = vst.msk [vmem:[#allocation3] sm:$0xff] %vm1551, %v2011
          %2015 = vrot.lane.b32.xlu0 %v2002, 96
          %v2016 = vpop.permute.xlu0 %2015
          %2018 = vst.msk [vmem:[#allocation4] sm:$0xff] %vm1551, %v2016
          %s2019 = scalar_lea.vmem %s395, 32 [#allocation11]
          %2020 = vst.msk [vmem:[%s2019] sm:$0xff] %vm1551, %v2011
          %s2021 = scalar_lea.vmem [#allocation2], 24
          %v2022 = vld [vmem:[%s2021] sm:$0xff]
          %v2023 = vld [vmem:[#allocation3] sm:$0xff]
          %v2025 = vsel %vm1551, %v2023, 0
          %2027 = vmatprep.subr.mxu0 0.0
          %2028 = vmatpush1.msra.mxu0 %v593
          %2029 = vmatprep.subr.mxu0 0.0
          %2030 = vmatpush1.msra.mxu0 %v594
          %2031 = vmatprep.subr.mxu0 0.0
          %2032 = vmatpush1.msra.mxu0 %v595
          %2033 = vmatprep.subr.mxu0 0.0
          %2034 = vmatpush1.msra.mxu0 %v596
          %2035 = vmatprep.subr.mxu0 0.0
          %2036 = vmatpush1.msra.mxu0 0.0
          %2037 = vmatprep.subr.mxu0 0.0
          %2038 = vmatpush1.msra.mxu0 0.0
          %2039 = vmatprep.subr.mxu0 0.0
          %2040 = vmatpush1.msra.mxu0 0.0
          %2041 = vmatprep.subr.mxu0 0.0
          %2042 = vmatpush1.msra.mxu0 0.0
          %2043 = vmatprep.subr.mxu0 0.0
          %2044 = vmatpush1.msra.mxu0 0.0
          %2045 = vmatprep.subr.mxu0 0.0
          %2046 = vmatpush1.msra.mxu0 0.0
          %2047 = vmatprep.subr.mxu0 0.0
          %2048 = vmatpush1.msra.mxu0 0.0
          %2049 = vmatprep.subr.mxu0 0.0
          %2050 = vmatpush1.msra.mxu0 0.0
          %2051 = vmatprep.subr.mxu0 0.0
          %2052 = vmatpush1.msra.mxu0 0.0
          %2053 = vmatprep.subr.mxu0 0.0
          %2054 = vmatpush1.msra.mxu0 0.0
          %2055 = vmatprep.subr.mxu0 0.0
          %2056 = vmatpush1.msra.mxu0 0.0
          %2057 = vmatprep.subr.mxu0 0.0
          %2058 = vmatpush1.msra.mxu0 0.0
          %2059 = vmatprep.subr.mxu0 0.0
          %2060 = vmatpush1.msra.mxu0 0.0
          %2061 = vmatprep.subr.mxu0 0.0
          %2062 = vmatpush1.msra.mxu0 0.0
          %2063 = vmatprep.subr.mxu0 0.0
          %2064 = vmatpush1.msra.mxu0 0.0
          %2065 = vmatprep.subr.mxu0 0.0
          %2066 = vmatpush1.msra.mxu0 0.0
          %2067 = vmatprep.subr.mxu0 0.0
          %2068 = vmatpush1.msra.mxu0 0.0
          %2069 = vmatprep.subr.mxu0 0.0
          %2070 = vmatpush1.msra.mxu0 0.0
          %2071 = vmatprep.subr.mxu0 0.0
          %2072 = vmatpush1.msra.mxu0 0.0
          %2073 = vmatprep.subr.mxu0 0.0
          %2074 = vmatpush1.msra.mxu0 0.0
          %2075 = vmatprep.subr.mxu0 0.0
          %2076 = vmatpush1.msra.mxu0 0.0
          %2077 = vmatprep.subr.mxu0 0.0
          %2078 = vmatpush1.msra.mxu0 0.0
          %2079 = vmatprep.subr.mxu0 0.0
          %2080 = vmatpush1.msra.mxu0 0.0
          %2081 = vmatprep.subr.mxu0 0.0
          %2082 = vmatpush1.msra.mxu0 0.0
          %2083 = vmatprep.subr.mxu0 0.0
          %2084 = vmatpush1.msra.mxu0 0.0
          %2085 = vmatprep.subr.mxu0 0.0
          %2086 = vmatpush1.msra.mxu0 0.0
          %2087 = vmatprep.subr.mxu0 0.0
          %2088 = vmatpush1.msra.mxu0 0.0
          %2089 = vmatprep.subr.mxu0 0.0
          %2090 = vmatpush1.msra.mxu0 0.0
          %2091 = vmatprep.mubr.f32.mxu0 0.0
          %2092 = vmatmul.mubr.f32.gmra.mrb[0].mxu0 %v2025
          %v2093 = vpop.f32.mrb[0].mxu0
          %v2094 = vadd.f32 0.0, %v2093
          %v2095 = vpop.f32.mrb[0].mxu0
          %2096 = vdwg.mxu0
          %v2097 = vadd.f32 %v2022, %v2094
          %v2098 = vxor.u32 %v2097, 2147483648
          %v2099 = vmul.f32 %v2098, 1.442695
          %v2100 = vpow.pop %v2099
          %v2101 = vadd.f32 %v2100, 1.0
          %v2102 = vrcp.pop %v2101
          %v2103 = vmul.f32 1.0, %v2102
          %v2104 = vtanh.pop %v2097
          %v2105 = vld [vmem:[#allocation4] sm:$0xff]
          %2107 = vrot.lane.b32.xlu0 %v2105, 32
          %v2108 = vpop.permute.xlu0 %2107
          %v2110 = vmul.f32 %v2103, %v2108
          %2112 = vrot.lane.b32.xlu0 %v2104, 64
          %v2113 = vpop.permute.xlu0 %2112
          %v2115 = vmul.f32 %v2103, %v2113
          %2117 = vrot.lane.b32.xlu0 %v2115, 32
          %v2118 = vpop.permute.xlu0 %2117
          %v2120 = vadd.f32 %v2110, %v2118
          %v2121 = vtanh.pop %v2120
          %2123 = vrot.lane.b32.xlu0 %v2121, 64
          %v2124 = vpop.permute.xlu0 %2123
          %v2126 = vmul.f32 %v2103, %v2124
          %2128 = vrot.lane.b32.xlu0 %v2126, 32
          %v2129 = vpop.permute.xlu0 %2128
          %2131 = vst.msk [vmem:[#allocation3] sm:$0xff] %vm1551, %v2129
          %2133 = vrot.lane.b32.xlu0 %v2120, 96
          %v2134 = vpop.permute.xlu0 %2133
          %2136 = vst.msk [vmem:[#allocation4] sm:$0xff] %vm1551, %v2134
          %s2137 = scalar_lea.vmem %s395, 24 [#allocation11]
          %2138 = vst.msk [vmem:[%s2137] sm:$0xff] %vm1551, %v2129
          %s2139 = scalar_lea.vmem [#allocation2], 16
          %v2140 = vld [vmem:[%s2139] sm:$0xff]
          %v2141 = vld [vmem:[#allocation3] sm:$0xff]
          %v2143 = vsel %vm1551, %v2141, 0
          %2145 = vmatprep.subr.mxu0 0.0
          %2146 = vmatpush1.msra.mxu0 %v593
          %2147 = vmatprep.subr.mxu0 0.0
          %2148 = vmatpush1.msra.mxu0 %v594
          %2149 = vmatprep.subr.mxu0 0.0
          %2150 = vmatpush1.msra.mxu0 %v595
          %2151 = vmatprep.subr.mxu0 0.0
          %2152 = vmatpush1.msra.mxu0 %v596
          %2153 = vmatprep.subr.mxu0 0.0
          %2154 = vmatpush1.msra.mxu0 0.0
          %2155 = vmatprep.subr.mxu0 0.0
          %2156 = vmatpush1.msra.mxu0 0.0
          %2157 = vmatprep.subr.mxu0 0.0
          %2158 = vmatpush1.msra.mxu0 0.0
          %2159 = vmatprep.subr.mxu0 0.0
          %2160 = vmatpush1.msra.mxu0 0.0
          %2161 = vmatprep.subr.mxu0 0.0
          %2162 = vmatpush1.msra.mxu0 0.0
          %2163 = vmatprep.subr.mxu0 0.0
          %2164 = vmatpush1.msra.mxu0 0.0
          %2165 = vmatprep.subr.mxu0 0.0
          %2166 = vmatpush1.msra.mxu0 0.0
          %2167 = vmatprep.subr.mxu0 0.0
          %2168 = vmatpush1.msra.mxu0 0.0
          %2169 = vmatprep.subr.mxu0 0.0
          %2170 = vmatpush1.msra.mxu0 0.0
          %2171 = vmatprep.subr.mxu0 0.0
          %2172 = vmatpush1.msra.mxu0 0.0
          %2173 = vmatprep.subr.mxu0 0.0
          %2174 = vmatpush1.msra.mxu0 0.0
          %2175 = vmatprep.subr.mxu0 0.0
          %2176 = vmatpush1.msra.mxu0 0.0
          %2177 = vmatprep.subr.mxu0 0.0
          %2178 = vmatpush1.msra.mxu0 0.0
          %2179 = vmatprep.subr.mxu0 0.0
          %2180 = vmatpush1.msra.mxu0 0.0
          %2181 = vmatprep.subr.mxu0 0.0
          %2182 = vmatpush1.msra.mxu0 0.0
          %2183 = vmatprep.subr.mxu0 0.0
          %2184 = vmatpush1.msra.mxu0 0.0
          %2185 = vmatprep.subr.mxu0 0.0
          %2186 = vmatpush1.msra.mxu0 0.0
          %2187 = vmatprep.subr.mxu0 0.0
          %2188 = vmatpush1.msra.mxu0 0.0
          %2189 = vmatprep.subr.mxu0 0.0
          %2190 = vmatpush1.msra.mxu0 0.0
          %2191 = vmatprep.subr.mxu0 0.0
          %2192 = vmatpush1.msra.mxu0 0.0
          %2193 = vmatprep.subr.mxu0 0.0
          %2194 = vmatpush1.msra.mxu0 0.0
          %2195 = vmatprep.subr.mxu0 0.0
          %2196 = vmatpush1.msra.mxu0 0.0
          %2197 = vmatprep.subr.mxu0 0.0
          %2198 = vmatpush1.msra.mxu0 0.0
          %2199 = vmatprep.subr.mxu0 0.0
          %2200 = vmatpush1.msra.mxu0 0.0
          %2201 = vmatprep.subr.mxu0 0.0
          %2202 = vmatpush1.msra.mxu0 0.0
          %2203 = vmatprep.subr.mxu0 0.0
          %2204 = vmatpush1.msra.mxu0 0.0
          %2205 = vmatprep.subr.mxu0 0.0
          %2206 = vmatpush1.msra.mxu0 0.0
          %2207 = vmatprep.subr.mxu0 0.0
          %2208 = vmatpush1.msra.mxu0 0.0
          %2209 = vmatprep.mubr.f32.mxu0 0.0
          %2210 = vmatmul.mubr.f32.gmra.mrb[0].mxu0 %v2143
          %v2211 = vpop.f32.mrb[0].mxu0
          %v2212 = vadd.f32 0.0, %v2211
          %v2213 = vpop.f32.mrb[0].mxu0
          %2214 = vdwg.mxu0
          %v2215 = vadd.f32 %v2140, %v2212
          %v2216 = vxor.u32 %v2215, 2147483648
          %v2217 = vmul.f32 %v2216, 1.442695
          %v2218 = vpow.pop %v2217
          %v2219 = vadd.f32 %v2218, 1.0
          %v2220 = vrcp.pop %v2219
          %v2221 = vmul.f32 1.0, %v2220
          %v2222 = vtanh.pop %v2215
          %v2223 = vld [vmem:[#allocation4] sm:$0xff]
          %2225 = vrot.lane.b32.xlu0 %v2223, 32
          %v2226 = vpop.permute.xlu0 %2225
          %v2228 = vmul.f32 %v2221, %v2226
          %2230 = vrot.lane.b32.xlu0 %v2222, 64
          %v2231 = vpop.permute.xlu0 %2230
          %v2233 = vmul.f32 %v2221, %v2231
          %2235 = vrot.lane.b32.xlu0 %v2233, 32
          %v2236 = vpop.permute.xlu0 %2235
          %v2238 = vadd.f32 %v2228, %v2236
          %v2239 = vtanh.pop %v2238
          %2241 = vrot.lane.b32.xlu0 %v2239, 64
          %v2242 = vpop.permute.xlu0 %2241
          %v2244 = vmul.f32 %v2221, %v2242
          %2246 = vrot.lane.b32.xlu0 %v2244, 32
          %v2247 = vpop.permute.xlu0 %2246
          %2249 = vst.msk [vmem:[#allocation3] sm:$0xff] %vm1551, %v2247
          %2251 = vrot.lane.b32.xlu0 %v2238, 96
          %v2252 = vpop.permute.xlu0 %2251
          %2254 = vst.msk [vmem:[#allocation4] sm:$0xff] %vm1551, %v2252
          %s2255 = scalar_lea.vmem %s395, 16 [#allocation11]
          %2256 = vst.msk [vmem:[%s2255] sm:$0xff] %vm1551, %v2247
          %s2257 = scalar_lea.vmem [#allocation2], 8
          %v2258 = vld [vmem:[%s2257] sm:$0xff]
          %v2259 = vld [vmem:[#allocation3] sm:$0xff]
          %v2261 = vsel %vm1551, %v2259, 0
          %2263 = vmatprep.subr.mxu0 0.0
          %2264 = vmatpush1.msra.mxu0 %v593
          %2265 = vmatprep.subr.mxu0 0.0
          %2266 = vmatpush1.msra.mxu0 %v594
          %2267 = vmatprep.subr.mxu0 0.0
          %2268 = vmatpush1.msra.mxu0 %v595
          %2269 = vmatprep.subr.mxu0 0.0
          %2270 = vmatpush1.msra.mxu0 %v596
          %2271 = vmatprep.subr.mxu0 0.0
          %2272 = vmatpush1.msra.mxu0 0.0
          %2273 = vmatprep.subr.mxu0 0.0
          %2274 = vmatpush1.msra.mxu0 0.0
          %2275 = vmatprep.subr.mxu0 0.0
          %2276 = vmatpush1.msra.mxu0 0.0
          %2277 = vmatprep.subr.mxu0 0.0
          %2278 = vmatpush1.msra.mxu0 0.0
          %2279 = vmatprep.subr.mxu0 0.0
          %2280 = vmatpush1.msra.mxu0 0.0
          %2281 = vmatprep.subr.mxu0 0.0
          %2282 = vmatpush1.msra.mxu0 0.0
          %2283 = vmatprep.subr.mxu0 0.0
          %2284 = vmatpush1.msra.mxu0 0.0
          %2285 = vmatprep.subr.mxu0 0.0
          %2286 = vmatpush1.msra.mxu0 0.0
          %2287 = vmatprep.subr.mxu0 0.0
          %2288 = vmatpush1.msra.mxu0 0.0
          %2289 = vmatprep.subr.mxu0 0.0
          %2290 = vmatpush1.msra.mxu0 0.0
          %2291 = vmatprep.subr.mxu0 0.0
          %2292 = vmatpush1.msra.mxu0 0.0
          %2293 = vmatprep.subr.mxu0 0.0
          %2294 = vmatpush1.msra.mxu0 0.0
          %2295 = vmatprep.subr.mxu0 0.0
          %2296 = vmatpush1.msra.mxu0 0.0
          %2297 = vmatprep.subr.mxu0 0.0
          %2298 = vmatpush1.msra.mxu0 0.0
          %2299 = vmatprep.subr.mxu0 0.0
          %2300 = vmatpush1.msra.mxu0 0.0
          %2301 = vmatprep.subr.mxu0 0.0
          %2302 = vmatpush1.msra.mxu0 0.0
          %2303 = vmatprep.subr.mxu0 0.0
          %2304 = vmatpush1.msra.mxu0 0.0
          %2305 = vmatprep.subr.mxu0 0.0
          %2306 = vmatpush1.msra.mxu0 0.0
          %2307 = vmatprep.subr.mxu0 0.0
          %2308 = vmatpush1.msra.mxu0 0.0
          %2309 = vmatprep.subr.mxu0 0.0
          %2310 = vmatpush1.msra.mxu0 0.0
          %2311 = vmatprep.subr.mxu0 0.0
          %2312 = vmatpush1.msra.mxu0 0.0
          %2313 = vmatprep.subr.mxu0 0.0
          %2314 = vmatpush1.msra.mxu0 0.0
          %2315 = vmatprep.subr.mxu0 0.0
          %2316 = vmatpush1.msra.mxu0 0.0
          %2317 = vmatprep.subr.mxu0 0.0
          %2318 = vmatpush1.msra.mxu0 0.0
          %2319 = vmatprep.subr.mxu0 0.0
          %2320 = vmatpush1.msra.mxu0 0.0
          %2321 = vmatprep.subr.mxu0 0.0
          %2322 = vmatpush1.msra.mxu0 0.0
          %2323 = vmatprep.subr.mxu0 0.0
          %2324 = vmatpush1.msra.mxu0 0.0
          %2325 = vmatprep.subr.mxu0 0.0
          %2326 = vmatpush1.msra.mxu0 0.0
          %2327 = vmatprep.mubr.f32.mxu0 0.0
          %2328 = vmatmul.mubr.f32.gmra.mrb[0].mxu0 %v2261
          %v2329 = vpop.f32.mrb[0].mxu0
          %v2330 = vadd.f32 0.0, %v2329
          %v2331 = vpop.f32.mrb[0].mxu0
          %2332 = vdwg.mxu0
          %v2333 = vadd.f32 %v2258, %v2330
          %v2334 = vxor.u32 %v2333, 2147483648
          %v2335 = vmul.f32 %v2334, 1.442695
          %v2336 = vpow.pop %v2335
          %v2337 = vadd.f32 %v2336, 1.0
          %v2338 = vrcp.pop %v2337
          %v2339 = vmul.f32 1.0, %v2338
          %v2340 = vtanh.pop %v2333
          %v2341 = vld [vmem:[#allocation4] sm:$0xff]
          %2343 = vrot.lane.b32.xlu0 %v2341, 32
          %v2344 = vpop.permute.xlu0 %2343
          %v2346 = vmul.f32 %v2339, %v2344
          %2348 = vrot.lane.b32.xlu0 %v2340, 64
          %v2349 = vpop.permute.xlu0 %2348
          %v2351 = vmul.f32 %v2339, %v2349
          %2353 = vrot.lane.b32.xlu0 %v2351, 32
          %v2354 = vpop.permute.xlu0 %2353
          %v2356 = vadd.f32 %v2346, %v2354
          %v2357 = vtanh.pop %v2356
          %2359 = vrot.lane.b32.xlu0 %v2357, 64
          %v2360 = vpop.permute.xlu0 %2359
          %v2362 = vmul.f32 %v2339, %v2360
          %2364 = vrot.lane.b32.xlu0 %v2362, 32
          %v2365 = vpop.permute.xlu0 %2364
          %2367 = vst.msk [vmem:[#allocation3] sm:$0xff] %vm1551, %v2365
          %2369 = vrot.lane.b32.xlu0 %v2356, 96
          %v2370 = vpop.permute.xlu0 %2369
          %2372 = vst.msk [vmem:[#allocation4] sm:$0xff] %vm1551, %v2370
          %s2373 = scalar_lea.vmem %s395, 8 [#allocation11]
          %2374 = vst.msk [vmem:[%s2373] sm:$0xff] %vm1551, %v2365
          %v2375 = vld [vmem:[#allocation2] sm:$0xff]
          %v2376 = vld [vmem:[#allocation3] sm:$0xff]
          %v2378 = vsel %vm1551, %v2376, 0
          %2380 = vmatprep.subr.mxu0 0.0
          %2381 = vmatpush1.msra.mxu0 %v593
          %2382 = vmatprep.subr.mxu0 0.0
          %2383 = vmatpush1.msra.mxu0 %v594
          %2384 = vmatprep.subr.mxu0 0.0
          %2385 = vmatpush1.msra.mxu0 %v595
          %2386 = vmatprep.subr.mxu0 0.0
          %2387 = vmatpush1.msra.mxu0 %v596
          %2388 = vmatprep.subr.mxu0 0.0
          %2389 = vmatpush1.msra.mxu0 0.0
          %2390 = vmatprep.subr.mxu0 0.0
          %2391 = vmatpush1.msra.mxu0 0.0
          %2392 = vmatprep.subr.mxu0 0.0
          %2393 = vmatpush1.msra.mxu0 0.0
          %2394 = vmatprep.subr.mxu0 0.0
          %2395 = vmatpush1.msra.mxu0 0.0
          %2396 = vmatprep.subr.mxu0 0.0
          %2397 = vmatpush1.msra.mxu0 0.0
          %2398 = vmatprep.subr.mxu0 0.0
          %2399 = vmatpush1.msra.mxu0 0.0
          %2400 = vmatprep.subr.mxu0 0.0
          %2401 = vmatpush1.msra.mxu0 0.0
          %2402 = vmatprep.subr.mxu0 0.0
          %2403 = vmatpush1.msra.mxu0 0.0
          %2404 = vmatprep.subr.mxu0 0.0
          %2405 = vmatpush1.msra.mxu0 0.0
          %2406 = vmatprep.subr.mxu0 0.0
          %2407 = vmatpush1.msra.mxu0 0.0
          %2408 = vmatprep.subr.mxu0 0.0
          %2409 = vmatpush1.msra.mxu0 0.0
          %2410 = vmatprep.subr.mxu0 0.0
          %2411 = vmatpush1.msra.mxu0 0.0
          %2412 = vmatprep.subr.mxu0 0.0
          %2413 = vmatpush1.msra.mxu0 0.0
          %2414 = vmatprep.subr.mxu0 0.0
          %2415 = vmatpush1.msra.mxu0 0.0
          %2416 = vmatprep.subr.mxu0 0.0
          %2417 = vmatpush1.msra.mxu0 0.0
          %2418 = vmatprep.subr.mxu0 0.0
          %2419 = vmatpush1.msra.mxu0 0.0
          %2420 = vmatprep.subr.mxu0 0.0
          %2421 = vmatpush1.msra.mxu0 0.0
          %2422 = vmatprep.subr.mxu0 0.0
          %2423 = vmatpush1.msra.mxu0 0.0
          %2424 = vmatprep.subr.mxu0 0.0
          %2425 = vmatpush1.msra.mxu0 0.0
          %2426 = vmatprep.subr.mxu0 0.0
          %2427 = vmatpush1.msra.mxu0 0.0
          %2428 = vmatprep.subr.mxu0 0.0
          %2429 = vmatpush1.msra.mxu0 0.0
          %2430 = vmatprep.subr.mxu0 0.0
          %2431 = vmatpush1.msra.mxu0 0.0
          %2432 = vmatprep.subr.mxu0 0.0
          %2433 = vmatpush1.msra.mxu0 0.0
          %2434 = vmatprep.subr.mxu0 0.0
          %2435 = vmatpush1.msra.mxu0 0.0
          %2436 = vmatprep.subr.mxu0 0.0
          %2437 = vmatpush1.msra.mxu0 0.0
          %2438 = vmatprep.subr.mxu0 0.0
          %2439 = vmatpush1.msra.mxu0 0.0
          %2440 = vmatprep.subr.mxu0 0.0
          %2441 = vmatpush1.msra.mxu0 0.0
          %2442 = vmatprep.subr.mxu0 0.0
          %2443 = vmatpush1.msra.mxu0 0.0
          %2444 = vmatprep.mubr.f32.mxu0 0.0
          %2445 = vmatmul.mubr.f32.gmra.mrb[0].mxu0 %v2378
          %v2446 = vpop.f32.mrb[0].mxu0
          %v2447 = vadd.f32 0.0, %v2446
          %v2448 = vpop.f32.mrb[0].mxu0
          %2449 = vdwg.mxu0
          %v2450 = vadd.f32 %v2375, %v2447
          %v2451 = vxor.u32 %v2450, 2147483648
          %v2452 = vmul.f32 %v2451, 1.442695
          %v2453 = vpow.pop %v2452
          %v2454 = vadd.f32 %v2453, 1.0
          %v2455 = vrcp.pop %v2454
          %v2456 = vmul.f32 1.0, %v2455
          %v2457 = vtanh.pop %v2450
          %v2458 = vld [vmem:[#allocation4] sm:$0xff]
          %2460 = vrot.lane.b32.xlu0 %v2458, 32
          %v2461 = vpop.permute.xlu0 %2460
          %v2463 = vmul.f32 %v2456, %v2461
          %2465 = vrot.lane.b32.xlu0 %v2457, 64
          %v2466 = vpop.permute.xlu0 %2465
          %v2468 = vmul.f32 %v2456, %v2466
          %2470 = vrot.lane.b32.xlu0 %v2468, 32
          %v2471 = vpop.permute.xlu0 %2470
          %v2473 = vadd.f32 %v2463, %v2471
          %v2474 = vtanh.pop %v2473
          %2476 = vrot.lane.b32.xlu0 %v2474, 64
          %v2477 = vpop.permute.xlu0 %2476
          %v2479 = vmul.f32 %v2456, %v2477
          %2481 = vrot.lane.b32.xlu0 %v2479, 32
          %v2482 = vpop.permute.xlu0 %2481
          %2484 = vst.msk [vmem:[#allocation3] sm:$0xff] %vm1551, %v2482
          %2486 = vrot.lane.b32.xlu0 %v2473, 96
          %v2487 = vpop.permute.xlu0 %2486
          %2489 = vst.msk [vmem:[#allocation4] sm:$0xff] %vm1551, %v2487
          %2490 = vst.msk [vmem:[%s395] sm:$0xff] %vm1551, %v2482
        $region60: #{tpu_custom_call.1} parent=35 // pred_fallthru
          _
        // Predicated region
        $region61: #{tpu_custom_call.1} parent=35 // pred_check
          %p2491 = pneg %p423
        $region62: #{tpu_custom_call.1} parent=35 // pred_check_branch
          %2493 = sbr.rel (%p2491) target = $region64
        $region63: #{tpu_custom_call.1} parent=35 // pred_region
          %v2494 = vld [vmem:[#allocation3] sm:$0xff]
          %vm2495 = vcmask 261120
          %2496 = vst.msk [vmem:[%s402] sm:$0xff] %vm2495, %v2494
          %v2497 = vld [vmem:[#allocation4] sm:$0xff]
          %2498 = vst.msk [vmem:[%s409] sm:$0xff] %vm2495, %v2497
        $region64: #{tpu_custom_call.1} parent=35 // pred_fallthru
          _
        %s2499 = sand.u32 %s172, 1
        %s2500 = scalar_lea.sflag [#allocation7], %s2499
        %s2501 = sand.u32 %s172, 1
        %s2502 = smul.addr %s2501, 64
        %s2503 = scalar_lea.vmem [#allocation11], %s2502
        %s2504 = sand.u32 %s30, 1
        %s2505 = scalar_lea.sflag [#allocation13], %s2504
        %s2506 = sand.u32 %s198, 1
        %s2507 = smul.addr %s2506, 8
        %s2508 = scalar_lea.vmem [#allocation12], %s2507
        %s2509 = sand.u32 %s30, 1
        %s2510 = scalar_lea.sflag [#allocation13], %s2509
        %s2511 = sand.u32 %s224, 1
        %s2512 = smul.addr %s2511, 8
        %s2513 = scalar_lea.vmem [#allocation14], %s2512
        // Predicated region
        $region65: #{tpu_custom_call.1} parent=35 // pred_check
          %p2514 = pneg %p182
        $region66: #{tpu_custom_call.1} parent=35 // pred_check_branch
          %2516 = sbr.rel (%p2514) target = $region68
        $region67: #{tpu_custom_call.1} parent=35 // pred_region
          %s2517 = smul.u32 %s35, 2
          %s2518 = ssub.s32 0, %s2517
          %s2519 = smul.u32 %s34, %s2518
          %s2520 = sadd.s32 %s35, %s2519
          %s2521 = smul.u32 8, %s2520
          %s2523 = ssub.s32 1024, 1024
          %2524 = vsyncadd %s2500, %s2523
          %s2525 = smul.addr %s34, 8
          %s2526 = sadd.s32 %s2521, %s2525
          %s2527 = smul.addr %s2526, 128
          %s2528 = scalar_lea.hbm %s4, %s2527
          %s2529 = sshll.u32 %s2503, 4
          %s2530 = int_to_ptr.vmem [resolvable:$true] %s2529
          %2535 = dma.vmem_to_hbm [thread:$0]  %s2530, 1024, %s2528, %s2500, 128, 128, 8
        $region68: #{tpu_custom_call.1} parent=35 // pred_fallthru
          _
        // Predicated region
        $region69: #{tpu_custom_call.1} parent=35 // pred_check
          %p2536 = pneg %p208
        $region70: #{tpu_custom_call.1} parent=35 // pred_check_branch
          %2538 = sbr.rel (%p2536) target = $region72
        $region71: #{tpu_custom_call.1} parent=35 // pred_region
          %s2540 = ssub.s32 128, 128
          %2541 = vsyncadd %s2505, %s2540
          %s2542 = smul.addr %s34, 128
          %s2543 = scalar_lea.hbm %s5, %s2542
          %s2545 = sshll.u32 %s2508, 4
          %s2546 = int_to_ptr.vmem [resolvable:$true] %s2545
          %2548 = dma.vmem_to_hbm [thread:$0]  %s2546, 128, %s2543, %s2505
        $region72: #{tpu_custom_call.1} parent=35 // pred_fallthru
          _
        // Predicated region
        $region73: #{tpu_custom_call.1} parent=35 // pred_check
          %p2549 = pneg %p234
        $region74: #{tpu_custom_call.1} parent=35 // pred_check_branch
          %2551 = sbr.rel (%p2549) target = $region76
        $region75: #{tpu_custom_call.1} parent=35 // pred_region
          %s2553 = ssub.s32 128, 128
          %2554 = vsyncadd %s2510, %s2553
          %s2555 = smul.addr %s34, 128
          %s2556 = scalar_lea.hbm %s6, %s2555
          %s2558 = sshll.u32 %s2513, 4
          %s2559 = int_to_ptr.vmem [resolvable:$true] %s2558
          %2561 = dma.vmem_to_hbm [thread:$0]  %s2559, 128, %s2556, %s2510
        $region76: #{tpu_custom_call.1} parent=35 // pred_fallthru
          _
      $region36: #{tpu_custom_call.1} parent=5 // pred_fallthru
        _
      %p2562 = scmp.le.s32.totalorder 2, %s25
      // Predicated region
      $region77: #{tpu_custom_call.1} parent=5 // pred_check
        %p2563 = pneg %p2562
      $region78: #{tpu_custom_call.1} parent=5 // pred_check_branch
        %2565 = sbr.rel (%p2563) target = $region80
      $region79: #{tpu_custom_call.1} parent=5 // pred_region
        %s2566 = ssub.s32 %s25, 2
        // Predicated region
        $region81: #{tpu_custom_call.1} parent=79 // pred_check
          %p2567 = pneg %p188
        $region82: #{tpu_custom_call.1} parent=79 // pred_check_branch
          %2569 = sbr.rel (%p2567) target = $region84
        $region83: #{tpu_custom_call.1} parent=79 // pred_region
          %s2570 = sand.u32 %s173, 1
          %s2571 = scalar_lea.sflag [#allocation7], %s2570
          %s2572 = sand.u32 %s173, 1
          %s2573 = smul.addr %s2572, 64
          %s2574 = scalar_lea.vmem [#allocation11], %s2573
          %2575 = dma.done %s2571, 1024
        $region84: #{tpu_custom_call.1} parent=79 // pred_fallthru
          _
        // Predicated region
        $region85: #{tpu_custom_call.1} parent=79 // pred_check
          %p2576 = pneg %p214
        $region86: #{tpu_custom_call.1} parent=79 // pred_check_branch
          %2578 = sbr.rel (%p2576) target = $region88
        $region87: #{tpu_custom_call.1} parent=79 // pred_region
          %s2579 = sand.u32 %s31, 1
          %s2580 = scalar_lea.sflag [#allocation13], %s2579
          %s2581 = sand.u32 %s199, 1
          %s2582 = smul.addr %s2581, 8
          %s2583 = scalar_lea.vmem [#allocation12], %s2582
          %2584 = dma.done %s2580, 128
        $region88: #{tpu_custom_call.1} parent=79 // pred_fallthru
          _
        // Predicated region
        $region89: #{tpu_custom_call.1} parent=79 // pred_check
          %p2585 = pneg %p240
        $region90: #{tpu_custom_call.1} parent=79 // pred_check_branch
          %2587 = sbr.rel (%p2585) target = $region92
        $region91: #{tpu_custom_call.1} parent=79 // pred_region
          %s2588 = sand.u32 %s31, 1
          %s2589 = scalar_lea.sflag [#allocation13], %s2588
          %s2590 = sand.u32 %s225, 1
          %s2591 = smul.addr %s2590, 8
          %s2592 = scalar_lea.vmem [#allocation14], %s2591
          %2593 = dma.done %s2589, 128
        $region92: #{tpu_custom_call.1} parent=79 // pred_fallthru
          _
      $region80: #{tpu_custom_call.1} parent=5 // pred_fallthru
        _
    $region6: #{tpu_custom_call.1} parent=1 // loop_footer
      %s29 = sadd.s32 1, %s25
    $region7: #{tpu_custom_call.1} parent=1 // loop_footer_branch
      %24 = sbr.rel target = $region3
    $region8: #{tpu_custom_call.1} parent=1 // loop_exit
      _
    %2594 = vsyncpa [#allocation6], 1
    %s2595 = scalar_lea.sflag [#allocation6], 1
    %2596 = vsyncpa %s2595, 1
    %2597 = vsyncpa [#allocation9], 1
    %s2598 = scalar_lea.sflag [#allocation9], 1
    %2599 = vsyncpa %s2598, 1
    %2600 = vsyncpa [#allocation7], 1
    %s2601 = scalar_lea.sflag [#allocation7], 1
    %2602 = vsyncpa %s2601, 1
    %2603 = vsyncpa [#allocation13], 1
    %s2604 = scalar_lea.sflag [#allocation13], 1
    %2605 = vsyncpa %s2604, 1

</llo_original>
